<compile_context>
chip_gen: v5e
topology: v5e:2x2
jax: 0.10.0
libtpu: 0.0.40
codegen_flags: <defaults>
</compile_context>

<pallas_src>
import jax
import jax.numpy as jnp
from jax.experimental import pallas as pl
from jax.experimental.pallas import tpu as pltpu

H, W = 20, 20            # image produced by reshape(lin(z), (1, 1, 20, 20))
H_PAD, W_PAD = 24, 128   # VMEM-friendly padded tile (sublane, lane)
LATENT = 4
EPS = 1e-5               # PyTorch BatchNorm2d default eps
_HIGHEST = jax.lax.Precision.HIGHEST


def decoder_kernel(z_ref, wimg_ref, bimg_ref, taps_ref, gamma_ref, beta_ref,
                   out_ref):
    # z_ref:     SMEM (4,)              latent vector
    # wimg_ref:  VMEM (4, 24, 128)      linear weight, pre-reshaped to image layout
    # bimg_ref:  VMEM (24, 128)         linear bias, image layout
    # taps_ref:  VMEM (9, 128, 128)     banded column-tap matrices, [3*layer + row]
    # gamma_ref: SMEM (3,)              BN weights
    # beta_ref:  SMEM (3,)              BN biases
    # out_ref:   VMEM (24, 128)         padded output image

    # ---- hoisted scalar reads: let the scalar unit run ahead of vector/MXU work.
    z0 = z_ref[0]
    z1 = z_ref[1]
    z2 = z_ref[2]
    z3 = z_ref[3]
    g = (gamma_ref[0], gamma_ref[1], gamma_ref[2])
    b = (beta_ref[0], beta_ref[1], beta_ref[2])
    inv_n = 1.0 / float(H * W)

    # Row mask only: banded T matrices already zero every column >= W, so only the
    # padding rows (>= H) ever carry garbage that must be re-zeroed.
    row = jax.lax.broadcasted_iota(jnp.int32, (H_PAD, W_PAD), 0)
    rowmask = (row < H).astype(jnp.float32)

    # ---- Linear(4 -> 400) in image layout, tree-balanced accumulation ----------
    # img[h, w] = sum_k z[k] * Wimg[k, h, w] + bimg[h, w]; padded region stays zero.
    img = ((z0 * wimg_ref[0] + z1 * wimg_ref[1])
           + (z2 * wimg_ref[2] + z3 * wimg_ref[3])) + bimg_ref[...]

    def conv_bn_relu(x, layer):
        # ---- 3x3 conv, stride 1, zero padding.
        # Row taps: two sublane shifts (padding rows of x are zero -> correct halo).
        xu = jnp.roll(x, 1, axis=0)    # row i holds x[i-1]
        xd = jnp.roll(x, -1, axis=0)   # row i holds x[i+1]
        # Column taps on the MXU via banded matrices; column zero-padding and the
        # column mask are baked into T.  Issue all three dots before consuming the
        # sum so they can pipeline (MRB accumulation on v7x, vreg adds on v5e/v6e).
        d0 = jnp.dot(xu, taps_ref[3 * layer + 0],
                     preferred_element_type=jnp.float32, precision=_HIGHEST)
        d1 = jnp.dot(x, taps_ref[3 * layer + 1],
                     preferred_element_type=jnp.float32, precision=_HIGHEST)
        d2 = jnp.dot(xd, taps_ref[3 * layer + 2],
                     preferred_element_type=jnp.float32, precision=_HIGHEST)
        acc = (d0 + d1) + d2
        # (Conv bias intentionally omitted: it cancels exactly in training-mode BN.)

        # ---- BatchNorm2d, training mode: batch stats over 1 x 20 x 20.
        # Single pass: S1 = sum(x*m), S2 = sum(x^2*m); var = E[x^2] - E[x]^2.
        am = acc * rowmask                  # columns >= W are already zero
        s1 = jnp.sum(am)
        s2 = jnp.sum(am * acc)              # independent of s1 -> reductions overlap
        mean = s1 * inv_n
        var = jnp.maximum(s2 * inv_n - mean * mean, 0.0)   # guard cancellation
        inv_std = jax.lax.rsqrt(var + EPS)
        scale = g[layer] * inv_std
        shift = b[layer] - mean * scale
        y = acc * scale + shift
        # ReLU; re-zero padding rows so they keep acting as zero-padding downstream.
        return jnp.maximum(y, 0.0) * rowmask

    h1 = conv_bn_relu(img, 0)   # net1 conv/bn/relu #1
    h1 = conv_bn_relu(h1, 1)    # net1 conv/bn/relu #2
    out = conv_bn_relu(h1 + img, 2)   # net2 on the residual sum
    out_ref[...] = out


def prepare_decoder_params(params):
    """One-time parameter preprocessing (hoisted out of the per-call path)."""
    W_lin, b_lin, cw, cb, gamma, beta = params
    del cb  # conv bias is a mathematical no-op under training-mode BatchNorm

    # Linear weight (400, 4) -> image layout Wimg[k, h, w] = W_lin[20*h + w, k]
    wimg = jnp.transpose(W_lin.astype(jnp.float32)).reshape(LATENT, H, W)
    bimg = b_lin.astype(jnp.float32).reshape(H, W)
    wimg_pad = jnp.zeros((LATENT, H_PAD, W_PAD), jnp.float32).at[:, :H, :W].set(wimg)
    bimg_pad = jnp.zeros((H_PAD, W_PAD), jnp.float32).at[:H, :W].set(bimg)

    # Banded column-tap matrices: T[j', j] = w[row_tap, j' - j + 1] for the in-band
    # diagonals, zeroed outside the valid 0..W-1 source/output columns (this bakes
    # the column zero-padding and the column mask into the matmul).
    jp = jnp.arange(W_PAD)[:, None]          # source column j'
    jo = jnp.arange(W_PAD)[None, :]          # output column j
    d = jp - jo + 1                          # kernel column index b
    in_band = (d >= 0) & (d <= 2) & (jp < W) & (jo < W)
    d_safe = jnp.clip(d, 0, 2)
    cw_f = cw.astype(jnp.float32)            # (3 layers, 3 rows, 3 cols)
    taps = []
    for layer in range(3):
        for a in range(3):
            w3 = cw_f[layer, a]              # (3,) column taps for this kernel row
            taps.append(jnp.where(in_band, w3[d_safe], 0.0))
    taps = jnp.stack(taps).astype(jnp.float32)   # (9, 128, 128) ~ 576 KiB VMEM

    return (wimg_pad, bimg_pad, taps,
            gamma.astype(jnp.float32), beta.astype(jnp.float32))


@jax.jit
def decoder_forward(z, prepared):
    wimg_pad, bimg_pad, taps, gamma, beta = prepared
    z_flat = z.reshape(LATENT).astype(jnp.float32)

    out_pad = pl.pallas_call(
        decoder_kernel,
        out_shape=jax.ShapeDtypeStruct((H_PAD, W_PAD), jnp.float32),
        in_specs=[
            pl.BlockSpec(memory_space=pltpu.MemorySpace.SMEM),   # z
            pl.BlockSpec(memory_space=pltpu.MemorySpace.VMEM),   # Wimg
            pl.BlockSpec(memory_space=pltpu.MemorySpace.VMEM),   # bimg
            pl.BlockSpec(memory_space=pltpu.MemorySpace.VMEM),   # banded conv taps
            pl.BlockSpec(memory_space=pltpu.MemorySpace.SMEM),   # bn gamma
            pl.BlockSpec(memory_space=pltpu.MemorySpace.SMEM),   # bn beta
        ],
        out_specs=pl.BlockSpec(memory_space=pltpu.MemorySpace.VMEM),
    )(z_flat, wimg_pad, bimg_pad, taps, gamma, beta)

    return out_pad[:H, :W].reshape(1, 1, H, W)   # NCHW, matches PyTorch output


# ---------------------- pure-JAX reference (for checking) ----------------------
def reference_forward(z, params):
    W_lin, b_lin, cw, cb, gamma, beta = params
    h = jnp.dot(z, W_lin.T, precision=_HIGHEST) + b_lin      # (1, 400)
    img = h.reshape(1, 1, H, W)

    def conv(x, w, bias):
        return jax.lax.conv_general_dilated(
            x, w.reshape(1, 1, 3, 3), (1, 1), 'SAME',
            dimension_numbers=('NCHW', 'OIHW', 'NCHW'),
            precision=_HIGHEST) + bias

    def bn(x, g, be):
        mean = x.mean()
        var = ((x - mean) ** 2).mean()
        return g * (x - mean) / jnp.sqrt(var + EPS) + be

    t = jax.nn.relu(bn(conv(img, cw[0], cb[0]), gamma[0], beta[0]))
    t = jax.nn.relu(bn(conv(t, cw[1], cb[1]), gamma[1], beta[1]))
    t = t + img
    t = jax.nn.relu(bn(conv(t, cw[2], cb[2]), gamma[2], beta[2]))
    return t


if __name__ == "__main__":
    key = jax.random.PRNGKey(0)
    ks = jax.random.split(key, 7)
    W_lin = (0.5 * jax.random.normal(ks[0], (400, LATENT))).astype(jnp.float32)
    b_lin = (0.1 * jax.random.normal(ks[1], (400,))).astype(jnp.float32)
    cw    = (0.3 * jax.random.normal(ks[2], (3, 3, 3))).astype(jnp.float32)
    cb    = (0.1 * jax.random.normal(ks[3], (3,))).astype(jnp.float32)
    gamma = (1.0 + 0.1 * jax.random.normal(ks[4], (3,))).astype(jnp.float32)
    beta  = (0.1 * jax.random.normal(ks[5], (3,))).astype(jnp.float32)
    params = (W_lin, b_lin, cw, cb, gamma, beta)

    z = jax.random.normal(ks[6], (1, LATENT), dtype=jnp.float32)

    prepared = jax.block_until_ready(prepare_decoder_params(params))  # one-time prep

    out = decoder_forward(z, prepared)
    out = jax.block_until_ready(out)

    ref = jax.block_until_ready(reference_forward(z, params))
    assert out.shape == (1, 1, 20, 20)
    assert jnp.allclose(out, ref, rtol=1e-3, atol=1e-4), (
        float(jnp.max(jnp.abs(out - ref))))

    print("KERNEL_OK")
</pallas_src>

<mosaic_0001>
module attributes {stable_mosaic.version = 11 : i64} {
  func.func @decoder_kernel(%arg0: memref<4xf32, #tpu.memory_space<smem>>, %arg1: memref<4x24x128xf32, #tpu.memory_space<vmem>>, %arg2: memref<24x128xf32, #tpu.memory_space<vmem>>, %arg3: memref<9x128x128xf32, #tpu.memory_space<vmem>>, %arg4: memref<3xf32, #tpu.memory_space<smem>>, %arg5: memref<3xf32, #tpu.memory_space<smem>>, %arg6: memref<24x128xf32, #tpu.memory_space<vmem>>) attributes {dimension_semantics = [], scalar_prefetch = 0 : i64, scratch_operands = 0 : i64, tpu.core_type = #tpu.core_type<tc>} {
    %c0 = arith.constant 0 : index
    %0 = memref.load %arg0[%c0] : memref<4xf32, #tpu.memory_space<smem>>
    %c1 = arith.constant 1 : index
    %1 = memref.load %arg0[%c1] : memref<4xf32, #tpu.memory_space<smem>>
    %c2 = arith.constant 2 : index
    %2 = memref.load %arg0[%c2] : memref<4xf32, #tpu.memory_space<smem>>
    %c3 = arith.constant 3 : index
    %3 = memref.load %arg0[%c3] : memref<4xf32, #tpu.memory_space<smem>>
    %c0_0 = arith.constant 0 : index
    %4 = memref.load %arg4[%c0_0] : memref<3xf32, #tpu.memory_space<smem>>
    %c1_1 = arith.constant 1 : index
    %5 = memref.load %arg4[%c1_1] : memref<3xf32, #tpu.memory_space<smem>>
    %c2_2 = arith.constant 2 : index
    %6 = memref.load %arg4[%c2_2] : memref<3xf32, #tpu.memory_space<smem>>
    %c0_3 = arith.constant 0 : index
    %7 = memref.load %arg5[%c0_3] : memref<3xf32, #tpu.memory_space<smem>>
    %c1_4 = arith.constant 1 : index
    %8 = memref.load %arg5[%c1_4] : memref<3xf32, #tpu.memory_space<smem>>
    %c2_5 = arith.constant 2 : index
    %9 = memref.load %arg5[%c2_5] : memref<3xf32, #tpu.memory_space<smem>>
    %10 = tpu.iota {dimensions = array<i32: 0>} : vector<24x128xi32>
    %c20_i32 = arith.constant 20 : i32
    %11 = vector.broadcast %c20_i32 : i32 to vector<24x128xi32>
    %12 = arith.cmpi slt, %10, %11 : vector<24x128xi32>
    %13 = arith.extui %12 : vector<24x128xi1> to vector<24x128xi32>
    %14 = arith.sitofp %13 : vector<24x128xi32> to vector<24x128xf32>
    %c0_6 = arith.constant 0 : index
    %c0_7 = arith.constant 0 : index
    %c0_8 = arith.constant 0 : index
    %15 = vector.load %arg1[%c0_6, %c0_7, %c0_8] : memref<4x24x128xf32, #tpu.memory_space<vmem>>, vector<1x24x128xf32>
    %16 = vector.shape_cast %15 : vector<1x24x128xf32> to vector<24x128xf32>
    %17 = vector.broadcast %0 : f32 to vector<24x128xf32>
    %18 = arith.mulf %17, %16 : vector<24x128xf32>
    %c1_9 = arith.constant 1 : index
    %c0_10 = arith.constant 0 : index
    %c0_11 = arith.constant 0 : index
    %19 = vector.load %arg1[%c1_9, %c0_10, %c0_11] : memref<4x24x128xf32, #tpu.memory_space<vmem>>, vector<1x24x128xf32>
    %20 = vector.shape_cast %19 : vector<1x24x128xf32> to vector<24x128xf32>
    %21 = vector.broadcast %1 : f32 to vector<24x128xf32>
    %22 = arith.mulf %21, %20 : vector<24x128xf32>
    %23 = arith.addf %18, %22 : vector<24x128xf32>
    %c2_12 = arith.constant 2 : index
    %c0_13 = arith.constant 0 : index
    %c0_14 = arith.constant 0 : index
    %24 = vector.load %arg1[%c2_12, %c0_13, %c0_14] : memref<4x24x128xf32, #tpu.memory_space<vmem>>, vector<1x24x128xf32>
    %25 = vector.shape_cast %24 : vector<1x24x128xf32> to vector<24x128xf32>
    %26 = vector.broadcast %2 : f32 to vector<24x128xf32>
    %27 = arith.mulf %26, %25 : vector<24x128xf32>
    %c3_15 = arith.constant 3 : index
    %c0_16 = arith.constant 0 : index
    %c0_17 = arith.constant 0 : index
    %28 = vector.load %arg1[%c3_15, %c0_16, %c0_17] : memref<4x24x128xf32, #tpu.memory_space<vmem>>, vector<1x24x128xf32>
    %29 = vector.shape_cast %28 : vector<1x24x128xf32> to vector<24x128xf32>
    %30 = vector.broadcast %3 : f32 to vector<24x128xf32>
    %31 = arith.mulf %30, %29 : vector<24x128xf32>
    %32 = arith.addf %27, %31 : vector<24x128xf32>
    %33 = arith.addf %23, %32 : vector<24x128xf32>
    %c0_18 = arith.constant 0 : index
    %c0_19 = arith.constant 0 : index
    %34 = vector.load %arg2[%c0_18, %c0_19] : memref<24x128xf32, #tpu.memory_space<vmem>>, vector<24x128xf32>
    %35 = arith.addf %33, %34 : vector<24x128xf32>
    %36 = vector.extract_strided_slice %35 {offsets = [23, 0], sizes = [1, 128], strides = [1, 1]} : vector<24x128xf32> to vector<1x128xf32>
    %37 = vector.extract_strided_slice %35 {offsets = [0, 0], sizes = [23, 128], strides = [1, 1]} : vector<24x128xf32> to vector<23x128xf32>
    %38 = tpu.concatenate %36, %37 in 0 : vector<1x128xf32>, vector<23x128xf32> -> vector<24x128xf32>
    %39 = vector.extract_strided_slice %35 {offsets = [1, 0], sizes = [23, 128], strides = [1, 1]} : vector<24x128xf32> to vector<23x128xf32>
    %40 = vector.extract_strided_slice %35 {offsets = [0, 0], sizes = [1, 128], strides = [1, 1]} : vector<24x128xf32> to vector<1x128xf32>
    %41 = tpu.concatenate %39, %40 in 0 : vector<23x128xf32>, vector<1x128xf32> -> vector<24x128xf32>
    %c0_20 = arith.constant 0 : index
    %c0_21 = arith.constant 0 : index
    %c0_22 = arith.constant 0 : index
    %42 = vector.load %arg3[%c0_20, %c0_21, %c0_22] : memref<9x128x128xf32, #tpu.memory_space<vmem>>, vector<1x128x128xf32>
    %43 = vector.shape_cast %42 : vector<1x128x128xf32> to vector<128x128xf32>
    %cst = arith.constant dense<0.000000e+00> : vector<24x128xf32>
    %44 = tpu.matmul %38, %43, %cst {dimension_numbers = #tpu.dot_dimension_numbers<[1], [0], [0], [1], [0, 0, 1, 1], [], []>, precision = #tpu.contract_precision<fp32>} : vector<24x128xf32>, vector<128x128xf32>, vector<24x128xf32> -> vector<24x128xf32>
    %c1_23 = arith.constant 1 : index
    %c0_24 = arith.constant 0 : index
    %c0_25 = arith.constant 0 : index
    %45 = vector.load %arg3[%c1_23, %c0_24, %c0_25] : memref<9x128x128xf32, #tpu.memory_space<vmem>>, vector<1x128x128xf32>
    %46 = vector.shape_cast %45 : vector<1x128x128xf32> to vector<128x128xf32>
    %cst_26 = arith.constant dense<0.000000e+00> : vector<24x128xf32>
    %47 = tpu.matmul %35, %46, %cst_26 {dimension_numbers = #tpu.dot_dimension_numbers<[1], [0], [0], [1], [0, 0, 1, 1], [], []>, precision = #tpu.contract_precision<fp32>} : vector<24x128xf32>, vector<128x128xf32>, vector<24x128xf32> -> vector<24x128xf32>
    %c2_27 = arith.constant 2 : index
    %c0_28 = arith.constant 0 : index
    %c0_29 = arith.constant 0 : index
    %48 = vector.load %arg3[%c2_27, %c0_28, %c0_29] : memref<9x128x128xf32, #tpu.memory_space<vmem>>, vector<1x128x128xf32>
    %49 = vector.shape_cast %48 : vector<1x128x128xf32> to vector<128x128xf32>
    %cst_30 = arith.constant dense<0.000000e+00> : vector<24x128xf32>
    %50 = tpu.matmul %41, %49, %cst_30 {dimension_numbers = #tpu.dot_dimension_numbers<[1], [0], [0], [1], [0, 0, 1, 1], [], []>, precision = #tpu.contract_precision<fp32>} : vector<24x128xf32>, vector<128x128xf32>, vector<24x128xf32> -> vector<24x128xf32>
    %51 = arith.addf %44, %47 : vector<24x128xf32>
    %52 = arith.addf %51, %50 : vector<24x128xf32>
    %53 = arith.mulf %52, %14 : vector<24x128xf32>
    %54 = vector.shape_cast %53 : vector<24x128xf32> to vector<1x24x128xf32>
    %cst_31 = arith.constant dense<0.000000e+00> : vector<1xf32>
    %55 = vector.multi_reduction <add>, %54, %cst_31 [1, 2] : vector<1x24x128xf32> to vector<1xf32>
    %56 = vector.shape_cast %55 : vector<1xf32> to vector<1x1x1xf32>
    %57 = vector.extract %56[0, 0, 0] : f32 from vector<1x1x1xf32>
    %58 = arith.mulf %53, %52 : vector<24x128xf32>
    %59 = vector.shape_cast %58 : vector<24x128xf32> to vector<1x24x128xf32>
    %cst_32 = arith.constant dense<0.000000e+00> : vector<1xf32>
    %60 = vector.multi_reduction <add>, %59, %cst_32 [1, 2] : vector<1x24x128xf32> to vector<1xf32>
    %61 = vector.shape_cast %60 : vector<1xf32> to vector<1x1x1xf32>
    %62 = vector.extract %61[0, 0, 0] : f32 from vector<1x1x1xf32>
    %cst_33 = arith.constant 2.500000e-03 : f32
    %63 = arith.mulf %57, %cst_33 : f32
    %cst_34 = arith.constant 2.500000e-03 : f32
    %64 = arith.mulf %62, %cst_34 : f32
    %65 = arith.mulf %63, %63 : f32
    %66 = arith.subf %64, %65 : f32
    %cst_35 = arith.constant 0.000000e+00 : f32
    %67 = arith.maximumf %66, %cst_35 : f32
    %cst_36 = arith.constant 9.99999974E-6 : f32
    %68 = arith.addf %67, %cst_36 : f32
    %69 = math.rsqrt %68 : f32
    %70 = arith.mulf %4, %69 : f32
    %71 = arith.mulf %63, %70 : f32
    %72 = arith.subf %7, %71 : f32
    %73 = vector.broadcast %70 : f32 to vector<24x128xf32>
    %74 = arith.mulf %52, %73 : vector<24x128xf32>
    %75 = vector.broadcast %72 : f32 to vector<24x128xf32>
    %76 = arith.addf %74, %75 : vector<24x128xf32>
    %cst_37 = arith.constant 0.000000e+00 : f32
    %77 = vector.broadcast %cst_37 : f32 to vector<24x128xf32>
    %78 = arith.maximumf %76, %77 : vector<24x128xf32>
    %79 = arith.mulf %78, %14 : vector<24x128xf32>
    %80 = vector.extract_strided_slice %79 {offsets = [23, 0], sizes = [1, 128], strides = [1, 1]} : vector<24x128xf32> to vector<1x128xf32>
    %81 = vector.extract_strided_slice %79 {offsets = [0, 0], sizes = [23, 128], strides = [1, 1]} : vector<24x128xf32> to vector<23x128xf32>
    %82 = tpu.concatenate %80, %81 in 0 : vector<1x128xf32>, vector<23x128xf32> -> vector<24x128xf32>
    %83 = vector.extract_strided_slice %79 {offsets = [1, 0], sizes = [23, 128], strides = [1, 1]} : vector<24x128xf32> to vector<23x128xf32>
    %84 = vector.extract_strided_slice %79 {offsets = [0, 0], sizes = [1, 128], strides = [1, 1]} : vector<24x128xf32> to vector<1x128xf32>
    %85 = tpu.concatenate %83, %84 in 0 : vector<23x128xf32>, vector<1x128xf32> -> vector<24x128xf32>
    %c3_38 = arith.constant 3 : index
    %c0_39 = arith.constant 0 : index
    %c0_40 = arith.constant 0 : index
    %86 = vector.load %arg3[%c3_38, %c0_39, %c0_40] : memref<9x128x128xf32, #tpu.memory_space<vmem>>, vector<1x128x128xf32>
    %87 = vector.shape_cast %86 : vector<1x128x128xf32> to vector<128x128xf32>
    %cst_41 = arith.constant dense<0.000000e+00> : vector<24x128xf32>
    %88 = tpu.matmul %82, %87, %cst_41 {dimension_numbers = #tpu.dot_dimension_numbers<[1], [0], [0], [1], [0, 0, 1, 1], [], []>, precision = #tpu.contract_precision<fp32>} : vector<24x128xf32>, vector<128x128xf32>, vector<24x128xf32> -> vector<24x128xf32>
    %c4 = arith.constant 4 : index
    %c0_42 = arith.constant 0 : index
    %c0_43 = arith.constant 0 : index
    %89 = vector.load %arg3[%c4, %c0_42, %c0_43] : memref<9x128x128xf32, #tpu.memory_space<vmem>>, vector<1x128x128xf32>
    %90 = vector.shape_cast %89 : vector<1x128x128xf32> to vector<128x128xf32>
    %cst_44 = arith.constant dense<0.000000e+00> : vector<24x128xf32>
    %91 = tpu.matmul %79, %90, %cst_44 {dimension_numbers = #tpu.dot_dimension_numbers<[1], [0], [0], [1], [0, 0, 1, 1], [], []>, precision = #tpu.contract_precision<fp32>} : vector<24x128xf32>, vector<128x128xf32>, vector<24x128xf32> -> vector<24x128xf32>
    %c5 = arith.constant 5 : index
    %c0_45 = arith.constant 0 : index
    %c0_46 = arith.constant 0 : index
    %92 = vector.load %arg3[%c5, %c0_45, %c0_46] : memref<9x128x128xf32, #tpu.memory_space<vmem>>, vector<1x128x128xf32>
    %93 = vector.shape_cast %92 : vector<1x128x128xf32> to vector<128x128xf32>
    %cst_47 = arith.constant dense<0.000000e+00> : vector<24x128xf32>
    %94 = tpu.matmul %85, %93, %cst_47 {dimension_numbers = #tpu.dot_dimension_numbers<[1], [0], [0], [1], [0, 0, 1, 1], [], []>, precision = #tpu.contract_precision<fp32>} : vector<24x128xf32>, vector<128x128xf32>, vector<24x128xf32> -> vector<24x128xf32>
    %95 = arith.addf %88, %91 : vector<24x128xf32>
    %96 = arith.addf %95, %94 : vector<24x128xf32>
    %97 = arith.mulf %96, %14 : vector<24x128xf32>
    %98 = vector.shape_cast %97 : vector<24x128xf32> to vector<1x24x128xf32>
    %cst_48 = arith.constant dense<0.000000e+00> : vector<1xf32>
    %99 = vector.multi_reduction <add>, %98, %cst_48 [1, 2] : vector<1x24x128xf32> to vector<1xf32>
    %100 = vector.shape_cast %99 : vector<1xf32> to vector<1x1x1xf32>
    %101 = vector.extract %100[0, 0, 0] : f32 from vector<1x1x1xf32>
    %102 = arith.mulf %97, %96 : vector<24x128xf32>
    %103 = vector.shape_cast %102 : vector<24x128xf32> to vector<1x24x128xf32>
    %cst_49 = arith.constant dense<0.000000e+00> : vector<1xf32>
    %104 = vector.multi_reduction <add>, %103, %cst_49 [1, 2] : vector<1x24x128xf32> to vector<1xf32>
    %105 = vector.shape_cast %104 : vector<1xf32> to vector<1x1x1xf32>
    %106 = vector.extract %105[0, 0, 0] : f32 from vector<1x1x1xf32>
    %cst_50 = arith.constant 2.500000e-03 : f32
    %107 = arith.mulf %101, %cst_50 : f32
    %cst_51 = arith.constant 2.500000e-03 : f32
    %108 = arith.mulf %106, %cst_51 : f32
    %109 = arith.mulf %107, %107 : f32
    %110 = arith.subf %108, %109 : f32
    %cst_52 = arith.constant 0.000000e+00 : f32
    %111 = arith.maximumf %110, %cst_52 : f32
    %cst_53 = arith.constant 9.99999974E-6 : f32
    %112 = arith.addf %111, %cst_53 : f32
    %113 = math.rsqrt %112 : f32
    %114 = arith.mulf %5, %113 : f32
    %115 = arith.mulf %107, %114 : f32
    %116 = arith.subf %8, %115 : f32
    %117 = vector.broadcast %114 : f32 to vector<24x128xf32>
    %118 = arith.mulf %96, %117 : vector<24x128xf32>
    %119 = vector.broadcast %116 : f32 to vector<24x128xf32>
    %120 = arith.addf %118, %119 : vector<24x128xf32>
    %cst_54 = arith.constant 0.000000e+00 : f32
    %121 = vector.broadcast %cst_54 : f32 to vector<24x128xf32>
    %122 = arith.maximumf %120, %121 : vector<24x128xf32>
    %123 = arith.mulf %122, %14 : vector<24x128xf32>
    %124 = arith.addf %123, %35 : vector<24x128xf32>
    %125 = vector.extract_strided_slice %124 {offsets = [23, 0], sizes = [1, 128], strides = [1, 1]} : vector<24x128xf32> to vector<1x128xf32>
    %126 = vector.extract_strided_slice %124 {offsets = [0, 0], sizes = [23, 128], strides = [1, 1]} : vector<24x128xf32> to vector<23x128xf32>
    %127 = tpu.concatenate %125, %126 in 0 : vector<1x128xf32>, vector<23x128xf32> -> vector<24x128xf32>
    %128 = vector.extract_strided_slice %124 {offsets = [1, 0], sizes = [23, 128], strides = [1, 1]} : vector<24x128xf32> to vector<23x128xf32>
    %129 = vector.extract_strided_slice %124 {offsets = [0, 0], sizes = [1, 128], strides = [1, 1]} : vector<24x128xf32> to vector<1x128xf32>
    %130 = tpu.concatenate %128, %129 in 0 : vector<23x128xf32>, vector<1x128xf32> -> vector<24x128xf32>
    %c6 = arith.constant 6 : index
    %c0_55 = arith.constant 0 : index
    %c0_56 = arith.constant 0 : index
    %131 = vector.load %arg3[%c6, %c0_55, %c0_56] : memref<9x128x128xf32, #tpu.memory_space<vmem>>, vector<1x128x128xf32>
    %132 = vector.shape_cast %131 : vector<1x128x128xf32> to vector<128x128xf32>
    %cst_57 = arith.constant dense<0.000000e+00> : vector<24x128xf32>
    %133 = tpu.matmul %127, %132, %cst_57 {dimension_numbers = #tpu.dot_dimension_numbers<[1], [0], [0], [1], [0, 0, 1, 1], [], []>, precision = #tpu.contract_precision<fp32>} : vector<24x128xf32>, vector<128x128xf32>, vector<24x128xf32> -> vector<24x128xf32>
    %c7 = arith.constant 7 : index
    %c0_58 = arith.constant 0 : index
    %c0_59 = arith.constant 0 : index
    %134 = vector.load %arg3[%c7, %c0_58, %c0_59] : memref<9x128x128xf32, #tpu.memory_space<vmem>>, vector<1x128x128xf32>
    %135 = vector.shape_cast %134 : vector<1x128x128xf32> to vector<128x128xf32>
    %cst_60 = arith.constant dense<0.000000e+00> : vector<24x128xf32>
    %136 = tpu.matmul %124, %135, %cst_60 {dimension_numbers = #tpu.dot_dimension_numbers<[1], [0], [0], [1], [0, 0, 1, 1], [], []>, precision = #tpu.contract_precision<fp32>} : vector<24x128xf32>, vector<128x128xf32>, vector<24x128xf32> -> vector<24x128xf32>
    %c8 = arith.constant 8 : index
    %c0_61 = arith.constant 0 : index
    %c0_62 = arith.constant 0 : index
    %137 = vector.load %arg3[%c8, %c0_61, %c0_62] : memref<9x128x128xf32, #tpu.memory_space<vmem>>, vector<1x128x128xf32>
    %138 = vector.shape_cast %137 : vector<1x128x128xf32> to vector<128x128xf32>
    %cst_63 = arith.constant dense<0.000000e+00> : vector<24x128xf32>
    %139 = tpu.matmul %130, %138, %cst_63 {dimension_numbers = #tpu.dot_dimension_numbers<[1], [0], [0], [1], [0, 0, 1, 1], [], []>, precision = #tpu.contract_precision<fp32>} : vector<24x128xf32>, vector<128x128xf32>, vector<24x128xf32> -> vector<24x128xf32>
    %140 = arith.addf %133, %136 : vector<24x128xf32>
    %141 = arith.addf %140, %139 : vector<24x128xf32>
    %142 = arith.mulf %141, %14 : vector<24x128xf32>
    %143 = vector.shape_cast %142 : vector<24x128xf32> to vector<1x24x128xf32>
    %cst_64 = arith.constant dense<0.000000e+00> : vector<1xf32>
    %144 = vector.multi_reduction <add>, %143, %cst_64 [1, 2] : vector<1x24x128xf32> to vector<1xf32>
    %145 = vector.shape_cast %144 : vector<1xf32> to vector<1x1x1xf32>
    %146 = vector.extract %145[0, 0, 0] : f32 from vector<1x1x1xf32>
    %147 = arith.mulf %142, %141 : vector<24x128xf32>
    %148 = vector.shape_cast %147 : vector<24x128xf32> to vector<1x24x128xf32>
    %cst_65 = arith.constant dense<0.000000e+00> : vector<1xf32>
    %149 = vector.multi_reduction <add>, %148, %cst_65 [1, 2] : vector<1x24x128xf32> to vector<1xf32>
    %150 = vector.shape_cast %149 : vector<1xf32> to vector<1x1x1xf32>
    %151 = vector.extract %150[0, 0, 0] : f32 from vector<1x1x1xf32>
    %cst_66 = arith.constant 2.500000e-03 : f32
    %152 = arith.mulf %146, %cst_66 : f32
    %cst_67 = arith.constant 2.500000e-03 : f32
    %153 = arith.mulf %151, %cst_67 : f32
    %154 = arith.mulf %152, %152 : f32
    %155 = arith.subf %153, %154 : f32
    %cst_68 = arith.constant 0.000000e+00 : f32
    %156 = arith.maximumf %155, %cst_68 : f32
    %cst_69 = arith.constant 9.99999974E-6 : f32
    %157 = arith.addf %156, %cst_69 : f32
    %158 = math.rsqrt %157 : f32
    %159 = arith.mulf %6, %158 : f32
    %160 = arith.mulf %152, %159 : f32
    %161 = arith.subf %9, %160 : f32
    %162 = vector.broadcast %159 : f32 to vector<24x128xf32>
    %163 = arith.mulf %141, %162 : vector<24x128xf32>
    %164 = vector.broadcast %161 : f32 to vector<24x128xf32>
    %165 = arith.addf %163, %164 : vector<24x128xf32>
    %cst_70 = arith.constant 0.000000e+00 : f32
    %166 = vector.broadcast %cst_70 : f32 to vector<24x128xf32>
    %167 = arith.maximumf %165, %166 : vector<24x128xf32>
    %168 = arith.mulf %167, %14 : vector<24x128xf32>
    %c0_71 = arith.constant 0 : index
    %c0_72 = arith.constant 0 : index
    %169 = vector.load %arg6[%c0_71, %c0_72] : memref<24x128xf32, #tpu.memory_space<vmem>>, vector<24x128xf32>
    tpu.vector_store %arg6[%c0_71, %c0_72], %168 {strides = array<i32>} : memref<24x128xf32, #tpu.memory_space<vmem>>, vector<24x128xf32>,
    return
  }
}

</mosaic_0001>

<llo_original>
// kernel: decoder_forward.1
$region0: #{decoder_forward.1}
  #allocation0 [shape = 'u32[]', space=smem, size = 0x4, offset = 0x4, fixed_abs, tag = 'smem constant byte address 0x4 - core index']
  #allocation1 [shape = 'u32[72,128]{1,0:T(1,128)}', space=vmem, size = 0x9000, scoped, tag = 'internal scratch']
  %s0 = inlined_call_operand.hbm [shape: f32[4], index: 0, kind: input, shape index: {}]
  %s1 = inlined_call_operand.hbm [shape: f32[4,24,128], index: 1, kind: input, shape index: {}]
  %s2 = inlined_call_operand.hbm [shape: f32[24,128], index: 2, kind: input, shape index: {}]
  %s3 = inlined_call_operand.hbm [shape: f32[9,128,128], index: 3, kind: input, shape index: {}]
  %s4 = inlined_call_operand.vmem [shape: f32[3], index: 4, kind: input, shape index: {}]
  %s5 = inlined_call_operand.vmem [shape: f32[3], index: 5, kind: input, shape index: {}]
  %s6 = inlined_call_operand.vmem [shape: f32[24,128], index: 6, kind: output, shape index: {}]
  %s7 = sld [smem:[#allocation0]]
  $region58: #{decoder_forward.1} parent=0
    _
  %s9 = ssub.s32 1, %s7
  %s10 = scalar_select 0, %s9, %s7
  $region1: #{decoder_forward.1} parent=0
    #allocation2 [shape = 'u8[512]{0}', space=smem, size = 0x200, scoped, tag = 'input window, operand 0, single buffered']
    #allocation3 [shape = 's32[1]{0}', space=sflag, size = 0x4, scoped, tag = 'scoped memory for decoder_forward.1']
    #allocation4 [shape = 's32[1]{0}', space=sflag, size = 0x4, scoped, tag = 'scoped memory for decoder_forward.1']
    #allocation5 [shape = 's32[1]{0}', space=sflag, size = 0x4, scoped, tag = 'scoped memory for decoder_forward.1']
    #allocation6 [shape = 'u8[49152]{0}', space=vmem, size = 0xc000, scoped, tag = 'input window, operand 1, single buffered']
    #allocation7 [shape = 'u8[12288]{0}', space=vmem, size = 0x3000, scoped, tag = 'input window, operand 2, single buffered']
    #allocation8 [shape = 's32[1]{0}', space=sflag, size = 0x4, scoped, tag = 'scoped memory for decoder_forward.1']
    #allocation9 [shape = 'u8[589824]{0}', space=vmem, size = 0x90000, scoped, tag = 'input window, operand 3, single buffered']
    #allocation10 [shape = 'u8[512]{0}', space=smem, size = 0x200, scoped, tag = 'input window, operand 4, single buffered']
    #allocation11 [shape = 'u8[512]{0}', space=smem, size = 0x200, scoped, tag = 'input window, operand 5, single buffered']
    #allocation12 [shape = 's32[1]{0}', space=sflag, size = 0x4, scoped, tag = 'scoped memory for decoder_forward.1']
    %11 = vsyncpa [#allocation4], 0
    %12 = vsyncpa [#allocation3], 0
    %13 = vsyncpa [#allocation8], 0
    %14 = vsyncpa [#allocation5], 0
    %15 = vsyncpa [#allocation12], 0
    // Predicated region
    $region2: #{decoder_forward.1} parent=1 // pred_check
      _
    $region3: #{decoder_forward.1} parent=1 // pred_check_branch
      %17 = sbr.rel (0) target = $region5
    $region4: #{decoder_forward.1} parent=1 // pred_region
      %19 = vsyncadd [#allocation4], 0
      %s21 = sshll.u32 %s0, 4
      %s22 = int_to_ptr.hbm [resolvable:$true] %s21
      %24 = dma.hbm_to_smem %s22, 16, [#allocation2], [#allocation4]
    $region5: #{decoder_forward.1} parent=1 // pred_fallthru
      _
    // Predicated region
    $region6: #{decoder_forward.1} parent=1 // pred_check
      _
    $region7: #{decoder_forward.1} parent=1 // pred_check_branch
      %26 = sbr.rel (0) target = $region9
    $region8: #{decoder_forward.1} parent=1 // pred_region
      %28 = vsyncadd [#allocation3], 0
      %s29 = sshll.u32 %s1, 4
      %s30 = int_to_ptr.hbm [resolvable:$true] %s29
      %s31 = sshll.u32 [#allocation6], 4
      %s32 = int_to_ptr.vmem [resolvable:$true] %s31
      %37 = dma.hbm_to_vmem [thread:$0]  %s30, 1536, %s32, [#allocation3], 128, 128, 8
    $region9: #{decoder_forward.1} parent=1 // pred_fallthru
      _
    // Predicated region
    $region10: #{decoder_forward.1} parent=1 // pred_check
      _
    $region11: #{decoder_forward.1} parent=1 // pred_check_branch
      %39 = sbr.rel (0) target = $region13
    $region12: #{decoder_forward.1} parent=1 // pred_region
      %41 = vsyncadd [#allocation8], 0
      %s42 = sshll.u32 %s2, 4
      %s43 = int_to_ptr.hbm [resolvable:$true] %s42
      %s44 = sshll.u32 [#allocation7], 4
      %s45 = int_to_ptr.vmem [resolvable:$true] %s44
      %50 = dma.hbm_to_vmem [thread:$0]  %s43, 384, %s45, [#allocation8], 128, 128, 8
    $region13: #{decoder_forward.1} parent=1 // pred_fallthru
      _
    // Predicated region
    $region14: #{decoder_forward.1} parent=1 // pred_check
      _
    $region15: #{decoder_forward.1} parent=1 // pred_check_branch
      %52 = sbr.rel (0) target = $region17
    $region16: #{decoder_forward.1} parent=1 // pred_region
      %54 = vsyncadd [#allocation8], 0
      %s55 = sshll.u32 %s3, 4
      %s56 = int_to_ptr.hbm [resolvable:$true] %s55
      %s57 = sshll.u32 [#allocation9], 4
      %s58 = int_to_ptr.vmem [resolvable:$true] %s57
      %63 = dma.hbm_to_vmem [thread:$0]  %s56, 18432, %s58, [#allocation8], 128, 128, 8
    $region17: #{decoder_forward.1} parent=1 // pred_fallthru
      _
    // Predicated region
    $region18: #{decoder_forward.1} parent=1 // pred_check
      _
    $region19: #{decoder_forward.1} parent=1 // pred_check_branch
      %65 = sbr.rel (0) target = $region21
    $region20: #{decoder_forward.1} parent=1 // pred_region
      %67 = vsyncadd [#allocation5], 0
      %s69 = sshll.u32 %s4, 4
      %s70 = int_to_ptr.vmem [resolvable:$true] %s69
      %72 = dma.vmem_to_smem %s70, 16, [#allocation10], [#allocation5]
    $region21: #{decoder_forward.1} parent=1 // pred_fallthru
      _
    // Predicated region
    $region22: #{decoder_forward.1} parent=1 // pred_check
      _
    $region23: #{decoder_forward.1} parent=1 // pred_check_branch
      %74 = sbr.rel (0) target = $region25
    $region24: #{decoder_forward.1} parent=1 // pred_region
      %76 = vsyncadd [#allocation12], 0
      %s78 = sshll.u32 %s5, 4
      %s79 = int_to_ptr.vmem [resolvable:$true] %s78
      %81 = dma.vmem_to_smem %s79, 16, [#allocation11], [#allocation12]
    $region25: #{decoder_forward.1} parent=1 // pred_fallthru
      _
    // Predicated region
    $region26: #{decoder_forward.1} parent=1 // pred_check
      _
    $region27: #{decoder_forward.1} parent=1 // pred_check_branch
      %83 = sbr.rel (0) target = $region29
    $region28: #{decoder_forward.1} parent=1 // pred_region
      %85 = dma.done [#allocation4], 16
    $region29: #{decoder_forward.1} parent=1 // pred_fallthru
      _
    // Predicated region
    $region30: #{decoder_forward.1} parent=1 // pred_check
      _
    $region31: #{decoder_forward.1} parent=1 // pred_check_branch
      %87 = sbr.rel (0) target = $region33
    $region32: #{decoder_forward.1} parent=1 // pred_region
      %89 = dma.done [#allocation3], 1536
    $region33: #{decoder_forward.1} parent=1 // pred_fallthru
      _
    // Predicated region
    $region34: #{decoder_forward.1} parent=1 // pred_check
      _
    $region35: #{decoder_forward.1} parent=1 // pred_check_branch
      %91 = sbr.rel (0) target = $region37
    $region36: #{decoder_forward.1} parent=1 // pred_region
      %93 = dma.done [#allocation8], 384
    $region37: #{decoder_forward.1} parent=1 // pred_fallthru
      _
    // Predicated region
    $region38: #{decoder_forward.1} parent=1 // pred_check
      _
    $region39: #{decoder_forward.1} parent=1 // pred_check_branch
      %95 = sbr.rel (0) target = $region41
    $region40: #{decoder_forward.1} parent=1 // pred_region
      %97 = dma.done [#allocation8], 18432
    $region41: #{decoder_forward.1} parent=1 // pred_fallthru
      _
    // Predicated region
    $region42: #{decoder_forward.1} parent=1 // pred_check
      _
    $region43: #{decoder_forward.1} parent=1 // pred_check_branch
      %99 = sbr.rel (0) target = $region45
    $region44: #{decoder_forward.1} parent=1 // pred_region
      %101 = dma.done [#allocation5], 16
    $region45: #{decoder_forward.1} parent=1 // pred_fallthru
      _
    // Predicated region
    $region46: #{decoder_forward.1} parent=1 // pred_check
      _
    $region47: #{decoder_forward.1} parent=1 // pred_check_branch
      %103 = sbr.rel (0) target = $region49
    $region48: #{decoder_forward.1} parent=1 // pred_region
      %105 = dma.done [#allocation12], 16
    $region49: #{decoder_forward.1} parent=1 // pred_fallthru
      _
    %106 = sfence
    %s107 = sld [smem:[#allocation2]]
    %s108 = sld [smem:[#allocation2 + $0x1]]
    %s109 = sld [smem:[#allocation2 + $0x2]]
    %s110 = sld [smem:[#allocation2 + $0x3]]
    %s111 = sld [smem:[#allocation10]]
    %s112 = sld [smem:[#allocation10 + $0x1]]
    %s113 = sld [smem:[#allocation10 + $0x2]]
    %s114 = sld [smem:[#allocation11]]
    %s115 = sld [smem:[#allocation11 + $0x1]]
    %s116 = sld [smem:[#allocation11 + $0x2]]
    %v117 = vlaneseq
    %v118 = vshrl.u32 %v117, 7
    %v119 = vadd.s32 %v118, 8
    %v120 = vadd.s32 %v118, 16
    %vm121 = vcmp.lt.s32.totalorder %v118, 20
    %vm122 = vcmp.lt.s32.totalorder %v119, 20
    %vm123 = vcmp.lt.s32.totalorder %v120, 20
    %v124 = vsel %vm121, 1, 0
    %v125 = vsel %vm122, 1, 0
    %v126 = vsel %vm123, 1, 0
    %v127 = vcvt.s32.f32 %v124
    %v128 = vcvt.s32.f32 %v125
    %v129 = vcvt.s32.f32 %v126
    %v130 = vld [vmem:[#allocation6] sm:$0xff]
    %v131 = vld [vmem:[#allocation6 + $0x8] sm:$0xff]
    %v132 = vld [vmem:[#allocation6 + $0x10] sm:$0xff]
    %v133 = vstv %s107
    %v134 = vmul.f32 %v133, %v130
    %v135 = vmul.f32 %v133, %v131
    %v136 = vmul.f32 %v133, %v132
    %s137 = scalar_lea.vmem [#allocation6], 24
    %v138 = vld [vmem:[%s137] sm:$0xff]
    %v139 = vld [vmem:[%s137 + $0x8] sm:$0xff]
    %v140 = vld [vmem:[%s137 + $0x10] sm:$0xff]
    %v141 = vstv %s108
    %v142 = vmul.f32 %v141, %v138
    %v143 = vmul.f32 %v141, %v139
    %v144 = vmul.f32 %v141, %v140
    %v145 = vadd.f32 %v134, %v142
    %v146 = vadd.f32 %v135, %v143
    %v147 = vadd.f32 %v136, %v144
    %s148 = scalar_lea.vmem [#allocation6], 48
    %v149 = vld [vmem:[%s148] sm:$0xff]
    %v150 = vld [vmem:[%s148 + $0x8] sm:$0xff]
    %v151 = vld [vmem:[%s148 + $0x10] sm:$0xff]
    %v152 = vstv %s109
    %v153 = vmul.f32 %v152, %v149
    %v154 = vmul.f32 %v152, %v150
    %v155 = vmul.f32 %v152, %v151
    %s156 = scalar_lea.vmem [#allocation6], 72
    %v157 = vld [vmem:[%s156] sm:$0xff]
    %v158 = vld [vmem:[%s156 + $0x8] sm:$0xff]
    %v159 = vld [vmem:[%s156 + $0x10] sm:$0xff]
    %v160 = vstv %s110
    %v161 = vmul.f32 %v160, %v157
    %v162 = vmul.f32 %v160, %v158
    %v163 = vmul.f32 %v160, %v159
    %v164 = vadd.f32 %v153, %v161
    %v165 = vadd.f32 %v154, %v162
    %v166 = vadd.f32 %v155, %v163
    %v167 = vadd.f32 %v145, %v164
    %v168 = vadd.f32 %v146, %v165
    %v169 = vadd.f32 %v147, %v166
    %v170 = vld [vmem:[#allocation7] sm:$0xff]
    %v171 = vld [vmem:[#allocation7 + $0x8] sm:$0xff]
    %v172 = vld [vmem:[#allocation7 + $0x10] sm:$0xff]
    %v173 = vadd.f32 %v167, %v170
    %v174 = vadd.f32 %v168, %v171
    %v175 = vadd.f32 %v169, %v172
    %v177 = vrot.slane %v175, 7
    %vm181 = vcmask 1040384
    %v182 = vrot.slane %v173, 7
    %v183 = vrot.slane %v174, 7
    %v184 = vsel %vm181, %v182, %v183
    %v185 = vsel %vm181, %v183, %v177
    %v189 = vsel %vm181, %v177, %v182
    %vm190 = vcmask 1046528
    %v191 = vrot.slane %v173, 1
    %v192 = vrot.slane %v174, 1
    %v193 = vsel %vm190, %v191, %v192
    %v194 = vrot.slane %v175, 1
    %v195 = vsel %vm190, %v192, %v194
    %v200 = vsel %vm190, %v194, %v191
    %v201 = vld [vmem:[#allocation9] sm:$0xff]
    %v202 = vld [vmem:[#allocation9 + $0x8] sm:$0xff]
    %v203 = vld [vmem:[#allocation9 + $0x10] sm:$0xff]
    %v204 = vld [vmem:[#allocation9 + $0x18] sm:$0xff]
    %v205 = vld [vmem:[#allocation9 + $0x20] sm:$0xff]
    %v206 = vld [vmem:[#allocation9 + $0x28] sm:$0xff]
    %v207 = vld [vmem:[#allocation9 + $0x30] sm:$0xff]
    %v208 = vld [vmem:[#allocation9 + $0x38] sm:$0xff]
    %v209 = vld [vmem:[#allocation9 + $0x40] sm:$0xff]
    %v210 = vld [vmem:[#allocation9 + $0x48] sm:$0xff]
    %v211 = vld [vmem:[#allocation9 + $0x50] sm:$0xff]
    %v212 = vld [vmem:[#allocation9 + $0x58] sm:$0xff]
    %v213 = vld [vmem:[#allocation9 + $0x60] sm:$0xff]
    %v214 = vld [vmem:[#allocation9 + $0x68] sm:$0xff]
    %v215 = vld [vmem:[#allocation9 + $0x70] sm:$0xff]
    %v216 = vld [vmem:[#allocation9 + $0x78] sm:$0xff]
    %s217 = scalar_lea.vmem [#allocation9], 128
    %v218 = vld [vmem:[%s217] sm:$0xff]
    %v219 = vld [vmem:[%s217 + $0x8] sm:$0xff]
    %v220 = vld [vmem:[%s217 + $0x10] sm:$0xff]
    %v221 = vld [vmem:[%s217 + $0x18] sm:$0xff]
    %v222 = vld [vmem:[%s217 + $0x20] sm:$0xff]
    %v223 = vld [vmem:[%s217 + $0x28] sm:$0xff]
    %v224 = vld [vmem:[%s217 + $0x30] sm:$0xff]
    %v225 = vld [vmem:[%s217 + $0x38] sm:$0xff]
    %v226 = vld [vmem:[%s217 + $0x40] sm:$0xff]
    %v227 = vld [vmem:[%s217 + $0x48] sm:$0xff]
    %v228 = vld [vmem:[%s217 + $0x50] sm:$0xff]
    %v229 = vld [vmem:[%s217 + $0x58] sm:$0xff]
    %v230 = vld [vmem:[%s217 + $0x60] sm:$0xff]
    %v231 = vld [vmem:[%s217 + $0x68] sm:$0xff]
    %v232 = vld [vmem:[%s217 + $0x70] sm:$0xff]
    %v233 = vld [vmem:[%s217 + $0x78] sm:$0xff]
    %v234 = vand.u32 %v233, 4294901760
    %235 = vmatpush.msra.mxu0 %v234
    %v236 = vand.u32 %v232, 4294901760
    %237 = vmatpush.msra.mxu0 %v236
    %v238 = vand.u32 %v231, 4294901760
    %239 = vmatpush.msra.mxu0 %v238
    %v240 = vand.u32 %v230, 4294901760
    %241 = vmatpush.msra.mxu0 %v240
    %v242 = vand.u32 %v229, 4294901760
    %243 = vmatpush.msra.mxu0 %v242
    %v244 = vand.u32 %v228, 4294901760
    %245 = vmatpush.msra.mxu0 %v244
    %v246 = vand.u32 %v227, 4294901760
    %247 = vmatpush.msra.mxu0 %v246
    %v248 = vand.u32 %v226, 4294901760
    %249 = vmatpush.msra.mxu0 %v248
    %v250 = vand.u32 %v225, 4294901760
    %251 = vmatpush.msra.mxu0 %v250
    %v252 = vand.u32 %v224, 4294901760
    %253 = vmatpush.msra.mxu0 %v252
    %v254 = vand.u32 %v223, 4294901760
    %255 = vmatpush.msra.mxu0 %v254
    %v256 = vand.u32 %v222, 4294901760
    %257 = vmatpush.msra.mxu0 %v256
    %v258 = vand.u32 %v221, 4294901760
    %259 = vmatpush.msra.mxu0 %v258
    %v260 = vand.u32 %v220, 4294901760
    %261 = vmatpush.msra.mxu0 %v260
    %v262 = vand.u32 %v219, 4294901760
    %263 = vmatpush.msra.mxu0 %v262
    %v264 = vand.u32 %v218, 4294901760
    %265 = vmatpush.msra.mxu0 %v264
    %v266 = vand.u32 %v173, 4294901760
    %v267 = vsub.f32 %v173, %v266
    %v268 = vand.u32 %v267, 4294901760
    %v269 = vsub.f32 %v267, %v268
    %v270 = vand.u32 %v269, 4294901760
    %271 = vmatmul.f32.gmra.mxu0 %v270
    %v272 = vpop.f32.mrf.mxu0
    %v273 = vadd.f32 0.0, %v272
    %v274 = vand.u32 %v174, 4294901760
    %v275 = vsub.f32 %v174, %v274
    %v276 = vand.u32 %v275, 4294901760
    %v277 = vsub.f32 %v275, %v276
    %v278 = vand.u32 %v277, 4294901760
    %279 = vmatmul.f32.gmra.mxu0 %v278
    %v280 = vpop.f32.mrf.mxu0
    %v281 = vadd.f32 0.0, %v280
    %v282 = vand.u32 %v175, 4294901760
    %v283 = vsub.f32 %v175, %v282
    %v284 = vand.u32 %v283, 4294901760
    %v285 = vsub.f32 %v283, %v284
    %v286 = vand.u32 %v285, 4294901760
    %287 = vmatmul.f32.gmra.mxu0 %v286
    %v288 = vpop.f32.mrf.mxu0
    %v289 = vadd.f32 0.0, %v288
    %290 = vdwg.mxu0
    %v291 = vand.u32 %v233, 4294901760
    %v292 = vsub.f32 %v233, %v291
    %v293 = vand.u32 %v292, 4294901760
    %v294 = vsub.f32 %v292, %v293
    %v295 = vand.u32 %v294, 4294901760
    %296 = vmatpush.msra.mxu0 %v295
    %v297 = vand.u32 %v232, 4294901760
    %v298 = vsub.f32 %v232, %v297
    %v299 = vand.u32 %v298, 4294901760
    %v300 = vsub.f32 %v298, %v299
    %v301 = vand.u32 %v300, 4294901760
    %302 = vmatpush.msra.mxu0 %v301
    %v303 = vand.u32 %v231, 4294901760
    %v304 = vsub.f32 %v231, %v303
    %v305 = vand.u32 %v304, 4294901760
    %v306 = vsub.f32 %v304, %v305
    %v307 = vand.u32 %v306, 4294901760
    %308 = vmatpush.msra.mxu0 %v307
    %v309 = vand.u32 %v230, 4294901760
    %v310 = vsub.f32 %v230, %v309
    %v311 = vand.u32 %v310, 4294901760
    %v312 = vsub.f32 %v310, %v311
    %v313 = vand.u32 %v312, 4294901760
    %314 = vmatpush.msra.mxu0 %v313
    %v315 = vand.u32 %v229, 4294901760
    %v316 = vsub.f32 %v229, %v315
    %v317 = vand.u32 %v316, 4294901760
    %v318 = vsub.f32 %v316, %v317
    %v319 = vand.u32 %v318, 4294901760
    %320 = vmatpush.msra.mxu0 %v319
    %v321 = vand.u32 %v228, 4294901760
    %v322 = vsub.f32 %v228, %v321
    %v323 = vand.u32 %v322, 4294901760
    %v324 = vsub.f32 %v322, %v323
    %v325 = vand.u32 %v324, 4294901760
    %326 = vmatpush.msra.mxu0 %v325
    %v327 = vand.u32 %v227, 4294901760
    %v328 = vsub.f32 %v227, %v327
    %v329 = vand.u32 %v328, 4294901760
    %v330 = vsub.f32 %v328, %v329
    %v331 = vand.u32 %v330, 4294901760
    %332 = vmatpush.msra.mxu0 %v331
    %v333 = vand.u32 %v226, 4294901760
    %v334 = vsub.f32 %v226, %v333
    %v335 = vand.u32 %v334, 4294901760
    %v336 = vsub.f32 %v334, %v335
    %v337 = vand.u32 %v336, 4294901760
    %338 = vmatpush.msra.mxu0 %v337
    %v339 = vand.u32 %v225, 4294901760
    %v340 = vsub.f32 %v225, %v339
    %v341 = vand.u32 %v340, 4294901760
    %v342 = vsub.f32 %v340, %v341
    %v343 = vand.u32 %v342, 4294901760
    %344 = vmatpush.msra.mxu0 %v343
    %v345 = vand.u32 %v224, 4294901760
    %v346 = vsub.f32 %v224, %v345
    %v347 = vand.u32 %v346, 4294901760
    %v348 = vsub.f32 %v346, %v347
    %v349 = vand.u32 %v348, 4294901760
    %350 = vmatpush.msra.mxu0 %v349
    %v351 = vand.u32 %v223, 4294901760
    %v352 = vsub.f32 %v223, %v351
    %v353 = vand.u32 %v352, 4294901760
    %v354 = vsub.f32 %v352, %v353
    %v355 = vand.u32 %v354, 4294901760
    %356 = vmatpush.msra.mxu0 %v355
    %v357 = vand.u32 %v222, 4294901760
    %v358 = vsub.f32 %v222, %v357
    %v359 = vand.u32 %v358, 4294901760
    %v360 = vsub.f32 %v358, %v359
    %v361 = vand.u32 %v360, 4294901760
    %362 = vmatpush.msra.mxu0 %v361
    %v363 = vand.u32 %v221, 4294901760
    %v364 = vsub.f32 %v221, %v363
    %v365 = vand.u32 %v364, 4294901760
    %v366 = vsub.f32 %v364, %v365
    %v367 = vand.u32 %v366, 4294901760
    %368 = vmatpush.msra.mxu0 %v367
    %v369 = vand.u32 %v220, 4294901760
    %v370 = vsub.f32 %v220, %v369
    %v371 = vand.u32 %v370, 4294901760
    %v372 = vsub.f32 %v370, %v371
    %v373 = vand.u32 %v372, 4294901760
    %374 = vmatpush.msra.mxu0 %v373
    %v375 = vand.u32 %v219, 4294901760
    %v376 = vsub.f32 %v219, %v375
    %v377 = vand.u32 %v376, 4294901760
    %v378 = vsub.f32 %v376, %v377
    %v379 = vand.u32 %v378, 4294901760
    %380 = vmatpush.msra.mxu0 %v379
    %v381 = vand.u32 %v218, 4294901760
    %v382 = vsub.f32 %v218, %v381
    %v383 = vand.u32 %v382, 4294901760
    %v384 = vsub.f32 %v382, %v383
    %v385 = vand.u32 %v384, 4294901760
    %386 = vmatpush.msra.mxu0 %v385
    %v387 = vand.u32 %v173, 4294901760
    %388 = vmatmul.f32.gmra.mxu0 %v387
    %v389 = vpop.f32.mrf.mxu0
    %v390 = vadd.f32 %v273, %v389
    %v391 = vand.u32 %v174, 4294901760
    %392 = vmatmul.f32.gmra.mxu0 %v391
    %v393 = vpop.f32.mrf.mxu0
    %v394 = vadd.f32 %v281, %v393
    %v395 = vand.u32 %v175, 4294901760
    %396 = vmatmul.f32.gmra.mxu0 %v395
    %v397 = vpop.f32.mrf.mxu0
    %v398 = vadd.f32 %v289, %v397
    %399 = vdwg.mxu0
    %v400 = vand.u32 %v233, 4294901760
    %v401 = vsub.f32 %v233, %v400
    %402 = vmatpush.msra.mxu0 %v401
    %v403 = vand.u32 %v232, 4294901760
    %v404 = vsub.f32 %v232, %v403
    %405 = vmatpush.msra.mxu0 %v404
    %v406 = vand.u32 %v231, 4294901760
    %v407 = vsub.f32 %v231, %v406
    %408 = vmatpush.msra.mxu0 %v407
    %v409 = vand.u32 %v230, 4294901760
    %v410 = vsub.f32 %v230, %v409
    %411 = vmatpush.msra.mxu0 %v410
    %v412 = vand.u32 %v229, 4294901760
    %v413 = vsub.f32 %v229, %v412
    %414 = vmatpush.msra.mxu0 %v413
    %v415 = vand.u32 %v228, 4294901760
    %v416 = vsub.f32 %v228, %v415
    %417 = vmatpush.msra.mxu0 %v416
    %v418 = vand.u32 %v227, 4294901760
    %v419 = vsub.f32 %v227, %v418
    %420 = vmatpush.msra.mxu0 %v419
    %v421 = vand.u32 %v226, 4294901760
    %v422 = vsub.f32 %v226, %v421
    %423 = vmatpush.msra.mxu0 %v422
    %v424 = vand.u32 %v225, 4294901760
    %v425 = vsub.f32 %v225, %v424
    %426 = vmatpush.msra.mxu0 %v425
    %v427 = vand.u32 %v224, 4294901760
    %v428 = vsub.f32 %v224, %v427
    %429 = vmatpush.msra.mxu0 %v428
    %v430 = vand.u32 %v223, 4294901760
    %v431 = vsub.f32 %v223, %v430
    %432 = vmatpush.msra.mxu0 %v431
    %v433 = vand.u32 %v222, 4294901760
    %v434 = vsub.f32 %v222, %v433
    %435 = vmatpush.msra.mxu0 %v434
    %v436 = vand.u32 %v221, 4294901760
    %v437 = vsub.f32 %v221, %v436
    %438 = vmatpush.msra.mxu0 %v437
    %v439 = vand.u32 %v220, 4294901760
    %v440 = vsub.f32 %v220, %v439
    %441 = vmatpush.msra.mxu0 %v440
    %v442 = vand.u32 %v219, 4294901760
    %v443 = vsub.f32 %v219, %v442
    %444 = vmatpush.msra.mxu0 %v443
    %v445 = vand.u32 %v218, 4294901760
    %v446 = vsub.f32 %v218, %v445
    %447 = vmatpush.msra.mxu0 %v446
    %v448 = vand.u32 %v173, 4294901760
    %v449 = vsub.f32 %v173, %v448
    %450 = vmatmul.f32.gmra.mxu0 %v449
    %v451 = vpop.f32.mrf.mxu0
    %v452 = vadd.f32 %v390, %v451
    %v453 = vand.u32 %v174, 4294901760
    %v454 = vsub.f32 %v174, %v453
    %455 = vmatmul.f32.gmra.mxu0 %v454
    %v456 = vpop.f32.mrf.mxu0
    %v457 = vadd.f32 %v394, %v456
    %v458 = vand.u32 %v175, 4294901760
    %v459 = vsub.f32 %v175, %v458
    %460 = vmatmul.f32.gmra.mxu0 %v459
    %v461 = vpop.f32.mrf.mxu0
    %v462 = vadd.f32 %v398, %v461
    %463 = vdwg.mxu0
    %v464 = vand.u32 %v233, 4294901760
    %465 = vmatpush.msra.mxu0 %v464
    %v466 = vand.u32 %v232, 4294901760
    %467 = vmatpush.msra.mxu0 %v466
    %v468 = vand.u32 %v231, 4294901760
    %469 = vmatpush.msra.mxu0 %v468
    %v470 = vand.u32 %v230, 4294901760
    %471 = vmatpush.msra.mxu0 %v470
    %v472 = vand.u32 %v229, 4294901760
    %473 = vmatpush.msra.mxu0 %v472
    %v474 = vand.u32 %v228, 4294901760
    %475 = vmatpush.msra.mxu0 %v474
    %v476 = vand.u32 %v227, 4294901760
    %477 = vmatpush.msra.mxu0 %v476
    %v478 = vand.u32 %v226, 4294901760
    %479 = vmatpush.msra.mxu0 %v478
    %v480 = vand.u32 %v225, 4294901760
    %481 = vmatpush.msra.mxu0 %v480
    %v482 = vand.u32 %v224, 4294901760
    %483 = vmatpush.msra.mxu0 %v482
    %v484 = vand.u32 %v223, 4294901760
    %485 = vmatpush.msra.mxu0 %v484
    %v486 = vand.u32 %v222, 4294901760
    %487 = vmatpush.msra.mxu0 %v486
    %v488 = vand.u32 %v221, 4294901760
    %489 = vmatpush.msra.mxu0 %v488
    %v490 = vand.u32 %v220, 4294901760
    %491 = vmatpush.msra.mxu0 %v490
    %v492 = vand.u32 %v219, 4294901760
    %493 = vmatpush.msra.mxu0 %v492
    %v494 = vand.u32 %v218, 4294901760
    %495 = vmatpush.msra.mxu0 %v494
    %v496 = vand.u32 %v173, 4294901760
    %v497 = vsub.f32 %v173, %v496
    %v498 = vand.u32 %v497, 4294901760
    %499 = vmatmul.f32.gmra.mxu0 %v498
    %v500 = vpop.f32.mrf.mxu0
    %v501 = vadd.f32 %v452, %v500
    %v502 = vand.u32 %v174, 4294901760
    %v503 = vsub.f32 %v174, %v502
    %v504 = vand.u32 %v503, 4294901760
    %505 = vmatmul.f32.gmra.mxu0 %v504
    %v506 = vpop.f32.mrf.mxu0
    %v507 = vadd.f32 %v457, %v506
    %v508 = vand.u32 %v175, 4294901760
    %v509 = vsub.f32 %v175, %v508
    %v510 = vand.u32 %v509, 4294901760
    %511 = vmatmul.f32.gmra.mxu0 %v510
    %v512 = vpop.f32.mrf.mxu0
    %v513 = vadd.f32 %v462, %v512
    %514 = vdwg.mxu0
    %v515 = vand.u32 %v233, 4294901760
    %v516 = vsub.f32 %v233, %v515
    %v517 = vand.u32 %v516, 4294901760
    %518 = vmatpush.msra.mxu0 %v517
    %v519 = vand.u32 %v232, 4294901760
    %v520 = vsub.f32 %v232, %v519
    %v521 = vand.u32 %v520, 4294901760
    %522 = vmatpush.msra.mxu0 %v521
    %v523 = vand.u32 %v231, 4294901760
    %v524 = vsub.f32 %v231, %v523
    %v525 = vand.u32 %v524, 4294901760
    %526 = vmatpush.msra.mxu0 %v525
    %v527 = vand.u32 %v230, 4294901760
    %v528 = vsub.f32 %v230, %v527
    %v529 = vand.u32 %v528, 4294901760
    %530 = vmatpush.msra.mxu0 %v529
    %v531 = vand.u32 %v229, 4294901760
    %v532 = vsub.f32 %v229, %v531
    %v533 = vand.u32 %v532, 4294901760
    %534 = vmatpush.msra.mxu0 %v533
    %v535 = vand.u32 %v228, 4294901760
    %v536 = vsub.f32 %v228, %v535
    %v537 = vand.u32 %v536, 4294901760
    %538 = vmatpush.msra.mxu0 %v537
    %v539 = vand.u32 %v227, 4294901760
    %v540 = vsub.f32 %v227, %v539
    %v541 = vand.u32 %v540, 4294901760
    %542 = vmatpush.msra.mxu0 %v541
    %v543 = vand.u32 %v226, 4294901760
    %v544 = vsub.f32 %v226, %v543
    %v545 = vand.u32 %v544, 4294901760
    %546 = vmatpush.msra.mxu0 %v545
    %v547 = vand.u32 %v225, 4294901760
    %v548 = vsub.f32 %v225, %v547
    %v549 = vand.u32 %v548, 4294901760
    %550 = vmatpush.msra.mxu0 %v549
    %v551 = vand.u32 %v224, 4294901760
    %v552 = vsub.f32 %v224, %v551
    %v553 = vand.u32 %v552, 4294901760
    %554 = vmatpush.msra.mxu0 %v553
    %v555 = vand.u32 %v223, 4294901760
    %v556 = vsub.f32 %v223, %v555
    %v557 = vand.u32 %v556, 4294901760
    %558 = vmatpush.msra.mxu0 %v557
    %v559 = vand.u32 %v222, 4294901760
    %v560 = vsub.f32 %v222, %v559
    %v561 = vand.u32 %v560, 4294901760
    %562 = vmatpush.msra.mxu0 %v561
    %v563 = vand.u32 %v221, 4294901760
    %v564 = vsub.f32 %v221, %v563
    %v565 = vand.u32 %v564, 4294901760
    %566 = vmatpush.msra.mxu0 %v565
    %v567 = vand.u32 %v220, 4294901760
    %v568 = vsub.f32 %v220, %v567
    %v569 = vand.u32 %v568, 4294901760
    %570 = vmatpush.msra.mxu0 %v569
    %v571 = vand.u32 %v219, 4294901760
    %v572 = vsub.f32 %v219, %v571
    %v573 = vand.u32 %v572, 4294901760
    %574 = vmatpush.msra.mxu0 %v573
    %v575 = vand.u32 %v218, 4294901760
    %v576 = vsub.f32 %v218, %v575
    %v577 = vand.u32 %v576, 4294901760
    %578 = vmatpush.msra.mxu0 %v577
    %v579 = vand.u32 %v173, 4294901760
    %580 = vmatmul.f32.gmra.mxu0 %v579
    %v581 = vpop.f32.mrf.mxu0
    %v582 = vadd.f32 %v501, %v581
    %v583 = vand.u32 %v174, 4294901760
    %584 = vmatmul.f32.gmra.mxu0 %v583
    %v585 = vpop.f32.mrf.mxu0
    %v586 = vadd.f32 %v507, %v585
    %v587 = vand.u32 %v175, 4294901760
    %588 = vmatmul.f32.gmra.mxu0 %v587
    %v589 = vpop.f32.mrf.mxu0
    %v590 = vadd.f32 %v513, %v589
    %591 = vdwg.mxu0
    %v592 = vand.u32 %v233, 4294901760
    %593 = vmatpush.msra.mxu0 %v592
    %v594 = vand.u32 %v232, 4294901760
    %595 = vmatpush.msra.mxu0 %v594
    %v596 = vand.u32 %v231, 4294901760
    %597 = vmatpush.msra.mxu0 %v596
    %v598 = vand.u32 %v230, 4294901760
    %599 = vmatpush.msra.mxu0 %v598
    %v600 = vand.u32 %v229, 4294901760
    %601 = vmatpush.msra.mxu0 %v600
    %v602 = vand.u32 %v228, 4294901760
    %603 = vmatpush.msra.mxu0 %v602
    %v604 = vand.u32 %v227, 4294901760
    %605 = vmatpush.msra.mxu0 %v604
    %v606 = vand.u32 %v226, 4294901760
    %607 = vmatpush.msra.mxu0 %v606
    %v608 = vand.u32 %v225, 4294901760
    %609 = vmatpush.msra.mxu0 %v608
    %v610 = vand.u32 %v224, 4294901760
    %611 = vmatpush.msra.mxu0 %v610
    %v612 = vand.u32 %v223, 4294901760
    %613 = vmatpush.msra.mxu0 %v612
    %v614 = vand.u32 %v222, 4294901760
    %615 = vmatpush.msra.mxu0 %v614
    %v616 = vand.u32 %v221, 4294901760
    %617 = vmatpush.msra.mxu0 %v616
    %v618 = vand.u32 %v220, 4294901760
    %619 = vmatpush.msra.mxu0 %v618
    %v620 = vand.u32 %v219, 4294901760
    %621 = vmatpush.msra.mxu0 %v620
    %v622 = vand.u32 %v218, 4294901760
    %623 = vmatpush.msra.mxu0 %v622
    %v624 = vand.u32 %v173, 4294901760
    %625 = vmatmul.f32.gmra.mxu0 %v624
    %v626 = vpop.f32.mrf.mxu0
    %v627 = vadd.f32 %v582, %v626
    %v628 = vand.u32 %v174, 4294901760
    %629 = vmatmul.f32.gmra.mxu0 %v628
    %v630 = vpop.f32.mrf.mxu0
    %v631 = vadd.f32 %v586, %v630
    %v632 = vand.u32 %v175, 4294901760
    %633 = vmatmul.f32.gmra.mxu0 %v632
    %v634 = vpop.f32.mrf.mxu0
    %v635 = vadd.f32 %v590, %v634
    %636 = vdwg.mxu0
    %s637 = scalar_lea.vmem [#allocation9], 256
    %v638 = vld [vmem:[%s637] sm:$0xff]
    %v639 = vld [vmem:[%s637 + $0x8] sm:$0xff]
    %v640 = vld [vmem:[%s637 + $0x10] sm:$0xff]
    %v641 = vld [vmem:[%s637 + $0x18] sm:$0xff]
    %v642 = vld [vmem:[%s637 + $0x20] sm:$0xff]
    %v643 = vld [vmem:[%s637 + $0x28] sm:$0xff]
    %v644 = vld [vmem:[%s637 + $0x30] sm:$0xff]
    %v645 = vld [vmem:[%s637 + $0x38] sm:$0xff]
    %v646 = vld [vmem:[%s637 + $0x40] sm:$0xff]
    %v647 = vld [vmem:[%s637 + $0x48] sm:$0xff]
    %v648 = vld [vmem:[%s637 + $0x50] sm:$0xff]
    %v649 = vld [vmem:[%s637 + $0x58] sm:$0xff]
    %v650 = vld [vmem:[%s637 + $0x60] sm:$0xff]
    %v651 = vld [vmem:[%s637 + $0x68] sm:$0xff]
    %v652 = vld [vmem:[%s637 + $0x70] sm:$0xff]
    %v653 = vld [vmem:[%s637 + $0x78] sm:$0xff]
    %v654 = vand.u32 %v653, 4294901760
    %655 = vmatpush.msra.mxu0 %v654
    %v656 = vand.u32 %v652, 4294901760
    %657 = vmatpush.msra.mxu0 %v656
    %v658 = vand.u32 %v651, 4294901760
    %659 = vmatpush.msra.mxu0 %v658
    %v660 = vand.u32 %v650, 4294901760
    %661 = vmatpush.msra.mxu0 %v660
    %v662 = vand.u32 %v649, 4294901760
    %663 = vmatpush.msra.mxu0 %v662
    %v664 = vand.u32 %v648, 4294901760
    %665 = vmatpush.msra.mxu0 %v664
    %v666 = vand.u32 %v647, 4294901760
    %667 = vmatpush.msra.mxu0 %v666
    %v668 = vand.u32 %v646, 4294901760
    %669 = vmatpush.msra.mxu0 %v668
    %v670 = vand.u32 %v645, 4294901760
    %671 = vmatpush.msra.mxu0 %v670
    %v672 = vand.u32 %v644, 4294901760
    %673 = vmatpush.msra.mxu0 %v672
    %v674 = vand.u32 %v643, 4294901760
    %675 = vmatpush.msra.mxu0 %v674
    %v676 = vand.u32 %v642, 4294901760
    %677 = vmatpush.msra.mxu0 %v676
    %v678 = vand.u32 %v641, 4294901760
    %679 = vmatpush.msra.mxu0 %v678
    %v680 = vand.u32 %v640, 4294901760
    %681 = vmatpush.msra.mxu0 %v680
    %v682 = vand.u32 %v639, 4294901760
    %683 = vmatpush.msra.mxu0 %v682
    %v684 = vand.u32 %v638, 4294901760
    %685 = vmatpush.msra.mxu0 %v684
    %v686 = vand.u32 %v193, 4294901760
    %v687 = vsub.f32 %v193, %v686
    %v688 = vand.u32 %v687, 4294901760
    %v689 = vsub.f32 %v687, %v688
    %v690 = vand.u32 %v689, 4294901760
    %691 = vmatmul.f32.gmra.mxu0 %v690
    %v692 = vpop.f32.mrf.mxu0
    %v693 = vadd.f32 0.0, %v692
    %v694 = vand.u32 %v195, 4294901760
    %v695 = vsub.f32 %v195, %v694
    %v696 = vand.u32 %v695, 4294901760
    %v697 = vsub.f32 %v695, %v696
    %v698 = vand.u32 %v697, 4294901760
    %699 = vmatmul.f32.gmra.mxu0 %v698
    %v700 = vpop.f32.mrf.mxu0
    %v701 = vadd.f32 0.0, %v700
    %v702 = vand.u32 %v200, 4294901760
    %v703 = vsub.f32 %v200, %v702
    %v704 = vand.u32 %v703, 4294901760
    %v705 = vsub.f32 %v703, %v704
    %v706 = vand.u32 %v705, 4294901760
    %707 = vmatmul.f32.gmra.mxu0 %v706
    %v708 = vpop.f32.mrf.mxu0
    %v709 = vadd.f32 0.0, %v708
    %710 = vdwg.mxu0
    %v711 = vand.u32 %v653, 4294901760
    %v712 = vsub.f32 %v653, %v711
    %v713 = vand.u32 %v712, 4294901760
    %v714 = vsub.f32 %v712, %v713
    %v715 = vand.u32 %v714, 4294901760
    %716 = vmatpush.msra.mxu0 %v715
    %v717 = vand.u32 %v652, 4294901760
    %v718 = vsub.f32 %v652, %v717
    %v719 = vand.u32 %v718, 4294901760
    %v720 = vsub.f32 %v718, %v719
    %v721 = vand.u32 %v720, 4294901760
    %722 = vmatpush.msra.mxu0 %v721
    %v723 = vand.u32 %v651, 4294901760
    %v724 = vsub.f32 %v651, %v723
    %v725 = vand.u32 %v724, 4294901760
    %v726 = vsub.f32 %v724, %v725
    %v727 = vand.u32 %v726, 4294901760
    %728 = vmatpush.msra.mxu0 %v727
    %v729 = vand.u32 %v650, 4294901760
    %v730 = vsub.f32 %v650, %v729
    %v731 = vand.u32 %v730, 4294901760
    %v732 = vsub.f32 %v730, %v731
    %v733 = vand.u32 %v732, 4294901760
    %734 = vmatpush.msra.mxu0 %v733
    %v735 = vand.u32 %v649, 4294901760
    %v736 = vsub.f32 %v649, %v735
    %v737 = vand.u32 %v736, 4294901760
    %v738 = vsub.f32 %v736, %v737
    %v739 = vand.u32 %v738, 4294901760
    %740 = vmatpush.msra.mxu0 %v739
    %v741 = vand.u32 %v648, 4294901760
    %v742 = vsub.f32 %v648, %v741
    %v743 = vand.u32 %v742, 4294901760
    %v744 = vsub.f32 %v742, %v743
    %v745 = vand.u32 %v744, 4294901760
    %746 = vmatpush.msra.mxu0 %v745
    %v747 = vand.u32 %v647, 4294901760
    %v748 = vsub.f32 %v647, %v747
    %v749 = vand.u32 %v748, 4294901760
    %v750 = vsub.f32 %v748, %v749
    %v751 = vand.u32 %v750, 4294901760
    %752 = vmatpush.msra.mxu0 %v751
    %v753 = vand.u32 %v646, 4294901760
    %v754 = vsub.f32 %v646, %v753
    %v755 = vand.u32 %v754, 4294901760
    %v756 = vsub.f32 %v754, %v755
    %v757 = vand.u32 %v756, 4294901760
    %758 = vmatpush.msra.mxu0 %v757
    %v759 = vand.u32 %v645, 4294901760
    %v760 = vsub.f32 %v645, %v759
    %v761 = vand.u32 %v760, 4294901760
    %v762 = vsub.f32 %v760, %v761
    %v763 = vand.u32 %v762, 4294901760
    %764 = vmatpush.msra.mxu0 %v763
    %v765 = vand.u32 %v644, 4294901760
    %v766 = vsub.f32 %v644, %v765
    %v767 = vand.u32 %v766, 4294901760
    %v768 = vsub.f32 %v766, %v767
    %v769 = vand.u32 %v768, 4294901760
    %770 = vmatpush.msra.mxu0 %v769
    %v771 = vand.u32 %v643, 4294901760
    %v772 = vsub.f32 %v643, %v771
    %v773 = vand.u32 %v772, 4294901760
    %v774 = vsub.f32 %v772, %v773
    %v775 = vand.u32 %v774, 4294901760
    %776 = vmatpush.msra.mxu0 %v775
    %v777 = vand.u32 %v642, 4294901760
    %v778 = vsub.f32 %v642, %v777
    %v779 = vand.u32 %v778, 4294901760
    %v780 = vsub.f32 %v778, %v779
    %v781 = vand.u32 %v780, 4294901760
    %782 = vmatpush.msra.mxu0 %v781
    %v783 = vand.u32 %v641, 4294901760
    %v784 = vsub.f32 %v641, %v783
    %v785 = vand.u32 %v784, 4294901760
    %v786 = vsub.f32 %v784, %v785
    %v787 = vand.u32 %v786, 4294901760
    %788 = vmatpush.msra.mxu0 %v787
    %v789 = vand.u32 %v640, 4294901760
    %v790 = vsub.f32 %v640, %v789
    %v791 = vand.u32 %v790, 4294901760
    %v792 = vsub.f32 %v790, %v791
    %v793 = vand.u32 %v792, 4294901760
    %794 = vmatpush.msra.mxu0 %v793
    %v795 = vand.u32 %v639, 4294901760
    %v796 = vsub.f32 %v639, %v795
    %v797 = vand.u32 %v796, 4294901760
    %v798 = vsub.f32 %v796, %v797
    %v799 = vand.u32 %v798, 4294901760
    %800 = vmatpush.msra.mxu0 %v799
    %v801 = vand.u32 %v638, 4294901760
    %v802 = vsub.f32 %v638, %v801
    %v803 = vand.u32 %v802, 4294901760
    %v804 = vsub.f32 %v802, %v803
    %v805 = vand.u32 %v804, 4294901760
    %806 = vmatpush.msra.mxu0 %v805
    %v807 = vand.u32 %v193, 4294901760
    %808 = vmatmul.f32.gmra.mxu0 %v807
    %v809 = vpop.f32.mrf.mxu0
    %v810 = vadd.f32 %v693, %v809
    %v811 = vand.u32 %v195, 4294901760
    %812 = vmatmul.f32.gmra.mxu0 %v811
    %v813 = vpop.f32.mrf.mxu0
    %v814 = vadd.f32 %v701, %v813
    %v815 = vand.u32 %v200, 4294901760
    %816 = vmatmul.f32.gmra.mxu0 %v815
    %v817 = vpop.f32.mrf.mxu0
    %v818 = vadd.f32 %v709, %v817
    %819 = vdwg.mxu0
    %v820 = vand.u32 %v653, 4294901760
    %v821 = vsub.f32 %v653, %v820
    %822 = vmatpush.msra.mxu0 %v821
    %v823 = vand.u32 %v652, 4294901760
    %v824 = vsub.f32 %v652, %v823
    %825 = vmatpush.msra.mxu0 %v824
    %v826 = vand.u32 %v651, 4294901760
    %v827 = vsub.f32 %v651, %v826
    %828 = vmatpush.msra.mxu0 %v827
    %v829 = vand.u32 %v650, 4294901760
    %v830 = vsub.f32 %v650, %v829
    %831 = vmatpush.msra.mxu0 %v830
    %v832 = vand.u32 %v649, 4294901760
    %v833 = vsub.f32 %v649, %v832
    %834 = vmatpush.msra.mxu0 %v833
    %v835 = vand.u32 %v648, 4294901760
    %v836 = vsub.f32 %v648, %v835
    %837 = vmatpush.msra.mxu0 %v836
    %v838 = vand.u32 %v647, 4294901760
    %v839 = vsub.f32 %v647, %v838
    %840 = vmatpush.msra.mxu0 %v839
    %v841 = vand.u32 %v646, 4294901760
    %v842 = vsub.f32 %v646, %v841
    %843 = vmatpush.msra.mxu0 %v842
    %v844 = vand.u32 %v645, 4294901760
    %v845 = vsub.f32 %v645, %v844
    %846 = vmatpush.msra.mxu0 %v845
    %v847 = vand.u32 %v644, 4294901760
    %v848 = vsub.f32 %v644, %v847
    %849 = vmatpush.msra.mxu0 %v848
    %v850 = vand.u32 %v643, 4294901760
    %v851 = vsub.f32 %v643, %v850
    %852 = vmatpush.msra.mxu0 %v851
    %v853 = vand.u32 %v642, 4294901760
    %v854 = vsub.f32 %v642, %v853
    %855 = vmatpush.msra.mxu0 %v854
    %v856 = vand.u32 %v641, 4294901760
    %v857 = vsub.f32 %v641, %v856
    %858 = vmatpush.msra.mxu0 %v857
    %v859 = vand.u32 %v640, 4294901760
    %v860 = vsub.f32 %v640, %v859
    %861 = vmatpush.msra.mxu0 %v860
    %v862 = vand.u32 %v639, 4294901760
    %v863 = vsub.f32 %v639, %v862
    %864 = vmatpush.msra.mxu0 %v863
    %v865 = vand.u32 %v638, 4294901760
    %v866 = vsub.f32 %v638, %v865
    %867 = vmatpush.msra.mxu0 %v866
    %v868 = vand.u32 %v193, 4294901760
    %v869 = vsub.f32 %v193, %v868
    %870 = vmatmul.f32.gmra.mxu0 %v869
    %v871 = vpop.f32.mrf.mxu0
    %v872 = vadd.f32 %v810, %v871
    %v873 = vand.u32 %v195, 4294901760
    %v874 = vsub.f32 %v195, %v873
    %875 = vmatmul.f32.gmra.mxu0 %v874
    %v876 = vpop.f32.mrf.mxu0
    %v877 = vadd.f32 %v814, %v876
    %v878 = vand.u32 %v200, 4294901760
    %v879 = vsub.f32 %v200, %v878
    %880 = vmatmul.f32.gmra.mxu0 %v879
    %v881 = vpop.f32.mrf.mxu0
    %v882 = vadd.f32 %v818, %v881
    %883 = vdwg.mxu0
    %v884 = vand.u32 %v653, 4294901760
    %885 = vmatpush.msra.mxu0 %v884
    %v886 = vand.u32 %v652, 4294901760
    %887 = vmatpush.msra.mxu0 %v886
    %v888 = vand.u32 %v651, 4294901760
    %889 = vmatpush.msra.mxu0 %v888
    %v890 = vand.u32 %v650, 4294901760
    %891 = vmatpush.msra.mxu0 %v890
    %v892 = vand.u32 %v649, 4294901760
    %893 = vmatpush.msra.mxu0 %v892
    %v894 = vand.u32 %v648, 4294901760
    %895 = vmatpush.msra.mxu0 %v894
    %v896 = vand.u32 %v647, 4294901760
    %897 = vmatpush.msra.mxu0 %v896
    %v898 = vand.u32 %v646, 4294901760
    %899 = vmatpush.msra.mxu0 %v898
    %v900 = vand.u32 %v645, 4294901760
    %901 = vmatpush.msra.mxu0 %v900
    %v902 = vand.u32 %v644, 4294901760
    %903 = vmatpush.msra.mxu0 %v902
    %v904 = vand.u32 %v643, 4294901760
    %905 = vmatpush.msra.mxu0 %v904
    %v906 = vand.u32 %v642, 4294901760
    %907 = vmatpush.msra.mxu0 %v906
    %v908 = vand.u32 %v641, 4294901760
    %909 = vmatpush.msra.mxu0 %v908
    %v910 = vand.u32 %v640, 4294901760
    %911 = vmatpush.msra.mxu0 %v910
    %v912 = vand.u32 %v639, 4294901760
    %913 = vmatpush.msra.mxu0 %v912
    %v914 = vand.u32 %v638, 4294901760
    %915 = vmatpush.msra.mxu0 %v914
    %v916 = vand.u32 %v193, 4294901760
    %v917 = vsub.f32 %v193, %v916
    %v918 = vand.u32 %v917, 4294901760
    %919 = vmatmul.f32.gmra.mxu0 %v918
    %v920 = vpop.f32.mrf.mxu0
    %v921 = vadd.f32 %v872, %v920
    %v922 = vand.u32 %v195, 4294901760
    %v923 = vsub.f32 %v195, %v922
    %v924 = vand.u32 %v923, 4294901760
    %925 = vmatmul.f32.gmra.mxu0 %v924
    %v926 = vpop.f32.mrf.mxu0
    %v927 = vadd.f32 %v877, %v926
    %v928 = vand.u32 %v200, 4294901760
    %v929 = vsub.f32 %v200, %v928
    %v930 = vand.u32 %v929, 4294901760
    %931 = vmatmul.f32.gmra.mxu0 %v930
    %v932 = vpop.f32.mrf.mxu0
    %v933 = vadd.f32 %v882, %v932
    %934 = vdwg.mxu0
    %v935 = vand.u32 %v653, 4294901760
    %v936 = vsub.f32 %v653, %v935
    %v937 = vand.u32 %v936, 4294901760
    %938 = vmatpush.msra.mxu0 %v937
    %v939 = vand.u32 %v652, 4294901760
    %v940 = vsub.f32 %v652, %v939
    %v941 = vand.u32 %v940, 4294901760
    %942 = vmatpush.msra.mxu0 %v941
    %v943 = vand.u32 %v651, 4294901760
    %v944 = vsub.f32 %v651, %v943
    %v945 = vand.u32 %v944, 4294901760
    %946 = vmatpush.msra.mxu0 %v945
    %v947 = vand.u32 %v650, 4294901760
    %v948 = vsub.f32 %v650, %v947
    %v949 = vand.u32 %v948, 4294901760
    %950 = vmatpush.msra.mxu0 %v949
    %v951 = vand.u32 %v649, 4294901760
    %v952 = vsub.f32 %v649, %v951
    %v953 = vand.u32 %v952, 4294901760
    %954 = vmatpush.msra.mxu0 %v953
    %v955 = vand.u32 %v648, 4294901760
    %v956 = vsub.f32 %v648, %v955
    %v957 = vand.u32 %v956, 4294901760
    %958 = vmatpush.msra.mxu0 %v957
    %v959 = vand.u32 %v647, 4294901760
    %v960 = vsub.f32 %v647, %v959
    %v961 = vand.u32 %v960, 4294901760
    %962 = vmatpush.msra.mxu0 %v961
    %v963 = vand.u32 %v646, 4294901760
    %v964 = vsub.f32 %v646, %v963
    %v965 = vand.u32 %v964, 4294901760
    %966 = vmatpush.msra.mxu0 %v965
    %v967 = vand.u32 %v645, 4294901760
    %v968 = vsub.f32 %v645, %v967
    %v969 = vand.u32 %v968, 4294901760
    %970 = vmatpush.msra.mxu0 %v969
    %v971 = vand.u32 %v644, 4294901760
    %v972 = vsub.f32 %v644, %v971
    %v973 = vand.u32 %v972, 4294901760
    %974 = vmatpush.msra.mxu0 %v973
    %v975 = vand.u32 %v643, 4294901760
    %v976 = vsub.f32 %v643, %v975
    %v977 = vand.u32 %v976, 4294901760
    %978 = vmatpush.msra.mxu0 %v977
    %v979 = vand.u32 %v642, 4294901760
    %v980 = vsub.f32 %v642, %v979
    %v981 = vand.u32 %v980, 4294901760
    %982 = vmatpush.msra.mxu0 %v981
    %v983 = vand.u32 %v641, 4294901760
    %v984 = vsub.f32 %v641, %v983
    %v985 = vand.u32 %v984, 4294901760
    %986 = vmatpush.msra.mxu0 %v985
    %v987 = vand.u32 %v640, 4294901760
    %v988 = vsub.f32 %v640, %v987
    %v989 = vand.u32 %v988, 4294901760
    %990 = vmatpush.msra.mxu0 %v989
    %v991 = vand.u32 %v639, 4294901760
    %v992 = vsub.f32 %v639, %v991
    %v993 = vand.u32 %v992, 4294901760
    %994 = vmatpush.msra.mxu0 %v993
    %v995 = vand.u32 %v638, 4294901760
    %v996 = vsub.f32 %v638, %v995
    %v997 = vand.u32 %v996, 4294901760
    %998 = vmatpush.msra.mxu0 %v997
    %v999 = vand.u32 %v193, 4294901760
    %1000 = vmatmul.f32.gmra.mxu0 %v999
    %v1001 = vpop.f32.mrf.mxu0
    %v1002 = vadd.f32 %v921, %v1001
    %v1003 = vand.u32 %v195, 4294901760
    %1004 = vmatmul.f32.gmra.mxu0 %v1003
    %v1005 = vpop.f32.mrf.mxu0
    %v1006 = vadd.f32 %v927, %v1005
    %v1007 = vand.u32 %v200, 4294901760
    %1008 = vmatmul.f32.gmra.mxu0 %v1007
    %v1009 = vpop.f32.mrf.mxu0
    %v1010 = vadd.f32 %v933, %v1009
    %1011 = vdwg.mxu0
    %v1012 = vand.u32 %v653, 4294901760
    %1013 = vmatpush.msra.mxu0 %v1012
    %v1014 = vand.u32 %v652, 4294901760
    %1015 = vmatpush.msra.mxu0 %v1014
    %v1016 = vand.u32 %v651, 4294901760
    %1017 = vmatpush.msra.mxu0 %v1016
    %v1018 = vand.u32 %v650, 4294901760
    %1019 = vmatpush.msra.mxu0 %v1018
    %v1020 = vand.u32 %v649, 4294901760
    %1021 = vmatpush.msra.mxu0 %v1020
    %v1022 = vand.u32 %v648, 4294901760
    %1023 = vmatpush.msra.mxu0 %v1022
    %v1024 = vand.u32 %v647, 4294901760
    %1025 = vmatpush.msra.mxu0 %v1024
    %v1026 = vand.u32 %v646, 4294901760
    %1027 = vmatpush.msra.mxu0 %v1026
    %v1028 = vand.u32 %v645, 4294901760
    %1029 = vmatpush.msra.mxu0 %v1028
    %v1030 = vand.u32 %v644, 4294901760
    %1031 = vmatpush.msra.mxu0 %v1030
    %v1032 = vand.u32 %v643, 4294901760
    %1033 = vmatpush.msra.mxu0 %v1032
    %v1034 = vand.u32 %v642, 4294901760
    %1035 = vmatpush.msra.mxu0 %v1034
    %v1036 = vand.u32 %v641, 4294901760
    %1037 = vmatpush.msra.mxu0 %v1036
    %v1038 = vand.u32 %v640, 4294901760
    %1039 = vmatpush.msra.mxu0 %v1038
    %v1040 = vand.u32 %v639, 4294901760
    %1041 = vmatpush.msra.mxu0 %v1040
    %v1042 = vand.u32 %v638, 4294901760
    %1043 = vmatpush.msra.mxu0 %v1042
    %v1044 = vand.u32 %v193, 4294901760
    %1045 = vmatmul.f32.gmra.mxu0 %v1044
    %v1046 = vpop.f32.mrf.mxu0
    %v1047 = vadd.f32 %v1002, %v1046
    %v1048 = vand.u32 %v195, 4294901760
    %1049 = vmatmul.f32.gmra.mxu0 %v1048
    %v1050 = vpop.f32.mrf.mxu0
    %v1051 = vadd.f32 %v1006, %v1050
    %v1052 = vand.u32 %v200, 4294901760
    %1053 = vmatmul.f32.gmra.mxu0 %v1052
    %v1054 = vpop.f32.mrf.mxu0
    %v1055 = vadd.f32 %v1010, %v1054
    %1056 = vdwg.mxu0
    %v1057 = vand.u32 %v216, 4294901760
    %1058 = vmatpush.msra.mxu0 %v1057
    %v1059 = vand.u32 %v215, 4294901760
    %1060 = vmatpush.msra.mxu0 %v1059
    %v1061 = vand.u32 %v214, 4294901760
    %1062 = vmatpush.msra.mxu0 %v1061
    %v1063 = vand.u32 %v213, 4294901760
    %1064 = vmatpush.msra.mxu0 %v1063
    %v1065 = vand.u32 %v212, 4294901760
    %1066 = vmatpush.msra.mxu0 %v1065
    %v1067 = vand.u32 %v211, 4294901760
    %1068 = vmatpush.msra.mxu0 %v1067
    %v1069 = vand.u32 %v210, 4294901760
    %1070 = vmatpush.msra.mxu0 %v1069
    %v1071 = vand.u32 %v209, 4294901760
    %1072 = vmatpush.msra.mxu0 %v1071
    %v1073 = vand.u32 %v208, 4294901760
    %1074 = vmatpush.msra.mxu0 %v1073
    %v1075 = vand.u32 %v207, 4294901760
    %1076 = vmatpush.msra.mxu0 %v1075
    %v1077 = vand.u32 %v206, 4294901760
    %1078 = vmatpush.msra.mxu0 %v1077
    %v1079 = vand.u32 %v205, 4294901760
    %1080 = vmatpush.msra.mxu0 %v1079
    %v1081 = vand.u32 %v204, 4294901760
    %1082 = vmatpush.msra.mxu0 %v1081
    %v1083 = vand.u32 %v203, 4294901760
    %1084 = vmatpush.msra.mxu0 %v1083
    %v1085 = vand.u32 %v202, 4294901760
    %1086 = vmatpush.msra.mxu0 %v1085
    %v1087 = vand.u32 %v201, 4294901760
    %1088 = vmatpush.msra.mxu0 %v1087
    %v1089 = vand.u32 %v189, 4294901760
    %v1090 = vsub.f32 %v189, %v1089
    %v1091 = vand.u32 %v1090, 4294901760
    %v1092 = vsub.f32 %v1090, %v1091
    %v1093 = vand.u32 %v1092, 4294901760
    %1094 = vmatmul.f32.gmra.mxu0 %v1093
    %v1095 = vpop.f32.mrf.mxu0
    %v1096 = vadd.f32 %v627, %v1095
    %v1097 = vand.u32 %v184, 4294901760
    %v1098 = vsub.f32 %v184, %v1097
    %v1099 = vand.u32 %v1098, 4294901760
    %v1100 = vsub.f32 %v1098, %v1099
    %v1101 = vand.u32 %v1100, 4294901760
    %1102 = vmatmul.f32.gmra.mxu0 %v1101
    %v1103 = vpop.f32.mrf.mxu0
    %v1104 = vadd.f32 %v631, %v1103
    %v1105 = vand.u32 %v185, 4294901760
    %v1106 = vsub.f32 %v185, %v1105
    %v1107 = vand.u32 %v1106, 4294901760
    %v1108 = vsub.f32 %v1106, %v1107
    %v1109 = vand.u32 %v1108, 4294901760
    %1110 = vmatmul.f32.gmra.mxu0 %v1109
    %v1111 = vpop.f32.mrf.mxu0
    %v1112 = vadd.f32 %v635, %v1111
    %1113 = vdwg.mxu0
    %v1114 = vand.u32 %v216, 4294901760
    %v1115 = vsub.f32 %v216, %v1114
    %v1116 = vand.u32 %v1115, 4294901760
    %v1117 = vsub.f32 %v1115, %v1116
    %v1118 = vand.u32 %v1117, 4294901760
    %1119 = vmatpush.msra.mxu0 %v1118
    %v1120 = vand.u32 %v215, 4294901760
    %v1121 = vsub.f32 %v215, %v1120
    %v1122 = vand.u32 %v1121, 4294901760
    %v1123 = vsub.f32 %v1121, %v1122
    %v1124 = vand.u32 %v1123, 4294901760
    %1125 = vmatpush.msra.mxu0 %v1124
    %v1126 = vand.u32 %v214, 4294901760
    %v1127 = vsub.f32 %v214, %v1126
    %v1128 = vand.u32 %v1127, 4294901760
    %v1129 = vsub.f32 %v1127, %v1128
    %v1130 = vand.u32 %v1129, 4294901760
    %1131 = vmatpush.msra.mxu0 %v1130
    %v1132 = vand.u32 %v213, 4294901760
    %v1133 = vsub.f32 %v213, %v1132
    %v1134 = vand.u32 %v1133, 4294901760
    %v1135 = vsub.f32 %v1133, %v1134
    %v1136 = vand.u32 %v1135, 4294901760
    %1137 = vmatpush.msra.mxu0 %v1136
    %v1138 = vand.u32 %v212, 4294901760
    %v1139 = vsub.f32 %v212, %v1138
    %v1140 = vand.u32 %v1139, 4294901760
    %v1141 = vsub.f32 %v1139, %v1140
    %v1142 = vand.u32 %v1141, 4294901760
    %1143 = vmatpush.msra.mxu0 %v1142
    %v1144 = vand.u32 %v211, 4294901760
    %v1145 = vsub.f32 %v211, %v1144
    %v1146 = vand.u32 %v1145, 4294901760
    %v1147 = vsub.f32 %v1145, %v1146
    %v1148 = vand.u32 %v1147, 4294901760
    %1149 = vmatpush.msra.mxu0 %v1148
    %v1150 = vand.u32 %v210, 4294901760
    %v1151 = vsub.f32 %v210, %v1150
    %v1152 = vand.u32 %v1151, 4294901760
    %v1153 = vsub.f32 %v1151, %v1152
    %v1154 = vand.u32 %v1153, 4294901760
    %1155 = vmatpush.msra.mxu0 %v1154
    %v1156 = vand.u32 %v209, 4294901760
    %v1157 = vsub.f32 %v209, %v1156
    %v1158 = vand.u32 %v1157, 4294901760
    %v1159 = vsub.f32 %v1157, %v1158
    %v1160 = vand.u32 %v1159, 4294901760
    %1161 = vmatpush.msra.mxu0 %v1160
    %v1162 = vand.u32 %v208, 4294901760
    %v1163 = vsub.f32 %v208, %v1162
    %v1164 = vand.u32 %v1163, 4294901760
    %v1165 = vsub.f32 %v1163, %v1164
    %v1166 = vand.u32 %v1165, 4294901760
    %1167 = vmatpush.msra.mxu0 %v1166
    %v1168 = vand.u32 %v207, 4294901760
    %v1169 = vsub.f32 %v207, %v1168
    %v1170 = vand.u32 %v1169, 4294901760
    %v1171 = vsub.f32 %v1169, %v1170
    %v1172 = vand.u32 %v1171, 4294901760
    %1173 = vmatpush.msra.mxu0 %v1172
    %v1174 = vand.u32 %v206, 4294901760
    %v1175 = vsub.f32 %v206, %v1174
    %v1176 = vand.u32 %v1175, 4294901760
    %v1177 = vsub.f32 %v1175, %v1176
    %v1178 = vand.u32 %v1177, 4294901760
    %1179 = vmatpush.msra.mxu0 %v1178
    %v1180 = vand.u32 %v205, 4294901760
    %v1181 = vsub.f32 %v205, %v1180
    %v1182 = vand.u32 %v1181, 4294901760
    %v1183 = vsub.f32 %v1181, %v1182
    %v1184 = vand.u32 %v1183, 4294901760
    %1185 = vmatpush.msra.mxu0 %v1184
    %v1186 = vand.u32 %v204, 4294901760
    %v1187 = vsub.f32 %v204, %v1186
    %v1188 = vand.u32 %v1187, 4294901760
    %v1189 = vsub.f32 %v1187, %v1188
    %v1190 = vand.u32 %v1189, 4294901760
    %1191 = vmatpush.msra.mxu0 %v1190
    %v1192 = vand.u32 %v203, 4294901760
    %v1193 = vsub.f32 %v203, %v1192
    %v1194 = vand.u32 %v1193, 4294901760
    %v1195 = vsub.f32 %v1193, %v1194
    %v1196 = vand.u32 %v1195, 4294901760
    %1197 = vmatpush.msra.mxu0 %v1196
    %v1198 = vand.u32 %v202, 4294901760
    %v1199 = vsub.f32 %v202, %v1198
    %v1200 = vand.u32 %v1199, 4294901760
    %v1201 = vsub.f32 %v1199, %v1200
    %v1202 = vand.u32 %v1201, 4294901760
    %1203 = vmatpush.msra.mxu0 %v1202
    %v1204 = vand.u32 %v201, 4294901760
    %v1205 = vsub.f32 %v201, %v1204
    %v1206 = vand.u32 %v1205, 4294901760
    %v1207 = vsub.f32 %v1205, %v1206
    %v1208 = vand.u32 %v1207, 4294901760
    %1209 = vmatpush.msra.mxu0 %v1208
    %v1210 = vand.u32 %v189, 4294901760
    %1211 = vmatmul.f32.gmra.mxu0 %v1210
    %v1212 = vpop.f32.mrf.mxu0
    %v1213 = vadd.f32 %v1096, %v1212
    %v1214 = vand.u32 %v184, 4294901760
    %1215 = vmatmul.f32.gmra.mxu0 %v1214
    %v1216 = vpop.f32.mrf.mxu0
    %v1217 = vadd.f32 %v1104, %v1216
    %v1218 = vand.u32 %v185, 4294901760
    %1219 = vmatmul.f32.gmra.mxu0 %v1218
    %v1220 = vpop.f32.mrf.mxu0
    %v1221 = vadd.f32 %v1112, %v1220
    %1222 = vdwg.mxu0
    %v1223 = vand.u32 %v216, 4294901760
    %v1224 = vsub.f32 %v216, %v1223
    %1225 = vmatpush.msra.mxu0 %v1224
    %v1226 = vand.u32 %v215, 4294901760
    %v1227 = vsub.f32 %v215, %v1226
    %1228 = vmatpush.msra.mxu0 %v1227
    %v1229 = vand.u32 %v214, 4294901760
    %v1230 = vsub.f32 %v214, %v1229
    %1231 = vmatpush.msra.mxu0 %v1230
    %v1232 = vand.u32 %v213, 4294901760
    %v1233 = vsub.f32 %v213, %v1232
    %1234 = vmatpush.msra.mxu0 %v1233
    %v1235 = vand.u32 %v212, 4294901760
    %v1236 = vsub.f32 %v212, %v1235
    %1237 = vmatpush.msra.mxu0 %v1236
    %v1238 = vand.u32 %v211, 4294901760
    %v1239 = vsub.f32 %v211, %v1238
    %1240 = vmatpush.msra.mxu0 %v1239
    %v1241 = vand.u32 %v210, 4294901760
    %v1242 = vsub.f32 %v210, %v1241
    %1243 = vmatpush.msra.mxu0 %v1242
    %v1244 = vand.u32 %v209, 4294901760
    %v1245 = vsub.f32 %v209, %v1244
    %1246 = vmatpush.msra.mxu0 %v1245
    %v1247 = vand.u32 %v208, 4294901760
    %v1248 = vsub.f32 %v208, %v1247
    %1249 = vmatpush.msra.mxu0 %v1248
    %v1250 = vand.u32 %v207, 4294901760
    %v1251 = vsub.f32 %v207, %v1250
    %1252 = vmatpush.msra.mxu0 %v1251
    %v1253 = vand.u32 %v206, 4294901760
    %v1254 = vsub.f32 %v206, %v1253
    %1255 = vmatpush.msra.mxu0 %v1254
    %v1256 = vand.u32 %v205, 4294901760
    %v1257 = vsub.f32 %v205, %v1256
    %1258 = vmatpush.msra.mxu0 %v1257
    %v1259 = vand.u32 %v204, 4294901760
    %v1260 = vsub.f32 %v204, %v1259
    %1261 = vmatpush.msra.mxu0 %v1260
    %v1262 = vand.u32 %v203, 4294901760
    %v1263 = vsub.f32 %v203, %v1262
    %1264 = vmatpush.msra.mxu0 %v1263
    %v1265 = vand.u32 %v202, 4294901760
    %v1266 = vsub.f32 %v202, %v1265
    %1267 = vmatpush.msra.mxu0 %v1266
    %v1268 = vand.u32 %v201, 4294901760
    %v1269 = vsub.f32 %v201, %v1268
    %1270 = vmatpush.msra.mxu0 %v1269
    %v1271 = vand.u32 %v189, 4294901760
    %v1272 = vsub.f32 %v189, %v1271
    %1273 = vmatmul.f32.gmra.mxu0 %v1272
    %v1274 = vpop.f32.mrf.mxu0
    %v1275 = vadd.f32 %v1213, %v1274
    %v1276 = vand.u32 %v184, 4294901760
    %v1277 = vsub.f32 %v184, %v1276
    %1278 = vmatmul.f32.gmra.mxu0 %v1277
    %v1279 = vpop.f32.mrf.mxu0
    %v1280 = vadd.f32 %v1217, %v1279
    %v1281 = vand.u32 %v185, 4294901760
    %v1282 = vsub.f32 %v185, %v1281
    %1283 = vmatmul.f32.gmra.mxu0 %v1282
    %v1284 = vpop.f32.mrf.mxu0
    %v1285 = vadd.f32 %v1221, %v1284
    %1286 = vdwg.mxu0
    %v1287 = vand.u32 %v216, 4294901760
    %1288 = vmatpush.msra.mxu0 %v1287
    %v1289 = vand.u32 %v215, 4294901760
    %1290 = vmatpush.msra.mxu0 %v1289
    %v1291 = vand.u32 %v214, 4294901760
    %1292 = vmatpush.msra.mxu0 %v1291
    %v1293 = vand.u32 %v213, 4294901760
    %1294 = vmatpush.msra.mxu0 %v1293
    %v1295 = vand.u32 %v212, 4294901760
    %1296 = vmatpush.msra.mxu0 %v1295
    %v1297 = vand.u32 %v211, 4294901760
    %1298 = vmatpush.msra.mxu0 %v1297
    %v1299 = vand.u32 %v210, 4294901760
    %1300 = vmatpush.msra.mxu0 %v1299
    %v1301 = vand.u32 %v209, 4294901760
    %1302 = vmatpush.msra.mxu0 %v1301
    %v1303 = vand.u32 %v208, 4294901760
    %1304 = vmatpush.msra.mxu0 %v1303
    %v1305 = vand.u32 %v207, 4294901760
    %1306 = vmatpush.msra.mxu0 %v1305
    %v1307 = vand.u32 %v206, 4294901760
    %1308 = vmatpush.msra.mxu0 %v1307
    %v1309 = vand.u32 %v205, 4294901760
    %1310 = vmatpush.msra.mxu0 %v1309
    %v1311 = vand.u32 %v204, 4294901760
    %1312 = vmatpush.msra.mxu0 %v1311
    %v1313 = vand.u32 %v203, 4294901760
    %1314 = vmatpush.msra.mxu0 %v1313
    %v1315 = vand.u32 %v202, 4294901760
    %1316 = vmatpush.msra.mxu0 %v1315
    %v1317 = vand.u32 %v201, 4294901760
    %1318 = vmatpush.msra.mxu0 %v1317
    %v1319 = vand.u32 %v189, 4294901760
    %v1320 = vsub.f32 %v189, %v1319
    %v1321 = vand.u32 %v1320, 4294901760
    %1322 = vmatmul.f32.gmra.mxu0 %v1321
    %v1323 = vpop.f32.mrf.mxu0
    %v1324 = vadd.f32 %v1275, %v1323
    %v1325 = vand.u32 %v184, 4294901760
    %v1326 = vsub.f32 %v184, %v1325
    %v1327 = vand.u32 %v1326, 4294901760
    %1328 = vmatmul.f32.gmra.mxu0 %v1327
    %v1329 = vpop.f32.mrf.mxu0
    %v1330 = vadd.f32 %v1280, %v1329
    %v1331 = vand.u32 %v185, 4294901760
    %v1332 = vsub.f32 %v185, %v1331
    %v1333 = vand.u32 %v1332, 4294901760
    %1334 = vmatmul.f32.gmra.mxu0 %v1333
    %v1335 = vpop.f32.mrf.mxu0
    %v1336 = vadd.f32 %v1285, %v1335
    %1337 = vdwg.mxu0
    %v1338 = vand.u32 %v216, 4294901760
    %v1339 = vsub.f32 %v216, %v1338
    %v1340 = vand.u32 %v1339, 4294901760
    %1341 = vmatpush.msra.mxu0 %v1340
    %v1342 = vand.u32 %v215, 4294901760
    %v1343 = vsub.f32 %v215, %v1342
    %v1344 = vand.u32 %v1343, 4294901760
    %1345 = vmatpush.msra.mxu0 %v1344
    %v1346 = vand.u32 %v214, 4294901760
    %v1347 = vsub.f32 %v214, %v1346
    %v1348 = vand.u32 %v1347, 4294901760
    %1349 = vmatpush.msra.mxu0 %v1348
    %v1350 = vand.u32 %v213, 4294901760
    %v1351 = vsub.f32 %v213, %v1350
    %v1352 = vand.u32 %v1351, 4294901760
    %1353 = vmatpush.msra.mxu0 %v1352
    %v1354 = vand.u32 %v212, 4294901760
    %v1355 = vsub.f32 %v212, %v1354
    %v1356 = vand.u32 %v1355, 4294901760
    %1357 = vmatpush.msra.mxu0 %v1356
    %v1358 = vand.u32 %v211, 4294901760
    %v1359 = vsub.f32 %v211, %v1358
    %v1360 = vand.u32 %v1359, 4294901760
    %1361 = vmatpush.msra.mxu0 %v1360
    %v1362 = vand.u32 %v210, 4294901760
    %v1363 = vsub.f32 %v210, %v1362
    %v1364 = vand.u32 %v1363, 4294901760
    %1365 = vmatpush.msra.mxu0 %v1364
    %v1366 = vand.u32 %v209, 4294901760
    %v1367 = vsub.f32 %v209, %v1366
    %v1368 = vand.u32 %v1367, 4294901760
    %1369 = vmatpush.msra.mxu0 %v1368
    %v1370 = vand.u32 %v208, 4294901760
    %v1371 = vsub.f32 %v208, %v1370
    %v1372 = vand.u32 %v1371, 4294901760
    %1373 = vmatpush.msra.mxu0 %v1372
    %v1374 = vand.u32 %v207, 4294901760
    %v1375 = vsub.f32 %v207, %v1374
    %v1376 = vand.u32 %v1375, 4294901760
    %1377 = vmatpush.msra.mxu0 %v1376
    %v1378 = vand.u32 %v206, 4294901760
    %v1379 = vsub.f32 %v206, %v1378
    %v1380 = vand.u32 %v1379, 4294901760
    %1381 = vmatpush.msra.mxu0 %v1380
    %v1382 = vand.u32 %v205, 4294901760
    %v1383 = vsub.f32 %v205, %v1382
    %v1384 = vand.u32 %v1383, 4294901760
    %1385 = vmatpush.msra.mxu0 %v1384
    %v1386 = vand.u32 %v204, 4294901760
    %v1387 = vsub.f32 %v204, %v1386
    %v1388 = vand.u32 %v1387, 4294901760
    %1389 = vmatpush.msra.mxu0 %v1388
    %v1390 = vand.u32 %v203, 4294901760
    %v1391 = vsub.f32 %v203, %v1390
    %v1392 = vand.u32 %v1391, 4294901760
    %1393 = vmatpush.msra.mxu0 %v1392
    %v1394 = vand.u32 %v202, 4294901760
    %v1395 = vsub.f32 %v202, %v1394
    %v1396 = vand.u32 %v1395, 4294901760
    %1397 = vmatpush.msra.mxu0 %v1396
    %v1398 = vand.u32 %v201, 4294901760
    %v1399 = vsub.f32 %v201, %v1398
    %v1400 = vand.u32 %v1399, 4294901760
    %1401 = vmatpush.msra.mxu0 %v1400
    %v1402 = vand.u32 %v189, 4294901760
    %1403 = vmatmul.f32.gmra.mxu0 %v1402
    %v1404 = vpop.f32.mrf.mxu0
    %v1405 = vadd.f32 %v1324, %v1404
    %v1406 = vand.u32 %v184, 4294901760
    %1407 = vmatmul.f32.gmra.mxu0 %v1406
    %v1408 = vpop.f32.mrf.mxu0
    %v1409 = vadd.f32 %v1330, %v1408
    %v1410 = vand.u32 %v185, 4294901760
    %1411 = vmatmul.f32.gmra.mxu0 %v1410
    %v1412 = vpop.f32.mrf.mxu0
    %v1413 = vadd.f32 %v1336, %v1412
    %1414 = vdwg.mxu0
    %v1415 = vand.u32 %v216, 4294901760
    %1416 = vmatpush.msra.mxu0 %v1415
    %v1417 = vand.u32 %v215, 4294901760
    %1418 = vmatpush.msra.mxu0 %v1417
    %v1419 = vand.u32 %v214, 4294901760
    %1420 = vmatpush.msra.mxu0 %v1419
    %v1421 = vand.u32 %v213, 4294901760
    %1422 = vmatpush.msra.mxu0 %v1421
    %v1423 = vand.u32 %v212, 4294901760
    %1424 = vmatpush.msra.mxu0 %v1423
    %v1425 = vand.u32 %v211, 4294901760
    %1426 = vmatpush.msra.mxu0 %v1425
    %v1427 = vand.u32 %v210, 4294901760
    %1428 = vmatpush.msra.mxu0 %v1427
    %v1429 = vand.u32 %v209, 4294901760
    %1430 = vmatpush.msra.mxu0 %v1429
    %v1431 = vand.u32 %v208, 4294901760
    %1432 = vmatpush.msra.mxu0 %v1431
    %v1433 = vand.u32 %v207, 4294901760
    %1434 = vmatpush.msra.mxu0 %v1433
    %v1435 = vand.u32 %v206, 4294901760
    %1436 = vmatpush.msra.mxu0 %v1435
    %v1437 = vand.u32 %v205, 4294901760
    %1438 = vmatpush.msra.mxu0 %v1437
    %v1439 = vand.u32 %v204, 4294901760
    %1440 = vmatpush.msra.mxu0 %v1439
    %v1441 = vand.u32 %v203, 4294901760
    %1442 = vmatpush.msra.mxu0 %v1441
    %v1443 = vand.u32 %v202, 4294901760
    %1444 = vmatpush.msra.mxu0 %v1443
    %v1445 = vand.u32 %v201, 4294901760
    %1446 = vmatpush.msra.mxu0 %v1445
    %v1447 = vand.u32 %v189, 4294901760
    %1448 = vmatmul.f32.gmra.mxu0 %v1447
    %v1449 = vpop.f32.mrf.mxu0
    %v1450 = vadd.f32 %v1405, %v1449
    %v1451 = vand.u32 %v184, 4294901760
    %1452 = vmatmul.f32.gmra.mxu0 %v1451
    %v1453 = vpop.f32.mrf.mxu0
    %v1454 = vadd.f32 %v1409, %v1453
    %v1455 = vand.u32 %v185, 4294901760
    %1456 = vmatmul.f32.gmra.mxu0 %v1455
    %v1457 = vpop.f32.mrf.mxu0
    %v1458 = vadd.f32 %v1413, %v1457
    %1459 = vdwg.mxu0
    %v1460 = vadd.f32 %v1450, %v1047
    %v1461 = vadd.f32 %v1454, %v1051
    %v1462 = vadd.f32 %v1458, %v1055
    %v1463 = vmul.f32 %v1460, %v127
    %v1464 = vmul.f32 %v1461, %v128
    %v1465 = vmul.f32 %v1462, %v129
    %v1466 = vadd.f32 %v1463, %v1464
    %v1467 = vadd.f32 %v1466, %v1465
    %1468 = vadd.xlane.f32.xlu0 %v1467
    %v1469 = vpop.xlane.xlu0 %1468
    %v1470 = vrot.slane %v1469, 4
    %v1471 = vadd.f32 %v1469, %v1470
    %v1472 = vrot.slane %v1471, 2
    %v1473 = vadd.f32 %v1471, %v1472
    %v1474 = vrot.slane %v1473, 1
    %v1475 = vadd.f32 %v1473, %v1474
    %s1476 = vtos %v1475
    %v1477 = vmul.f32 %v1463, %v1460
    %v1478 = vmul.f32 %v1464, %v1461
    %v1479 = vmul.f32 %v1465, %v1462
    %v1480 = vadd.f32 %v1477, %v1478
    %v1481 = vadd.f32 %v1480, %v1479
    %1482 = vadd.xlane.f32.xlu0 %v1481
    %v1483 = vpop.xlane.xlu0 %1482
    %v1484 = vrot.slane %v1483, 4
    %v1485 = vadd.f32 %v1483, %v1484
    %v1486 = vrot.slane %v1485, 2
    %v1487 = vadd.f32 %v1485, %v1486
    %v1488 = vrot.slane %v1487, 1
    %v1489 = vadd.f32 %v1487, %v1488
    %s1490 = vtos %v1489
    %s1491 = smul.f32 %s1476, 0.0025
    %s1492 = smul.f32 %s1490, 0.0025
    %s1493 = smul.f32 %s1491, %s1491
    %s1494 = ssub.f32 %s1492, %s1493
    %s1495 = smax.f32 %s1494, 0.0
    %s1496 = sadd.f32 %s1495, 1e-05
    %v1497 = vstv %s1496
    %v1498 = vrsqrt.pop %v1497
    %v1499 = vmul.f32 %v1498, %v1497
    %v1500 = vmul.f32 %v1499, %v1498
    %v1501 = vmul.f32 0.5, %v1500
    %v1502 = vsub.f32 1.5, %v1501
    %v1503 = vmul.f32 %v1498, %v1502
    %vm1504 = vweird.f32 %v1497
    %vm1505 = vweird.f32 %v1498
    %vm1506 = vmor %vm1504, %vm1505
    %v1507 = vsel %vm1506, %v1498, %v1503
    %s1508 = vtos %v1507
    %s1509 = smul.f32 %s111, %s1508
    %s1510 = smul.f32 %s1491, %s1509
    %s1511 = ssub.f32 %s114, %s1510
    %v1512 = vstv %s1509
    %v1513 = vmul.f32 %v1460, %v1512
    %v1514 = vmul.f32 %v1461, %v1512
    %v1515 = vmul.f32 %v1462, %v1512
    %v1516 = vstv %s1511
    %v1517 = vadd.f32 %v1513, %v1516
    %v1518 = vadd.f32 %v1514, %v1516
    %v1519 = vadd.f32 %v1515, %v1516
    %v1520 = vmax.f32 %v1517, 0.0
    %v1521 = vmax.f32 %v1518, 0.0
    %v1522 = vmax.f32 %v1519, 0.0
    %v1523 = vmul.f32 %v1520, %v127
    %v1524 = vmul.f32 %v1521, %v128
    %v1525 = vmul.f32 %v1522, %v129
    %v1527 = vrot.slane %v1525, 7
    %v1531 = vrot.slane %v1523, 7
    %v1532 = vrot.slane %v1524, 7
    %v1533 = vsel %vm181, %v1531, %v1532
    %v1534 = vsel %vm181, %v1532, %v1527
    %v1538 = vsel %vm181, %v1527, %v1531
    %v1539 = vrot.slane %v1523, 1
    %v1540 = vrot.slane %v1524, 1
    %v1541 = vsel %vm190, %v1539, %v1540
    %v1542 = vrot.slane %v1525, 1
    %v1543 = vsel %vm190, %v1540, %v1542
    %v1548 = vsel %vm190, %v1542, %v1539
    %s1549 = scalar_lea.vmem [#allocation9], 384
    %v1550 = vld [vmem:[%s1549] sm:$0xff]
    %v1551 = vld [vmem:[%s1549 + $0x8] sm:$0xff]
    %v1552 = vld [vmem:[%s1549 + $0x10] sm:$0xff]
    %v1553 = vld [vmem:[%s1549 + $0x18] sm:$0xff]
    %v1554 = vld [vmem:[%s1549 + $0x20] sm:$0xff]
    %v1555 = vld [vmem:[%s1549 + $0x28] sm:$0xff]
    %v1556 = vld [vmem:[%s1549 + $0x30] sm:$0xff]
    %v1557 = vld [vmem:[%s1549 + $0x38] sm:$0xff]
    %v1558 = vld [vmem:[%s1549 + $0x40] sm:$0xff]
    %v1559 = vld [vmem:[%s1549 + $0x48] sm:$0xff]
    %v1560 = vld [vmem:[%s1549 + $0x50] sm:$0xff]
    %v1561 = vld [vmem:[%s1549 + $0x58] sm:$0xff]
    %v1562 = vld [vmem:[%s1549 + $0x60] sm:$0xff]
    %v1563 = vld [vmem:[%s1549 + $0x68] sm:$0xff]
    %v1564 = vld [vmem:[%s1549 + $0x70] sm:$0xff]
    %v1565 = vld [vmem:[%s1549 + $0x78] sm:$0xff]
    %s1566 = scalar_lea.vmem [#allocation9], 512
    %v1567 = vld [vmem:[%s1566] sm:$0xff]
    %v1568 = vld [vmem:[%s1566 + $0x8] sm:$0xff]
    %v1569 = vld [vmem:[%s1566 + $0x10] sm:$0xff]
    %v1570 = vld [vmem:[%s1566 + $0x18] sm:$0xff]
    %v1571 = vld [vmem:[%s1566 + $0x20] sm:$0xff]
    %v1572 = vld [vmem:[%s1566 + $0x28] sm:$0xff]
    %v1573 = vld [vmem:[%s1566 + $0x30] sm:$0xff]
    %v1574 = vld [vmem:[%s1566 + $0x38] sm:$0xff]
    %v1575 = vld [vmem:[%s1566 + $0x40] sm:$0xff]
    %v1576 = vld [vmem:[%s1566 + $0x48] sm:$0xff]
    %v1577 = vld [vmem:[%s1566 + $0x50] sm:$0xff]
    %v1578 = vld [vmem:[%s1566 + $0x58] sm:$0xff]
    %v1579 = vld [vmem:[%s1566 + $0x60] sm:$0xff]
    %v1580 = vld [vmem:[%s1566 + $0x68] sm:$0xff]
    %v1581 = vld [vmem:[%s1566 + $0x70] sm:$0xff]
    %v1582 = vld [vmem:[%s1566 + $0x78] sm:$0xff]
    %v1583 = vand.u32 %v1582, 4294901760
    %1584 = vmatpush.msra.mxu0 %v1583
    %v1585 = vand.u32 %v1581, 4294901760
    %1586 = vmatpush.msra.mxu0 %v1585
    %v1587 = vand.u32 %v1580, 4294901760
    %1588 = vmatpush.msra.mxu0 %v1587
    %v1589 = vand.u32 %v1579, 4294901760
    %1590 = vmatpush.msra.mxu0 %v1589
    %v1591 = vand.u32 %v1578, 4294901760
    %1592 = vmatpush.msra.mxu0 %v1591
    %v1593 = vand.u32 %v1577, 4294901760
    %1594 = vmatpush.msra.mxu0 %v1593
    %v1595 = vand.u32 %v1576, 4294901760
    %1596 = vmatpush.msra.mxu0 %v1595
    %v1597 = vand.u32 %v1575, 4294901760
    %1598 = vmatpush.msra.mxu0 %v1597
    %v1599 = vand.u32 %v1574, 4294901760
    %1600 = vmatpush.msra.mxu0 %v1599
    %v1601 = vand.u32 %v1573, 4294901760
    %1602 = vmatpush.msra.mxu0 %v1601
    %v1603 = vand.u32 %v1572, 4294901760
    %1604 = vmatpush.msra.mxu0 %v1603
    %v1605 = vand.u32 %v1571, 4294901760
    %1606 = vmatpush.msra.mxu0 %v1605
    %v1607 = vand.u32 %v1570, 4294901760
    %1608 = vmatpush.msra.mxu0 %v1607
    %v1609 = vand.u32 %v1569, 4294901760
    %1610 = vmatpush.msra.mxu0 %v1609
    %v1611 = vand.u32 %v1568, 4294901760
    %1612 = vmatpush.msra.mxu0 %v1611
    %v1613 = vand.u32 %v1567, 4294901760
    %1614 = vmatpush.msra.mxu0 %v1613
    %v1615 = vand.u32 %v1523, 4294901760
    %v1616 = vsub.f32 %v1523, %v1615
    %v1617 = vand.u32 %v1616, 4294901760
    %v1618 = vsub.f32 %v1616, %v1617
    %v1619 = vand.u32 %v1618, 4294901760
    %1620 = vmatmul.f32.gmra.mxu0 %v1619
    %v1621 = vpop.f32.mrf.mxu0
    %v1622 = vadd.f32 0.0, %v1621
    %v1623 = vand.u32 %v1524, 4294901760
    %v1624 = vsub.f32 %v1524, %v1623
    %v1625 = vand.u32 %v1624, 4294901760
    %v1626 = vsub.f32 %v1624, %v1625
    %v1627 = vand.u32 %v1626, 4294901760
    %1628 = vmatmul.f32.gmra.mxu0 %v1627
    %v1629 = vpop.f32.mrf.mxu0
    %v1630 = vadd.f32 0.0, %v1629
    %v1631 = vand.u32 %v1525, 4294901760
    %v1632 = vsub.f32 %v1525, %v1631
    %v1633 = vand.u32 %v1632, 4294901760
    %v1634 = vsub.f32 %v1632, %v1633
    %v1635 = vand.u32 %v1634, 4294901760
    %1636 = vmatmul.f32.gmra.mxu0 %v1635
    %v1637 = vpop.f32.mrf.mxu0
    %v1638 = vadd.f32 0.0, %v1637
    %1639 = vdwg.mxu0
    %v1640 = vand.u32 %v1582, 4294901760
    %v1641 = vsub.f32 %v1582, %v1640
    %v1642 = vand.u32 %v1641, 4294901760
    %v1643 = vsub.f32 %v1641, %v1642
    %v1644 = vand.u32 %v1643, 4294901760
    %1645 = vmatpush.msra.mxu0 %v1644
    %v1646 = vand.u32 %v1581, 4294901760
    %v1647 = vsub.f32 %v1581, %v1646
    %v1648 = vand.u32 %v1647, 4294901760
    %v1649 = vsub.f32 %v1647, %v1648
    %v1650 = vand.u32 %v1649, 4294901760
    %1651 = vmatpush.msra.mxu0 %v1650
    %v1652 = vand.u32 %v1580, 4294901760
    %v1653 = vsub.f32 %v1580, %v1652
    %v1654 = vand.u32 %v1653, 4294901760
    %v1655 = vsub.f32 %v1653, %v1654
    %v1656 = vand.u32 %v1655, 4294901760
    %1657 = vmatpush.msra.mxu0 %v1656
    %v1658 = vand.u32 %v1579, 4294901760
    %v1659 = vsub.f32 %v1579, %v1658
    %v1660 = vand.u32 %v1659, 4294901760
    %v1661 = vsub.f32 %v1659, %v1660
    %v1662 = vand.u32 %v1661, 4294901760
    %1663 = vmatpush.msra.mxu0 %v1662
    %v1664 = vand.u32 %v1578, 4294901760
    %v1665 = vsub.f32 %v1578, %v1664
    %v1666 = vand.u32 %v1665, 4294901760
    %v1667 = vsub.f32 %v1665, %v1666
    %v1668 = vand.u32 %v1667, 4294901760
    %1669 = vmatpush.msra.mxu0 %v1668
    %v1670 = vand.u32 %v1577, 4294901760
    %v1671 = vsub.f32 %v1577, %v1670
    %v1672 = vand.u32 %v1671, 4294901760
    %v1673 = vsub.f32 %v1671, %v1672
    %v1674 = vand.u32 %v1673, 4294901760
    %1675 = vmatpush.msra.mxu0 %v1674
    %v1676 = vand.u32 %v1576, 4294901760
    %v1677 = vsub.f32 %v1576, %v1676
    %v1678 = vand.u32 %v1677, 4294901760
    %v1679 = vsub.f32 %v1677, %v1678
    %v1680 = vand.u32 %v1679, 4294901760
    %1681 = vmatpush.msra.mxu0 %v1680
    %v1682 = vand.u32 %v1575, 4294901760
    %v1683 = vsub.f32 %v1575, %v1682
    %v1684 = vand.u32 %v1683, 4294901760
    %v1685 = vsub.f32 %v1683, %v1684
    %v1686 = vand.u32 %v1685, 4294901760
    %1687 = vmatpush.msra.mxu0 %v1686
    %v1688 = vand.u32 %v1574, 4294901760
    %v1689 = vsub.f32 %v1574, %v1688
    %v1690 = vand.u32 %v1689, 4294901760
    %v1691 = vsub.f32 %v1689, %v1690
    %v1692 = vand.u32 %v1691, 4294901760
    %1693 = vmatpush.msra.mxu0 %v1692
    %v1694 = vand.u32 %v1573, 4294901760
    %v1695 = vsub.f32 %v1573, %v1694
    %v1696 = vand.u32 %v1695, 4294901760
    %v1697 = vsub.f32 %v1695, %v1696
    %v1698 = vand.u32 %v1697, 4294901760
    %1699 = vmatpush.msra.mxu0 %v1698
    %v1700 = vand.u32 %v1572, 4294901760
    %v1701 = vsub.f32 %v1572, %v1700
    %v1702 = vand.u32 %v1701, 4294901760
    %v1703 = vsub.f32 %v1701, %v1702
    %v1704 = vand.u32 %v1703, 4294901760
    %1705 = vmatpush.msra.mxu0 %v1704
    %v1706 = vand.u32 %v1571, 4294901760
    %v1707 = vsub.f32 %v1571, %v1706
    %v1708 = vand.u32 %v1707, 4294901760
    %v1709 = vsub.f32 %v1707, %v1708
    %v1710 = vand.u32 %v1709, 4294901760
    %1711 = vmatpush.msra.mxu0 %v1710
    %v1712 = vand.u32 %v1570, 4294901760
    %v1713 = vsub.f32 %v1570, %v1712
    %v1714 = vand.u32 %v1713, 4294901760
    %v1715 = vsub.f32 %v1713, %v1714
    %v1716 = vand.u32 %v1715, 4294901760
    %1717 = vmatpush.msra.mxu0 %v1716
    %v1718 = vand.u32 %v1569, 4294901760
    %v1719 = vsub.f32 %v1569, %v1718
    %v1720 = vand.u32 %v1719, 4294901760
    %v1721 = vsub.f32 %v1719, %v1720
    %v1722 = vand.u32 %v1721, 4294901760
    %1723 = vmatpush.msra.mxu0 %v1722
    %v1724 = vand.u32 %v1568, 4294901760
    %v1725 = vsub.f32 %v1568, %v1724
    %v1726 = vand.u32 %v1725, 4294901760
    %v1727 = vsub.f32 %v1725, %v1726
    %v1728 = vand.u32 %v1727, 4294901760
    %1729 = vmatpush.msra.mxu0 %v1728
    %v1730 = vand.u32 %v1567, 4294901760
    %v1731 = vsub.f32 %v1567, %v1730
    %v1732 = vand.u32 %v1731, 4294901760
    %v1733 = vsub.f32 %v1731, %v1732
    %v1734 = vand.u32 %v1733, 4294901760
    %1735 = vmatpush.msra.mxu0 %v1734
    %v1736 = vand.u32 %v1523, 4294901760
    %1737 = vmatmul.f32.gmra.mxu0 %v1736
    %v1738 = vpop.f32.mrf.mxu0
    %v1739 = vadd.f32 %v1622, %v1738
    %v1740 = vand.u32 %v1524, 4294901760
    %1741 = vmatmul.f32.gmra.mxu0 %v1740
    %v1742 = vpop.f32.mrf.mxu0
    %v1743 = vadd.f32 %v1630, %v1742
    %v1744 = vand.u32 %v1525, 4294901760
    %1745 = vmatmul.f32.gmra.mxu0 %v1744
    %v1746 = vpop.f32.mrf.mxu0
    %v1747 = vadd.f32 %v1638, %v1746
    %1748 = vdwg.mxu0
    %v1749 = vand.u32 %v1582, 4294901760
    %v1750 = vsub.f32 %v1582, %v1749
    %1751 = vmatpush.msra.mxu0 %v1750
    %v1752 = vand.u32 %v1581, 4294901760
    %v1753 = vsub.f32 %v1581, %v1752
    %1754 = vmatpush.msra.mxu0 %v1753
    %v1755 = vand.u32 %v1580, 4294901760
    %v1756 = vsub.f32 %v1580, %v1755
    %1757 = vmatpush.msra.mxu0 %v1756
    %v1758 = vand.u32 %v1579, 4294901760
    %v1759 = vsub.f32 %v1579, %v1758
    %1760 = vmatpush.msra.mxu0 %v1759
    %v1761 = vand.u32 %v1578, 4294901760
    %v1762 = vsub.f32 %v1578, %v1761
    %1763 = vmatpush.msra.mxu0 %v1762
    %v1764 = vand.u32 %v1577, 4294901760
    %v1765 = vsub.f32 %v1577, %v1764
    %1766 = vmatpush.msra.mxu0 %v1765
    %v1767 = vand.u32 %v1576, 4294901760
    %v1768 = vsub.f32 %v1576, %v1767
    %1769 = vmatpush.msra.mxu0 %v1768
    %v1770 = vand.u32 %v1575, 4294901760
    %v1771 = vsub.f32 %v1575, %v1770
    %1772 = vmatpush.msra.mxu0 %v1771
    %v1773 = vand.u32 %v1574, 4294901760
    %v1774 = vsub.f32 %v1574, %v1773
    %1775 = vmatpush.msra.mxu0 %v1774
    %v1776 = vand.u32 %v1573, 4294901760
    %v1777 = vsub.f32 %v1573, %v1776
    %1778 = vmatpush.msra.mxu0 %v1777
    %v1779 = vand.u32 %v1572, 4294901760
    %v1780 = vsub.f32 %v1572, %v1779
    %1781 = vmatpush.msra.mxu0 %v1780
    %v1782 = vand.u32 %v1571, 4294901760
    %v1783 = vsub.f32 %v1571, %v1782
    %1784 = vmatpush.msra.mxu0 %v1783
    %v1785 = vand.u32 %v1570, 4294901760
    %v1786 = vsub.f32 %v1570, %v1785
    %1787 = vmatpush.msra.mxu0 %v1786
    %v1788 = vand.u32 %v1569, 4294901760
    %v1789 = vsub.f32 %v1569, %v1788
    %1790 = vmatpush.msra.mxu0 %v1789
    %v1791 = vand.u32 %v1568, 4294901760
    %v1792 = vsub.f32 %v1568, %v1791
    %1793 = vmatpush.msra.mxu0 %v1792
    %v1794 = vand.u32 %v1567, 4294901760
    %v1795 = vsub.f32 %v1567, %v1794
    %1796 = vmatpush.msra.mxu0 %v1795
    %v1797 = vand.u32 %v1523, 4294901760
    %v1798 = vsub.f32 %v1523, %v1797
    %1799 = vmatmul.f32.gmra.mxu0 %v1798
    %v1800 = vpop.f32.mrf.mxu0
    %v1801 = vadd.f32 %v1739, %v1800
    %v1802 = vand.u32 %v1524, 4294901760
    %v1803 = vsub.f32 %v1524, %v1802
    %1804 = vmatmul.f32.gmra.mxu0 %v1803
    %v1805 = vpop.f32.mrf.mxu0
    %v1806 = vadd.f32 %v1743, %v1805
    %v1807 = vand.u32 %v1525, 4294901760
    %v1808 = vsub.f32 %v1525, %v1807
    %1809 = vmatmul.f32.gmra.mxu0 %v1808
    %v1810 = vpop.f32.mrf.mxu0
    %v1811 = vadd.f32 %v1747, %v1810
    %1812 = vdwg.mxu0
    %v1813 = vand.u32 %v1582, 4294901760
    %1814 = vmatpush.msra.mxu0 %v1813
    %v1815 = vand.u32 %v1581, 4294901760
    %1816 = vmatpush.msra.mxu0 %v1815
    %v1817 = vand.u32 %v1580, 4294901760
    %1818 = vmatpush.msra.mxu0 %v1817
    %v1819 = vand.u32 %v1579, 4294901760
    %1820 = vmatpush.msra.mxu0 %v1819
    %v1821 = vand.u32 %v1578, 4294901760
    %1822 = vmatpush.msra.mxu0 %v1821
    %v1823 = vand.u32 %v1577, 4294901760
    %1824 = vmatpush.msra.mxu0 %v1823
    %v1825 = vand.u32 %v1576, 4294901760
    %1826 = vmatpush.msra.mxu0 %v1825
    %v1827 = vand.u32 %v1575, 4294901760
    %1828 = vmatpush.msra.mxu0 %v1827
    %v1829 = vand.u32 %v1574, 4294901760
    %1830 = vmatpush.msra.mxu0 %v1829
    %v1831 = vand.u32 %v1573, 4294901760
    %1832 = vmatpush.msra.mxu0 %v1831
    %v1833 = vand.u32 %v1572, 4294901760
    %1834 = vmatpush.msra.mxu0 %v1833
    %v1835 = vand.u32 %v1571, 4294901760
    %1836 = vmatpush.msra.mxu0 %v1835
    %v1837 = vand.u32 %v1570, 4294901760
    %1838 = vmatpush.msra.mxu0 %v1837
    %v1839 = vand.u32 %v1569, 4294901760
    %1840 = vmatpush.msra.mxu0 %v1839
    %v1841 = vand.u32 %v1568, 4294901760
    %1842 = vmatpush.msra.mxu0 %v1841
    %v1843 = vand.u32 %v1567, 4294901760
    %1844 = vmatpush.msra.mxu0 %v1843
    %v1845 = vand.u32 %v1523, 4294901760
    %v1846 = vsub.f32 %v1523, %v1845
    %v1847 = vand.u32 %v1846, 4294901760
    %1848 = vmatmul.f32.gmra.mxu0 %v1847
    %v1849 = vpop.f32.mrf.mxu0
    %v1850 = vadd.f32 %v1801, %v1849
    %v1851 = vand.u32 %v1524, 4294901760
    %v1852 = vsub.f32 %v1524, %v1851
    %v1853 = vand.u32 %v1852, 4294901760
    %1854 = vmatmul.f32.gmra.mxu0 %v1853
    %v1855 = vpop.f32.mrf.mxu0
    %v1856 = vadd.f32 %v1806, %v1855
    %v1857 = vand.u32 %v1525, 4294901760
    %v1858 = vsub.f32 %v1525, %v1857
    %v1859 = vand.u32 %v1858, 4294901760
    %1860 = vmatmul.f32.gmra.mxu0 %v1859
    %v1861 = vpop.f32.mrf.mxu0
    %v1862 = vadd.f32 %v1811, %v1861
    %1863 = vdwg.mxu0
    %v1864 = vand.u32 %v1582, 4294901760
    %v1865 = vsub.f32 %v1582, %v1864
    %v1866 = vand.u32 %v1865, 4294901760
    %1867 = vmatpush.msra.mxu0 %v1866
    %v1868 = vand.u32 %v1581, 4294901760
    %v1869 = vsub.f32 %v1581, %v1868
    %v1870 = vand.u32 %v1869, 4294901760
    %1871 = vmatpush.msra.mxu0 %v1870
    %v1872 = vand.u32 %v1580, 4294901760
    %v1873 = vsub.f32 %v1580, %v1872
    %v1874 = vand.u32 %v1873, 4294901760
    %1875 = vmatpush.msra.mxu0 %v1874
    %v1876 = vand.u32 %v1579, 4294901760
    %v1877 = vsub.f32 %v1579, %v1876
    %v1878 = vand.u32 %v1877, 4294901760
    %1879 = vmatpush.msra.mxu0 %v1878
    %v1880 = vand.u32 %v1578, 4294901760
    %v1881 = vsub.f32 %v1578, %v1880
    %v1882 = vand.u32 %v1881, 4294901760
    %1883 = vmatpush.msra.mxu0 %v1882
    %v1884 = vand.u32 %v1577, 4294901760
    %v1885 = vsub.f32 %v1577, %v1884
    %v1886 = vand.u32 %v1885, 4294901760
    %1887 = vmatpush.msra.mxu0 %v1886
    %v1888 = vand.u32 %v1576, 4294901760
    %v1889 = vsub.f32 %v1576, %v1888
    %v1890 = vand.u32 %v1889, 4294901760
    %1891 = vmatpush.msra.mxu0 %v1890
    %v1892 = vand.u32 %v1575, 4294901760
    %v1893 = vsub.f32 %v1575, %v1892
    %v1894 = vand.u32 %v1893, 4294901760
    %1895 = vmatpush.msra.mxu0 %v1894
    %v1896 = vand.u32 %v1574, 4294901760
    %v1897 = vsub.f32 %v1574, %v1896
    %v1898 = vand.u32 %v1897, 4294901760
    %1899 = vmatpush.msra.mxu0 %v1898
    %v1900 = vand.u32 %v1573, 4294901760
    %v1901 = vsub.f32 %v1573, %v1900
    %v1902 = vand.u32 %v1901, 4294901760
    %1903 = vmatpush.msra.mxu0 %v1902
    %v1904 = vand.u32 %v1572, 4294901760
    %v1905 = vsub.f32 %v1572, %v1904
    %v1906 = vand.u32 %v1905, 4294901760
    %1907 = vmatpush.msra.mxu0 %v1906
    %v1908 = vand.u32 %v1571, 4294901760
    %v1909 = vsub.f32 %v1571, %v1908
    %v1910 = vand.u32 %v1909, 4294901760
    %1911 = vmatpush.msra.mxu0 %v1910
    %v1912 = vand.u32 %v1570, 4294901760
    %v1913 = vsub.f32 %v1570, %v1912
    %v1914 = vand.u32 %v1913, 4294901760
    %1915 = vmatpush.msra.mxu0 %v1914
    %v1916 = vand.u32 %v1569, 4294901760
    %v1917 = vsub.f32 %v1569, %v1916
    %v1918 = vand.u32 %v1917, 4294901760
    %1919 = vmatpush.msra.mxu0 %v1918
    %v1920 = vand.u32 %v1568, 4294901760
    %v1921 = vsub.f32 %v1568, %v1920
    %v1922 = vand.u32 %v1921, 4294901760
    %1923 = vmatpush.msra.mxu0 %v1922
    %v1924 = vand.u32 %v1567, 4294901760
    %v1925 = vsub.f32 %v1567, %v1924
    %v1926 = vand.u32 %v1925, 4294901760
    %1927 = vmatpush.msra.mxu0 %v1926
    %v1928 = vand.u32 %v1523, 4294901760
    %1929 = vmatmul.f32.gmra.mxu0 %v1928
    %v1930 = vpop.f32.mrf.mxu0
    %v1931 = vadd.f32 %v1850, %v1930
    %v1932 = vand.u32 %v1524, 4294901760
    %1933 = vmatmul.f32.gmra.mxu0 %v1932
    %v1934 = vpop.f32.mrf.mxu0
    %v1935 = vadd.f32 %v1856, %v1934
    %v1936 = vand.u32 %v1525, 4294901760
    %1937 = vmatmul.f32.gmra.mxu0 %v1936
    %v1938 = vpop.f32.mrf.mxu0
    %v1939 = vadd.f32 %v1862, %v1938
    %1940 = vdwg.mxu0
    %v1941 = vand.u32 %v1582, 4294901760
    %1942 = vmatpush.msra.mxu0 %v1941
    %v1943 = vand.u32 %v1581, 4294901760
    %1944 = vmatpush.msra.mxu0 %v1943
    %v1945 = vand.u32 %v1580, 4294901760
    %1946 = vmatpush.msra.mxu0 %v1945
    %v1947 = vand.u32 %v1579, 4294901760
    %1948 = vmatpush.msra.mxu0 %v1947
    %v1949 = vand.u32 %v1578, 4294901760
    %1950 = vmatpush.msra.mxu0 %v1949
    %v1951 = vand.u32 %v1577, 4294901760
    %1952 = vmatpush.msra.mxu0 %v1951
    %v1953 = vand.u32 %v1576, 4294901760
    %1954 = vmatpush.msra.mxu0 %v1953
    %v1955 = vand.u32 %v1575, 4294901760
    %1956 = vmatpush.msra.mxu0 %v1955
    %v1957 = vand.u32 %v1574, 4294901760
    %1958 = vmatpush.msra.mxu0 %v1957
    %v1959 = vand.u32 %v1573, 4294901760
    %1960 = vmatpush.msra.mxu0 %v1959
    %v1961 = vand.u32 %v1572, 4294901760
    %1962 = vmatpush.msra.mxu0 %v1961
    %v1963 = vand.u32 %v1571, 4294901760
    %1964 = vmatpush.msra.mxu0 %v1963
    %v1965 = vand.u32 %v1570, 4294901760
    %1966 = vmatpush.msra.mxu0 %v1965
    %v1967 = vand.u32 %v1569, 4294901760
    %1968 = vmatpush.msra.mxu0 %v1967
    %v1969 = vand.u32 %v1568, 4294901760
    %1970 = vmatpush.msra.mxu0 %v1969
    %v1971 = vand.u32 %v1567, 4294901760
    %1972 = vmatpush.msra.mxu0 %v1971
    %v1973 = vand.u32 %v1523, 4294901760
    %1974 = vmatmul.f32.gmra.mxu0 %v1973
    %v1975 = vpop.f32.mrf.mxu0
    %v1976 = vadd.f32 %v1931, %v1975
    %v1977 = vand.u32 %v1524, 4294901760
    %1978 = vmatmul.f32.gmra.mxu0 %v1977
    %v1979 = vpop.f32.mrf.mxu0
    %v1980 = vadd.f32 %v1935, %v1979
    %v1981 = vand.u32 %v1525, 4294901760
    %1982 = vmatmul.f32.gmra.mxu0 %v1981
    %v1983 = vpop.f32.mrf.mxu0
    %v1984 = vadd.f32 %v1939, %v1983
    %1985 = vdwg.mxu0
    %s1986 = scalar_lea.vmem [#allocation9], 640
    %v1987 = vld [vmem:[%s1986] sm:$0xff]
    %v1988 = vld [vmem:[%s1986 + $0x8] sm:$0xff]
    %v1989 = vld [vmem:[%s1986 + $0x10] sm:$0xff]
    %v1990 = vld [vmem:[%s1986 + $0x18] sm:$0xff]
    %v1991 = vld [vmem:[%s1986 + $0x20] sm:$0xff]
    %v1992 = vld [vmem:[%s1986 + $0x28] sm:$0xff]
    %v1993 = vld [vmem:[%s1986 + $0x30] sm:$0xff]
    %v1994 = vld [vmem:[%s1986 + $0x38] sm:$0xff]
    %v1995 = vld [vmem:[%s1986 + $0x40] sm:$0xff]
    %v1996 = vld [vmem:[%s1986 + $0x48] sm:$0xff]
    %v1997 = vld [vmem:[%s1986 + $0x50] sm:$0xff]
    %v1998 = vld [vmem:[%s1986 + $0x58] sm:$0xff]
    %v1999 = vld [vmem:[%s1986 + $0x60] sm:$0xff]
    %v2000 = vld [vmem:[%s1986 + $0x68] sm:$0xff]
    %v2001 = vld [vmem:[%s1986 + $0x70] sm:$0xff]
    %v2002 = vld [vmem:[%s1986 + $0x78] sm:$0xff]
    %v2003 = vand.u32 %v2002, 4294901760
    %2004 = vmatpush.msra.mxu0 %v2003
    %v2005 = vand.u32 %v2001, 4294901760
    %2006 = vmatpush.msra.mxu0 %v2005
    %v2007 = vand.u32 %v2000, 4294901760
    %2008 = vmatpush.msra.mxu0 %v2007
    %v2009 = vand.u32 %v1999, 4294901760
    %2010 = vmatpush.msra.mxu0 %v2009
    %v2011 = vand.u32 %v1998, 4294901760
    %2012 = vmatpush.msra.mxu0 %v2011
    %v2013 = vand.u32 %v1997, 4294901760
    %2014 = vmatpush.msra.mxu0 %v2013
    %v2015 = vand.u32 %v1996, 4294901760
    %2016 = vmatpush.msra.mxu0 %v2015
    %v2017 = vand.u32 %v1995, 4294901760
    %2018 = vmatpush.msra.mxu0 %v2017
    %v2019 = vand.u32 %v1994, 4294901760
    %2020 = vmatpush.msra.mxu0 %v2019
    %v2021 = vand.u32 %v1993, 4294901760
    %2022 = vmatpush.msra.mxu0 %v2021
    %v2023 = vand.u32 %v1992, 4294901760
    %2024 = vmatpush.msra.mxu0 %v2023
    %v2025 = vand.u32 %v1991, 4294901760
    %2026 = vmatpush.msra.mxu0 %v2025
    %v2027 = vand.u32 %v1990, 4294901760
    %2028 = vmatpush.msra.mxu0 %v2027
    %v2029 = vand.u32 %v1989, 4294901760
    %2030 = vmatpush.msra.mxu0 %v2029
    %v2031 = vand.u32 %v1988, 4294901760
    %2032 = vmatpush.msra.mxu0 %v2031
    %v2033 = vand.u32 %v1987, 4294901760
    %2034 = vmatpush.msra.mxu0 %v2033
    %v2035 = vand.u32 %v1541, 4294901760
    %v2036 = vsub.f32 %v1541, %v2035
    %v2037 = vand.u32 %v2036, 4294901760
    %v2038 = vsub.f32 %v2036, %v2037
    %v2039 = vand.u32 %v2038, 4294901760
    %2040 = vmatmul.f32.gmra.mxu0 %v2039
    %v2041 = vpop.f32.mrf.mxu0
    %v2042 = vadd.f32 0.0, %v2041
    %v2043 = vand.u32 %v1543, 4294901760
    %v2044 = vsub.f32 %v1543, %v2043
    %v2045 = vand.u32 %v2044, 4294901760
    %v2046 = vsub.f32 %v2044, %v2045
    %v2047 = vand.u32 %v2046, 4294901760
    %2048 = vmatmul.f32.gmra.mxu0 %v2047
    %v2049 = vpop.f32.mrf.mxu0
    %v2050 = vadd.f32 0.0, %v2049
    %v2051 = vand.u32 %v1548, 4294901760
    %v2052 = vsub.f32 %v1548, %v2051
    %v2053 = vand.u32 %v2052, 4294901760
    %v2054 = vsub.f32 %v2052, %v2053
    %v2055 = vand.u32 %v2054, 4294901760
    %2056 = vmatmul.f32.gmra.mxu0 %v2055
    %v2057 = vpop.f32.mrf.mxu0
    %v2058 = vadd.f32 0.0, %v2057
    %2059 = vdwg.mxu0
    %v2060 = vand.u32 %v2002, 4294901760
    %v2061 = vsub.f32 %v2002, %v2060
    %v2062 = vand.u32 %v2061, 4294901760
    %v2063 = vsub.f32 %v2061, %v2062
    %v2064 = vand.u32 %v2063, 4294901760
    %2065 = vmatpush.msra.mxu0 %v2064
    %v2066 = vand.u32 %v2001, 4294901760
    %v2067 = vsub.f32 %v2001, %v2066
    %v2068 = vand.u32 %v2067, 4294901760
    %v2069 = vsub.f32 %v2067, %v2068
    %v2070 = vand.u32 %v2069, 4294901760
    %2071 = vmatpush.msra.mxu0 %v2070
    %v2072 = vand.u32 %v2000, 4294901760
    %v2073 = vsub.f32 %v2000, %v2072
    %v2074 = vand.u32 %v2073, 4294901760
    %v2075 = vsub.f32 %v2073, %v2074
    %v2076 = vand.u32 %v2075, 4294901760
    %2077 = vmatpush.msra.mxu0 %v2076
    %v2078 = vand.u32 %v1999, 4294901760
    %v2079 = vsub.f32 %v1999, %v2078
    %v2080 = vand.u32 %v2079, 4294901760
    %v2081 = vsub.f32 %v2079, %v2080
    %v2082 = vand.u32 %v2081, 4294901760
    %2083 = vmatpush.msra.mxu0 %v2082
    %v2084 = vand.u32 %v1998, 4294901760
    %v2085 = vsub.f32 %v1998, %v2084
    %v2086 = vand.u32 %v2085, 4294901760
    %v2087 = vsub.f32 %v2085, %v2086
    %v2088 = vand.u32 %v2087, 4294901760
    %2089 = vmatpush.msra.mxu0 %v2088
    %v2090 = vand.u32 %v1997, 4294901760
    %v2091 = vsub.f32 %v1997, %v2090
    %v2092 = vand.u32 %v2091, 4294901760
    %v2093 = vsub.f32 %v2091, %v2092
    %v2094 = vand.u32 %v2093, 4294901760
    %2095 = vmatpush.msra.mxu0 %v2094
    %v2096 = vand.u32 %v1996, 4294901760
    %v2097 = vsub.f32 %v1996, %v2096
    %v2098 = vand.u32 %v2097, 4294901760
    %v2099 = vsub.f32 %v2097, %v2098
    %v2100 = vand.u32 %v2099, 4294901760
    %2101 = vmatpush.msra.mxu0 %v2100
    %v2102 = vand.u32 %v1995, 4294901760
    %v2103 = vsub.f32 %v1995, %v2102
    %v2104 = vand.u32 %v2103, 4294901760
    %v2105 = vsub.f32 %v2103, %v2104
    %v2106 = vand.u32 %v2105, 4294901760
    %2107 = vmatpush.msra.mxu0 %v2106
    %v2108 = vand.u32 %v1994, 4294901760
    %v2109 = vsub.f32 %v1994, %v2108
    %v2110 = vand.u32 %v2109, 4294901760
    %v2111 = vsub.f32 %v2109, %v2110
    %v2112 = vand.u32 %v2111, 4294901760
    %2113 = vmatpush.msra.mxu0 %v2112
    %v2114 = vand.u32 %v1993, 4294901760
    %v2115 = vsub.f32 %v1993, %v2114
    %v2116 = vand.u32 %v2115, 4294901760
    %v2117 = vsub.f32 %v2115, %v2116
    %v2118 = vand.u32 %v2117, 4294901760
    %2119 = vmatpush.msra.mxu0 %v2118
    %v2120 = vand.u32 %v1992, 4294901760
    %v2121 = vsub.f32 %v1992, %v2120
    %v2122 = vand.u32 %v2121, 4294901760
    %v2123 = vsub.f32 %v2121, %v2122
    %v2124 = vand.u32 %v2123, 4294901760
    %2125 = vmatpush.msra.mxu0 %v2124
    %v2126 = vand.u32 %v1991, 4294901760
    %v2127 = vsub.f32 %v1991, %v2126
    %v2128 = vand.u32 %v2127, 4294901760
    %v2129 = vsub.f32 %v2127, %v2128
    %v2130 = vand.u32 %v2129, 4294901760
    %2131 = vmatpush.msra.mxu0 %v2130
    %v2132 = vand.u32 %v1990, 4294901760
    %v2133 = vsub.f32 %v1990, %v2132
    %v2134 = vand.u32 %v2133, 4294901760
    %v2135 = vsub.f32 %v2133, %v2134
    %v2136 = vand.u32 %v2135, 4294901760
    %2137 = vmatpush.msra.mxu0 %v2136
    %v2138 = vand.u32 %v1989, 4294901760
    %v2139 = vsub.f32 %v1989, %v2138
    %v2140 = vand.u32 %v2139, 4294901760
    %v2141 = vsub.f32 %v2139, %v2140
    %v2142 = vand.u32 %v2141, 4294901760
    %2143 = vmatpush.msra.mxu0 %v2142
    %v2144 = vand.u32 %v1988, 4294901760
    %v2145 = vsub.f32 %v1988, %v2144
    %v2146 = vand.u32 %v2145, 4294901760
    %v2147 = vsub.f32 %v2145, %v2146
    %v2148 = vand.u32 %v2147, 4294901760
    %2149 = vmatpush.msra.mxu0 %v2148
    %v2150 = vand.u32 %v1987, 4294901760
    %v2151 = vsub.f32 %v1987, %v2150
    %v2152 = vand.u32 %v2151, 4294901760
    %v2153 = vsub.f32 %v2151, %v2152
    %v2154 = vand.u32 %v2153, 4294901760
    %2155 = vmatpush.msra.mxu0 %v2154
    %v2156 = vand.u32 %v1541, 4294901760
    %2157 = vmatmul.f32.gmra.mxu0 %v2156
    %v2158 = vpop.f32.mrf.mxu0
    %v2159 = vadd.f32 %v2042, %v2158
    %v2160 = vand.u32 %v1543, 4294901760
    %2161 = vmatmul.f32.gmra.mxu0 %v2160
    %v2162 = vpop.f32.mrf.mxu0
    %v2163 = vadd.f32 %v2050, %v2162
    %v2164 = vand.u32 %v1548, 4294901760
    %2165 = vmatmul.f32.gmra.mxu0 %v2164
    %v2166 = vpop.f32.mrf.mxu0
    %v2167 = vadd.f32 %v2058, %v2166
    %2168 = vdwg.mxu0
    %v2169 = vand.u32 %v2002, 4294901760
    %v2170 = vsub.f32 %v2002, %v2169
    %2171 = vmatpush.msra.mxu0 %v2170
    %v2172 = vand.u32 %v2001, 4294901760
    %v2173 = vsub.f32 %v2001, %v2172
    %2174 = vmatpush.msra.mxu0 %v2173
    %v2175 = vand.u32 %v2000, 4294901760
    %v2176 = vsub.f32 %v2000, %v2175
    %2177 = vmatpush.msra.mxu0 %v2176
    %v2178 = vand.u32 %v1999, 4294901760
    %v2179 = vsub.f32 %v1999, %v2178
    %2180 = vmatpush.msra.mxu0 %v2179
    %v2181 = vand.u32 %v1998, 4294901760
    %v2182 = vsub.f32 %v1998, %v2181
    %2183 = vmatpush.msra.mxu0 %v2182
    %v2184 = vand.u32 %v1997, 4294901760
    %v2185 = vsub.f32 %v1997, %v2184
    %2186 = vmatpush.msra.mxu0 %v2185
    %v2187 = vand.u32 %v1996, 4294901760
    %v2188 = vsub.f32 %v1996, %v2187
    %2189 = vmatpush.msra.mxu0 %v2188
    %v2190 = vand.u32 %v1995, 4294901760
    %v2191 = vsub.f32 %v1995, %v2190
    %2192 = vmatpush.msra.mxu0 %v2191
    %v2193 = vand.u32 %v1994, 4294901760
    %v2194 = vsub.f32 %v1994, %v2193
    %2195 = vmatpush.msra.mxu0 %v2194
    %v2196 = vand.u32 %v1993, 4294901760
    %v2197 = vsub.f32 %v1993, %v2196
    %2198 = vmatpush.msra.mxu0 %v2197
    %v2199 = vand.u32 %v1992, 4294901760
    %v2200 = vsub.f32 %v1992, %v2199
    %2201 = vmatpush.msra.mxu0 %v2200
    %v2202 = vand.u32 %v1991, 4294901760
    %v2203 = vsub.f32 %v1991, %v2202
    %2204 = vmatpush.msra.mxu0 %v2203
    %v2205 = vand.u32 %v1990, 4294901760
    %v2206 = vsub.f32 %v1990, %v2205
    %2207 = vmatpush.msra.mxu0 %v2206
    %v2208 = vand.u32 %v1989, 4294901760
    %v2209 = vsub.f32 %v1989, %v2208
    %2210 = vmatpush.msra.mxu0 %v2209
    %v2211 = vand.u32 %v1988, 4294901760
    %v2212 = vsub.f32 %v1988, %v2211
    %2213 = vmatpush.msra.mxu0 %v2212
    %v2214 = vand.u32 %v1987, 4294901760
    %v2215 = vsub.f32 %v1987, %v2214
    %2216 = vmatpush.msra.mxu0 %v2215
    %v2217 = vand.u32 %v1541, 4294901760
    %v2218 = vsub.f32 %v1541, %v2217
    %2219 = vmatmul.f32.gmra.mxu0 %v2218
    %v2220 = vpop.f32.mrf.mxu0
    %v2221 = vadd.f32 %v2159, %v2220
    %v2222 = vand.u32 %v1543, 4294901760
    %v2223 = vsub.f32 %v1543, %v2222
    %2224 = vmatmul.f32.gmra.mxu0 %v2223
    %v2225 = vpop.f32.mrf.mxu0
    %v2226 = vadd.f32 %v2163, %v2225
    %v2227 = vand.u32 %v1548, 4294901760
    %v2228 = vsub.f32 %v1548, %v2227
    %2229 = vmatmul.f32.gmra.mxu0 %v2228
    %v2230 = vpop.f32.mrf.mxu0
    %v2231 = vadd.f32 %v2167, %v2230
    %2232 = vdwg.mxu0
    %v2233 = vand.u32 %v2002, 4294901760
    %2234 = vmatpush.msra.mxu0 %v2233
    %v2235 = vand.u32 %v2001, 4294901760
    %2236 = vmatpush.msra.mxu0 %v2235
    %v2237 = vand.u32 %v2000, 4294901760
    %2238 = vmatpush.msra.mxu0 %v2237
    %v2239 = vand.u32 %v1999, 4294901760
    %2240 = vmatpush.msra.mxu0 %v2239
    %v2241 = vand.u32 %v1998, 4294901760
    %2242 = vmatpush.msra.mxu0 %v2241
    %v2243 = vand.u32 %v1997, 4294901760
    %2244 = vmatpush.msra.mxu0 %v2243
    %v2245 = vand.u32 %v1996, 4294901760
    %2246 = vmatpush.msra.mxu0 %v2245
    %v2247 = vand.u32 %v1995, 4294901760
    %2248 = vmatpush.msra.mxu0 %v2247
    %v2249 = vand.u32 %v1994, 4294901760
    %2250 = vmatpush.msra.mxu0 %v2249
    %v2251 = vand.u32 %v1993, 4294901760
    %2252 = vmatpush.msra.mxu0 %v2251
    %v2253 = vand.u32 %v1992, 4294901760
    %2254 = vmatpush.msra.mxu0 %v2253
    %v2255 = vand.u32 %v1991, 4294901760
    %2256 = vmatpush.msra.mxu0 %v2255
    %v2257 = vand.u32 %v1990, 4294901760
    %2258 = vmatpush.msra.mxu0 %v2257
    %v2259 = vand.u32 %v1989, 4294901760
    %2260 = vmatpush.msra.mxu0 %v2259
    %v2261 = vand.u32 %v1988, 4294901760
    %2262 = vmatpush.msra.mxu0 %v2261
    %v2263 = vand.u32 %v1987, 4294901760
    %2264 = vmatpush.msra.mxu0 %v2263
    %v2265 = vand.u32 %v1541, 4294901760
    %v2266 = vsub.f32 %v1541, %v2265
    %v2267 = vand.u32 %v2266, 4294901760
    %2268 = vmatmul.f32.gmra.mxu0 %v2267
    %v2269 = vpop.f32.mrf.mxu0
    %v2270 = vadd.f32 %v2221, %v2269
    %v2271 = vand.u32 %v1543, 4294901760
    %v2272 = vsub.f32 %v1543, %v2271
    %v2273 = vand.u32 %v2272, 4294901760
    %2274 = vmatmul.f32.gmra.mxu0 %v2273
    %v2275 = vpop.f32.mrf.mxu0
    %v2276 = vadd.f32 %v2226, %v2275
    %v2277 = vand.u32 %v1548, 4294901760
    %v2278 = vsub.f32 %v1548, %v2277
    %v2279 = vand.u32 %v2278, 4294901760
    %2280 = vmatmul.f32.gmra.mxu0 %v2279
    %v2281 = vpop.f32.mrf.mxu0
    %v2282 = vadd.f32 %v2231, %v2281
    %2283 = vdwg.mxu0
    %v2284 = vand.u32 %v2002, 4294901760
    %v2285 = vsub.f32 %v2002, %v2284
    %v2286 = vand.u32 %v2285, 4294901760
    %2287 = vmatpush.msra.mxu0 %v2286
    %v2288 = vand.u32 %v2001, 4294901760
    %v2289 = vsub.f32 %v2001, %v2288
    %v2290 = vand.u32 %v2289, 4294901760
    %2291 = vmatpush.msra.mxu0 %v2290
    %v2292 = vand.u32 %v2000, 4294901760
    %v2293 = vsub.f32 %v2000, %v2292
    %v2294 = vand.u32 %v2293, 4294901760
    %2295 = vmatpush.msra.mxu0 %v2294
    %v2296 = vand.u32 %v1999, 4294901760
    %v2297 = vsub.f32 %v1999, %v2296
    %v2298 = vand.u32 %v2297, 4294901760
    %2299 = vmatpush.msra.mxu0 %v2298
    %v2300 = vand.u32 %v1998, 4294901760
    %v2301 = vsub.f32 %v1998, %v2300
    %v2302 = vand.u32 %v2301, 4294901760
    %2303 = vmatpush.msra.mxu0 %v2302
    %v2304 = vand.u32 %v1997, 4294901760
    %v2305 = vsub.f32 %v1997, %v2304
    %v2306 = vand.u32 %v2305, 4294901760
    %2307 = vmatpush.msra.mxu0 %v2306
    %v2308 = vand.u32 %v1996, 4294901760
    %v2309 = vsub.f32 %v1996, %v2308
    %v2310 = vand.u32 %v2309, 4294901760
    %2311 = vmatpush.msra.mxu0 %v2310
    %v2312 = vand.u32 %v1995, 4294901760
    %v2313 = vsub.f32 %v1995, %v2312
    %v2314 = vand.u32 %v2313, 4294901760
    %2315 = vmatpush.msra.mxu0 %v2314
    %v2316 = vand.u32 %v1994, 4294901760
    %v2317 = vsub.f32 %v1994, %v2316
    %v2318 = vand.u32 %v2317, 4294901760
    %2319 = vmatpush.msra.mxu0 %v2318
    %v2320 = vand.u32 %v1993, 4294901760
    %v2321 = vsub.f32 %v1993, %v2320
    %v2322 = vand.u32 %v2321, 4294901760
    %2323 = vmatpush.msra.mxu0 %v2322
    %v2324 = vand.u32 %v1992, 4294901760
    %v2325 = vsub.f32 %v1992, %v2324
    %v2326 = vand.u32 %v2325, 4294901760
    %2327 = vmatpush.msra.mxu0 %v2326
    %v2328 = vand.u32 %v1991, 4294901760
    %v2329 = vsub.f32 %v1991, %v2328
    %v2330 = vand.u32 %v2329, 4294901760
    %2331 = vmatpush.msra.mxu0 %v2330
    %v2332 = vand.u32 %v1990, 4294901760
    %v2333 = vsub.f32 %v1990, %v2332
    %v2334 = vand.u32 %v2333, 4294901760
    %2335 = vmatpush.msra.mxu0 %v2334
    %v2336 = vand.u32 %v1989, 4294901760
    %v2337 = vsub.f32 %v1989, %v2336
    %v2338 = vand.u32 %v2337, 4294901760
    %2339 = vmatpush.msra.mxu0 %v2338
    %v2340 = vand.u32 %v1988, 4294901760
    %v2341 = vsub.f32 %v1988, %v2340
    %v2342 = vand.u32 %v2341, 4294901760
    %2343 = vmatpush.msra.mxu0 %v2342
    %v2344 = vand.u32 %v1987, 4294901760
    %v2345 = vsub.f32 %v1987, %v2344
    %v2346 = vand.u32 %v2345, 4294901760
    %2347 = vmatpush.msra.mxu0 %v2346
    %v2348 = vand.u32 %v1541, 4294901760
    %2349 = vmatmul.f32.gmra.mxu0 %v2348
    %v2350 = vpop.f32.mrf.mxu0
    %v2351 = vadd.f32 %v2270, %v2350
    %v2352 = vand.u32 %v1543, 4294901760
    %2353 = vmatmul.f32.gmra.mxu0 %v2352
    %v2354 = vpop.f32.mrf.mxu0
    %v2355 = vadd.f32 %v2276, %v2354
    %v2356 = vand.u32 %v1548, 4294901760
    %2357 = vmatmul.f32.gmra.mxu0 %v2356
    %v2358 = vpop.f32.mrf.mxu0
    %v2359 = vadd.f32 %v2282, %v2358
    %2360 = vdwg.mxu0
    %v2361 = vand.u32 %v2002, 4294901760
    %2362 = vmatpush.msra.mxu0 %v2361
    %v2363 = vand.u32 %v2001, 4294901760
    %2364 = vmatpush.msra.mxu0 %v2363
    %v2365 = vand.u32 %v2000, 4294901760
    %2366 = vmatpush.msra.mxu0 %v2365
    %v2367 = vand.u32 %v1999, 4294901760
    %2368 = vmatpush.msra.mxu0 %v2367
    %v2369 = vand.u32 %v1998, 4294901760
    %2370 = vmatpush.msra.mxu0 %v2369
    %v2371 = vand.u32 %v1997, 4294901760
    %2372 = vmatpush.msra.mxu0 %v2371
    %v2373 = vand.u32 %v1996, 4294901760
    %2374 = vmatpush.msra.mxu0 %v2373
    %v2375 = vand.u32 %v1995, 4294901760
    %2376 = vmatpush.msra.mxu0 %v2375
    %v2377 = vand.u32 %v1994, 4294901760
    %2378 = vmatpush.msra.mxu0 %v2377
    %v2379 = vand.u32 %v1993, 4294901760
    %2380 = vmatpush.msra.mxu0 %v2379
    %v2381 = vand.u32 %v1992, 4294901760
    %2382 = vmatpush.msra.mxu0 %v2381
    %v2383 = vand.u32 %v1991, 4294901760
    %2384 = vmatpush.msra.mxu0 %v2383
    %v2385 = vand.u32 %v1990, 4294901760
    %2386 = vmatpush.msra.mxu0 %v2385
    %v2387 = vand.u32 %v1989, 4294901760
    %2388 = vmatpush.msra.mxu0 %v2387
    %v2389 = vand.u32 %v1988, 4294901760
    %2390 = vmatpush.msra.mxu0 %v2389
    %v2391 = vand.u32 %v1987, 4294901760
    %2392 = vmatpush.msra.mxu0 %v2391
    %v2393 = vand.u32 %v1541, 4294901760
    %2394 = vmatmul.f32.gmra.mxu0 %v2393
    %v2395 = vpop.f32.mrf.mxu0
    %v2396 = vadd.f32 %v2351, %v2395
    %v2397 = vand.u32 %v1543, 4294901760
    %2398 = vmatmul.f32.gmra.mxu0 %v2397
    %v2399 = vpop.f32.mrf.mxu0
    %v2400 = vadd.f32 %v2355, %v2399
    %v2401 = vand.u32 %v1548, 4294901760
    %2402 = vmatmul.f32.gmra.mxu0 %v2401
    %v2403 = vpop.f32.mrf.mxu0
    %v2404 = vadd.f32 %v2359, %v2403
    %2405 = vdwg.mxu0
    %v2406 = vand.u32 %v1565, 4294901760
    %2407 = vmatpush.msra.mxu0 %v2406
    %v2408 = vand.u32 %v1564, 4294901760
    %2409 = vmatpush.msra.mxu0 %v2408
    %v2410 = vand.u32 %v1563, 4294901760
    %2411 = vmatpush.msra.mxu0 %v2410
    %v2412 = vand.u32 %v1562, 4294901760
    %2413 = vmatpush.msra.mxu0 %v2412
    %v2414 = vand.u32 %v1561, 4294901760
    %2415 = vmatpush.msra.mxu0 %v2414
    %v2416 = vand.u32 %v1560, 4294901760
    %2417 = vmatpush.msra.mxu0 %v2416
    %v2418 = vand.u32 %v1559, 4294901760
    %2419 = vmatpush.msra.mxu0 %v2418
    %v2420 = vand.u32 %v1558, 4294901760
    %2421 = vmatpush.msra.mxu0 %v2420
    %v2422 = vand.u32 %v1557, 4294901760
    %2423 = vmatpush.msra.mxu0 %v2422
    %v2424 = vand.u32 %v1556, 4294901760
    %2425 = vmatpush.msra.mxu0 %v2424
    %v2426 = vand.u32 %v1555, 4294901760
    %2427 = vmatpush.msra.mxu0 %v2426
    %v2428 = vand.u32 %v1554, 4294901760
    %2429 = vmatpush.msra.mxu0 %v2428
    %v2430 = vand.u32 %v1553, 4294901760
    %2431 = vmatpush.msra.mxu0 %v2430
    %v2432 = vand.u32 %v1552, 4294901760
    %2433 = vmatpush.msra.mxu0 %v2432
    %v2434 = vand.u32 %v1551, 4294901760
    %2435 = vmatpush.msra.mxu0 %v2434
    %v2436 = vand.u32 %v1550, 4294901760
    %2437 = vmatpush.msra.mxu0 %v2436
    %v2438 = vand.u32 %v1538, 4294901760
    %v2439 = vsub.f32 %v1538, %v2438
    %v2440 = vand.u32 %v2439, 4294901760
    %v2441 = vsub.f32 %v2439, %v2440
    %v2442 = vand.u32 %v2441, 4294901760
    %2443 = vmatmul.f32.gmra.mxu0 %v2442
    %v2444 = vpop.f32.mrf.mxu0
    %v2445 = vadd.f32 %v1976, %v2444
    %v2446 = vand.u32 %v1533, 4294901760
    %v2447 = vsub.f32 %v1533, %v2446
    %v2448 = vand.u32 %v2447, 4294901760
    %v2449 = vsub.f32 %v2447, %v2448
    %v2450 = vand.u32 %v2449, 4294901760
    %2451 = vmatmul.f32.gmra.mxu0 %v2450
    %v2452 = vpop.f32.mrf.mxu0
    %v2453 = vadd.f32 %v1980, %v2452
    %v2454 = vand.u32 %v1534, 4294901760
    %v2455 = vsub.f32 %v1534, %v2454
    %v2456 = vand.u32 %v2455, 4294901760
    %v2457 = vsub.f32 %v2455, %v2456
    %v2458 = vand.u32 %v2457, 4294901760
    %2459 = vmatmul.f32.gmra.mxu0 %v2458
    %v2460 = vpop.f32.mrf.mxu0
    %v2461 = vadd.f32 %v1984, %v2460
    %2462 = vdwg.mxu0
    %v2463 = vand.u32 %v1565, 4294901760
    %v2464 = vsub.f32 %v1565, %v2463
    %v2465 = vand.u32 %v2464, 4294901760
    %v2466 = vsub.f32 %v2464, %v2465
    %v2467 = vand.u32 %v2466, 4294901760
    %2468 = vmatpush.msra.mxu0 %v2467
    %v2469 = vand.u32 %v1564, 4294901760
    %v2470 = vsub.f32 %v1564, %v2469
    %v2471 = vand.u32 %v2470, 4294901760
    %v2472 = vsub.f32 %v2470, %v2471
    %v2473 = vand.u32 %v2472, 4294901760
    %2474 = vmatpush.msra.mxu0 %v2473
    %v2475 = vand.u32 %v1563, 4294901760
    %v2476 = vsub.f32 %v1563, %v2475
    %v2477 = vand.u32 %v2476, 4294901760
    %v2478 = vsub.f32 %v2476, %v2477
    %v2479 = vand.u32 %v2478, 4294901760
    %2480 = vmatpush.msra.mxu0 %v2479
    %v2481 = vand.u32 %v1562, 4294901760
    %v2482 = vsub.f32 %v1562, %v2481
    %v2483 = vand.u32 %v2482, 4294901760
    %v2484 = vsub.f32 %v2482, %v2483
    %v2485 = vand.u32 %v2484, 4294901760
    %2486 = vmatpush.msra.mxu0 %v2485
    %v2487 = vand.u32 %v1561, 4294901760
    %v2488 = vsub.f32 %v1561, %v2487
    %v2489 = vand.u32 %v2488, 4294901760
    %v2490 = vsub.f32 %v2488, %v2489
    %v2491 = vand.u32 %v2490, 4294901760
    %2492 = vmatpush.msra.mxu0 %v2491
    %v2493 = vand.u32 %v1560, 4294901760
    %v2494 = vsub.f32 %v1560, %v2493
    %v2495 = vand.u32 %v2494, 4294901760
    %v2496 = vsub.f32 %v2494, %v2495
    %v2497 = vand.u32 %v2496, 4294901760
    %2498 = vmatpush.msra.mxu0 %v2497
    %v2499 = vand.u32 %v1559, 4294901760
    %v2500 = vsub.f32 %v1559, %v2499
    %v2501 = vand.u32 %v2500, 4294901760
    %v2502 = vsub.f32 %v2500, %v2501
    %v2503 = vand.u32 %v2502, 4294901760
    %2504 = vmatpush.msra.mxu0 %v2503
    %v2505 = vand.u32 %v1558, 4294901760
    %v2506 = vsub.f32 %v1558, %v2505
    %v2507 = vand.u32 %v2506, 4294901760
    %v2508 = vsub.f32 %v2506, %v2507
    %v2509 = vand.u32 %v2508, 4294901760
    %2510 = vmatpush.msra.mxu0 %v2509
    %v2511 = vand.u32 %v1557, 4294901760
    %v2512 = vsub.f32 %v1557, %v2511
    %v2513 = vand.u32 %v2512, 4294901760
    %v2514 = vsub.f32 %v2512, %v2513
    %v2515 = vand.u32 %v2514, 4294901760
    %2516 = vmatpush.msra.mxu0 %v2515
    %v2517 = vand.u32 %v1556, 4294901760
    %v2518 = vsub.f32 %v1556, %v2517
    %v2519 = vand.u32 %v2518, 4294901760
    %v2520 = vsub.f32 %v2518, %v2519
    %v2521 = vand.u32 %v2520, 4294901760
    %2522 = vmatpush.msra.mxu0 %v2521
    %v2523 = vand.u32 %v1555, 4294901760
    %v2524 = vsub.f32 %v1555, %v2523
    %v2525 = vand.u32 %v2524, 4294901760
    %v2526 = vsub.f32 %v2524, %v2525
    %v2527 = vand.u32 %v2526, 4294901760
    %2528 = vmatpush.msra.mxu0 %v2527
    %v2529 = vand.u32 %v1554, 4294901760
    %v2530 = vsub.f32 %v1554, %v2529
    %v2531 = vand.u32 %v2530, 4294901760
    %v2532 = vsub.f32 %v2530, %v2531
    %v2533 = vand.u32 %v2532, 4294901760
    %2534 = vmatpush.msra.mxu0 %v2533
    %v2535 = vand.u32 %v1553, 4294901760
    %v2536 = vsub.f32 %v1553, %v2535
    %v2537 = vand.u32 %v2536, 4294901760
    %v2538 = vsub.f32 %v2536, %v2537
    %v2539 = vand.u32 %v2538, 4294901760
    %2540 = vmatpush.msra.mxu0 %v2539
    %v2541 = vand.u32 %v1552, 4294901760
    %v2542 = vsub.f32 %v1552, %v2541
    %v2543 = vand.u32 %v2542, 4294901760
    %v2544 = vsub.f32 %v2542, %v2543
    %v2545 = vand.u32 %v2544, 4294901760
    %2546 = vmatpush.msra.mxu0 %v2545
    %v2547 = vand.u32 %v1551, 4294901760
    %v2548 = vsub.f32 %v1551, %v2547
    %v2549 = vand.u32 %v2548, 4294901760
    %v2550 = vsub.f32 %v2548, %v2549
    %v2551 = vand.u32 %v2550, 4294901760
    %2552 = vmatpush.msra.mxu0 %v2551
    %v2553 = vand.u32 %v1550, 4294901760
    %v2554 = vsub.f32 %v1550, %v2553
    %v2555 = vand.u32 %v2554, 4294901760
    %v2556 = vsub.f32 %v2554, %v2555
    %v2557 = vand.u32 %v2556, 4294901760
    %2558 = vmatpush.msra.mxu0 %v2557
    %v2559 = vand.u32 %v1538, 4294901760
    %2560 = vmatmul.f32.gmra.mxu0 %v2559
    %v2561 = vpop.f32.mrf.mxu0
    %v2562 = vadd.f32 %v2445, %v2561
    %v2563 = vand.u32 %v1533, 4294901760
    %2564 = vmatmul.f32.gmra.mxu0 %v2563
    %v2565 = vpop.f32.mrf.mxu0
    %v2566 = vadd.f32 %v2453, %v2565
    %v2567 = vand.u32 %v1534, 4294901760
    %2568 = vmatmul.f32.gmra.mxu0 %v2567
    %v2569 = vpop.f32.mrf.mxu0
    %v2570 = vadd.f32 %v2461, %v2569
    %2571 = vdwg.mxu0
    %v2572 = vand.u32 %v1565, 4294901760
    %v2573 = vsub.f32 %v1565, %v2572
    %2574 = vmatpush.msra.mxu0 %v2573
    %v2575 = vand.u32 %v1564, 4294901760
    %v2576 = vsub.f32 %v1564, %v2575
    %2577 = vmatpush.msra.mxu0 %v2576
    %v2578 = vand.u32 %v1563, 4294901760
    %v2579 = vsub.f32 %v1563, %v2578
    %2580 = vmatpush.msra.mxu0 %v2579
    %v2581 = vand.u32 %v1562, 4294901760
    %v2582 = vsub.f32 %v1562, %v2581
    %2583 = vmatpush.msra.mxu0 %v2582
    %v2584 = vand.u32 %v1561, 4294901760
    %v2585 = vsub.f32 %v1561, %v2584
    %2586 = vmatpush.msra.mxu0 %v2585
    %v2587 = vand.u32 %v1560, 4294901760
    %v2588 = vsub.f32 %v1560, %v2587
    %2589 = vmatpush.msra.mxu0 %v2588
    %v2590 = vand.u32 %v1559, 4294901760
    %v2591 = vsub.f32 %v1559, %v2590
    %2592 = vmatpush.msra.mxu0 %v2591
    %v2593 = vand.u32 %v1558, 4294901760
    %v2594 = vsub.f32 %v1558, %v2593
    %2595 = vmatpush.msra.mxu0 %v2594
    %v2596 = vand.u32 %v1557, 4294901760
    %v2597 = vsub.f32 %v1557, %v2596
    %2598 = vmatpush.msra.mxu0 %v2597
    %v2599 = vand.u32 %v1556, 4294901760
    %v2600 = vsub.f32 %v1556, %v2599
    %2601 = vmatpush.msra.mxu0 %v2600
    %v2602 = vand.u32 %v1555, 4294901760
    %v2603 = vsub.f32 %v1555, %v2602
    %2604 = vmatpush.msra.mxu0 %v2603
    %v2605 = vand.u32 %v1554, 4294901760
    %v2606 = vsub.f32 %v1554, %v2605
    %2607 = vmatpush.msra.mxu0 %v2606
    %v2608 = vand.u32 %v1553, 4294901760
    %v2609 = vsub.f32 %v1553, %v2608
    %2610 = vmatpush.msra.mxu0 %v2609
    %v2611 = vand.u32 %v1552, 4294901760
    %v2612 = vsub.f32 %v1552, %v2611
    %2613 = vmatpush.msra.mxu0 %v2612
    %v2614 = vand.u32 %v1551, 4294901760
    %v2615 = vsub.f32 %v1551, %v2614
    %2616 = vmatpush.msra.mxu0 %v2615
    %v2617 = vand.u32 %v1550, 4294901760
    %v2618 = vsub.f32 %v1550, %v2617
    %2619 = vmatpush.msra.mxu0 %v2618
    %v2620 = vand.u32 %v1538, 4294901760
    %v2621 = vsub.f32 %v1538, %v2620
    %2622 = vmatmul.f32.gmra.mxu0 %v2621
    %v2623 = vpop.f32.mrf.mxu0
    %v2624 = vadd.f32 %v2562, %v2623
    %v2625 = vand.u32 %v1533, 4294901760
    %v2626 = vsub.f32 %v1533, %v2625
    %2627 = vmatmul.f32.gmra.mxu0 %v2626
    %v2628 = vpop.f32.mrf.mxu0
    %v2629 = vadd.f32 %v2566, %v2628
    %v2630 = vand.u32 %v1534, 4294901760
    %v2631 = vsub.f32 %v1534, %v2630
    %2632 = vmatmul.f32.gmra.mxu0 %v2631
    %v2633 = vpop.f32.mrf.mxu0
    %v2634 = vadd.f32 %v2570, %v2633
    %2635 = vdwg.mxu0
    %v2636 = vand.u32 %v1565, 4294901760
    %2637 = vmatpush.msra.mxu0 %v2636
    %v2638 = vand.u32 %v1564, 4294901760
    %2639 = vmatpush.msra.mxu0 %v2638
    %v2640 = vand.u32 %v1563, 4294901760
    %2641 = vmatpush.msra.mxu0 %v2640
    %v2642 = vand.u32 %v1562, 4294901760
    %2643 = vmatpush.msra.mxu0 %v2642
    %v2644 = vand.u32 %v1561, 4294901760
    %2645 = vmatpush.msra.mxu0 %v2644
    %v2646 = vand.u32 %v1560, 4294901760
    %2647 = vmatpush.msra.mxu0 %v2646
    %v2648 = vand.u32 %v1559, 4294901760
    %2649 = vmatpush.msra.mxu0 %v2648
    %v2650 = vand.u32 %v1558, 4294901760
    %2651 = vmatpush.msra.mxu0 %v2650
    %v2652 = vand.u32 %v1557, 4294901760
    %2653 = vmatpush.msra.mxu0 %v2652
    %v2654 = vand.u32 %v1556, 4294901760
    %2655 = vmatpush.msra.mxu0 %v2654
    %v2656 = vand.u32 %v1555, 4294901760
    %2657 = vmatpush.msra.mxu0 %v2656
    %v2658 = vand.u32 %v1554, 4294901760
    %2659 = vmatpush.msra.mxu0 %v2658
    %v2660 = vand.u32 %v1553, 4294901760
    %2661 = vmatpush.msra.mxu0 %v2660
    %v2662 = vand.u32 %v1552, 4294901760
    %2663 = vmatpush.msra.mxu0 %v2662
    %v2664 = vand.u32 %v1551, 4294901760
    %2665 = vmatpush.msra.mxu0 %v2664
    %v2666 = vand.u32 %v1550, 4294901760
    %2667 = vmatpush.msra.mxu0 %v2666
    %v2668 = vand.u32 %v1538, 4294901760
    %v2669 = vsub.f32 %v1538, %v2668
    %v2670 = vand.u32 %v2669, 4294901760
    %2671 = vmatmul.f32.gmra.mxu0 %v2670
    %v2672 = vpop.f32.mrf.mxu0
    %v2673 = vadd.f32 %v2624, %v2672
    %v2674 = vand.u32 %v1533, 4294901760
    %v2675 = vsub.f32 %v1533, %v2674
    %v2676 = vand.u32 %v2675, 4294901760
    %2677 = vmatmul.f32.gmra.mxu0 %v2676
    %v2678 = vpop.f32.mrf.mxu0
    %v2679 = vadd.f32 %v2629, %v2678
    %v2680 = vand.u32 %v1534, 4294901760
    %v2681 = vsub.f32 %v1534, %v2680
    %v2682 = vand.u32 %v2681, 4294901760
    %2683 = vmatmul.f32.gmra.mxu0 %v2682
    %v2684 = vpop.f32.mrf.mxu0
    %v2685 = vadd.f32 %v2634, %v2684
    %2686 = vdwg.mxu0
    %v2687 = vand.u32 %v1565, 4294901760
    %v2688 = vsub.f32 %v1565, %v2687
    %v2689 = vand.u32 %v2688, 4294901760
    %2690 = vmatpush.msra.mxu0 %v2689
    %v2691 = vand.u32 %v1564, 4294901760
    %v2692 = vsub.f32 %v1564, %v2691
    %v2693 = vand.u32 %v2692, 4294901760
    %2694 = vmatpush.msra.mxu0 %v2693
    %v2695 = vand.u32 %v1563, 4294901760
    %v2696 = vsub.f32 %v1563, %v2695
    %v2697 = vand.u32 %v2696, 4294901760
    %2698 = vmatpush.msra.mxu0 %v2697
    %v2699 = vand.u32 %v1562, 4294901760
    %v2700 = vsub.f32 %v1562, %v2699
    %v2701 = vand.u32 %v2700, 4294901760
    %2702 = vmatpush.msra.mxu0 %v2701
    %v2703 = vand.u32 %v1561, 4294901760
    %v2704 = vsub.f32 %v1561, %v2703
    %v2705 = vand.u32 %v2704, 4294901760
    %2706 = vmatpush.msra.mxu0 %v2705
    %v2707 = vand.u32 %v1560, 4294901760
    %v2708 = vsub.f32 %v1560, %v2707
    %v2709 = vand.u32 %v2708, 4294901760
    %2710 = vmatpush.msra.mxu0 %v2709
    %v2711 = vand.u32 %v1559, 4294901760
    %v2712 = vsub.f32 %v1559, %v2711
    %v2713 = vand.u32 %v2712, 4294901760
    %2714 = vmatpush.msra.mxu0 %v2713
    %v2715 = vand.u32 %v1558, 4294901760
    %v2716 = vsub.f32 %v1558, %v2715
    %v2717 = vand.u32 %v2716, 4294901760
    %2718 = vmatpush.msra.mxu0 %v2717
    %v2719 = vand.u32 %v1557, 4294901760
    %v2720 = vsub.f32 %v1557, %v2719
    %v2721 = vand.u32 %v2720, 4294901760
    %2722 = vmatpush.msra.mxu0 %v2721
    %v2723 = vand.u32 %v1556, 4294901760
    %v2724 = vsub.f32 %v1556, %v2723
    %v2725 = vand.u32 %v2724, 4294901760
    %2726 = vmatpush.msra.mxu0 %v2725
    %v2727 = vand.u32 %v1555, 4294901760
    %v2728 = vsub.f32 %v1555, %v2727
    %v2729 = vand.u32 %v2728, 4294901760
    %2730 = vmatpush.msra.mxu0 %v2729
    %v2731 = vand.u32 %v1554, 4294901760
    %v2732 = vsub.f32 %v1554, %v2731
    %v2733 = vand.u32 %v2732, 4294901760
    %2734 = vmatpush.msra.mxu0 %v2733
    %v2735 = vand.u32 %v1553, 4294901760
    %v2736 = vsub.f32 %v1553, %v2735
    %v2737 = vand.u32 %v2736, 4294901760
    %2738 = vmatpush.msra.mxu0 %v2737
    %v2739 = vand.u32 %v1552, 4294901760
    %v2740 = vsub.f32 %v1552, %v2739
    %v2741 = vand.u32 %v2740, 4294901760
    %2742 = vmatpush.msra.mxu0 %v2741
    %v2743 = vand.u32 %v1551, 4294901760
    %v2744 = vsub.f32 %v1551, %v2743
    %v2745 = vand.u32 %v2744, 4294901760
    %2746 = vmatpush.msra.mxu0 %v2745
    %v2747 = vand.u32 %v1550, 4294901760
    %v2748 = vsub.f32 %v1550, %v2747
    %v2749 = vand.u32 %v2748, 4294901760
    %2750 = vmatpush.msra.mxu0 %v2749
    %v2751 = vand.u32 %v1538, 4294901760
    %2752 = vmatmul.f32.gmra.mxu0 %v2751
    %v2753 = vpop.f32.mrf.mxu0
    %v2754 = vadd.f32 %v2673, %v2753
    %v2755 = vand.u32 %v1533, 4294901760
    %2756 = vmatmul.f32.gmra.mxu0 %v2755
    %v2757 = vpop.f32.mrf.mxu0
    %v2758 = vadd.f32 %v2679, %v2757
    %v2759 = vand.u32 %v1534, 4294901760
    %2760 = vmatmul.f32.gmra.mxu0 %v2759
    %v2761 = vpop.f32.mrf.mxu0
    %v2762 = vadd.f32 %v2685, %v2761
    %2763 = vdwg.mxu0
    %v2764 = vand.u32 %v1565, 4294901760
    %2765 = vmatpush.msra.mxu0 %v2764
    %v2766 = vand.u32 %v1564, 4294901760
    %2767 = vmatpush.msra.mxu0 %v2766
    %v2768 = vand.u32 %v1563, 4294901760
    %2769 = vmatpush.msra.mxu0 %v2768
    %v2770 = vand.u32 %v1562, 4294901760
    %2771 = vmatpush.msra.mxu0 %v2770
    %v2772 = vand.u32 %v1561, 4294901760
    %2773 = vmatpush.msra.mxu0 %v2772
    %v2774 = vand.u32 %v1560, 4294901760
    %2775 = vmatpush.msra.mxu0 %v2774
    %v2776 = vand.u32 %v1559, 4294901760
    %2777 = vmatpush.msra.mxu0 %v2776
    %v2778 = vand.u32 %v1558, 4294901760
    %2779 = vmatpush.msra.mxu0 %v2778
    %v2780 = vand.u32 %v1557, 4294901760
    %2781 = vmatpush.msra.mxu0 %v2780
    %v2782 = vand.u32 %v1556, 4294901760
    %2783 = vmatpush.msra.mxu0 %v2782
    %v2784 = vand.u32 %v1555, 4294901760
    %2785 = vmatpush.msra.mxu0 %v2784
    %v2786 = vand.u32 %v1554, 4294901760
    %2787 = vmatpush.msra.mxu0 %v2786
    %v2788 = vand.u32 %v1553, 4294901760
    %2789 = vmatpush.msra.mxu0 %v2788
    %v2790 = vand.u32 %v1552, 4294901760
    %2791 = vmatpush.msra.mxu0 %v2790
    %v2792 = vand.u32 %v1551, 4294901760
    %2793 = vmatpush.msra.mxu0 %v2792
    %v2794 = vand.u32 %v1550, 4294901760
    %2795 = vmatpush.msra.mxu0 %v2794
    %v2796 = vand.u32 %v1538, 4294901760
    %2797 = vmatmul.f32.gmra.mxu0 %v2796
    %v2798 = vpop.f32.mrf.mxu0
    %v2799 = vadd.f32 %v2754, %v2798
    %v2800 = vand.u32 %v1533, 4294901760
    %2801 = vmatmul.f32.gmra.mxu0 %v2800
    %v2802 = vpop.f32.mrf.mxu0
    %v2803 = vadd.f32 %v2758, %v2802
    %v2804 = vand.u32 %v1534, 4294901760
    %2805 = vmatmul.f32.gmra.mxu0 %v2804
    %v2806 = vpop.f32.mrf.mxu0
    %v2807 = vadd.f32 %v2762, %v2806
    %2808 = vdwg.mxu0
    %v2809 = vadd.f32 %v2799, %v2396
    %v2810 = vadd.f32 %v2803, %v2400
    %v2811 = vadd.f32 %v2807, %v2404
    %v2812 = vmul.f32 %v2809, %v127
    %v2813 = vmul.f32 %v2810, %v128
    %v2814 = vmul.f32 %v2811, %v129
    %v2815 = vadd.f32 %v2812, %v2813
    %v2816 = vadd.f32 %v2815, %v2814
    %2817 = vadd.xlane.f32.xlu0 %v2816
    %v2818 = vpop.xlane.xlu0 %2817
    %v2819 = vrot.slane %v2818, 4
    %v2820 = vadd.f32 %v2818, %v2819
    %v2821 = vrot.slane %v2820, 2
    %v2822 = vadd.f32 %v2820, %v2821
    %v2823 = vrot.slane %v2822, 1
    %v2824 = vadd.f32 %v2822, %v2823
    %s2825 = vtos %v2824
    %v2826 = vmul.f32 %v2812, %v2809
    %v2827 = vmul.f32 %v2813, %v2810
    %v2828 = vmul.f32 %v2814, %v2811
    %v2829 = vadd.f32 %v2826, %v2827
    %v2830 = vadd.f32 %v2829, %v2828
    %2831 = vadd.xlane.f32.xlu0 %v2830
    %v2832 = vpop.xlane.xlu0 %2831
    %v2833 = vrot.slane %v2832, 4
    %v2834 = vadd.f32 %v2832, %v2833
    %v2835 = vrot.slane %v2834, 2
    %v2836 = vadd.f32 %v2834, %v2835
    %v2837 = vrot.slane %v2836, 1
    %v2838 = vadd.f32 %v2836, %v2837
    %s2839 = vtos %v2838
    %s2840 = smul.f32 %s2825, 0.0025
    %s2841 = smul.f32 %s2839, 0.0025
    %s2842 = smul.f32 %s2840, %s2840
    %s2843 = ssub.f32 %s2841, %s2842
    %s2844 = smax.f32 %s2843, 0.0
    %s2845 = sadd.f32 %s2844, 1e-05
    %v2846 = vstv %s2845
    %v2847 = vrsqrt.pop %v2846
    %v2848 = vmul.f32 %v2847, %v2846
    %v2849 = vmul.f32 %v2848, %v2847
    %v2850 = vmul.f32 0.5, %v2849
    %v2851 = vsub.f32 1.5, %v2850
    %v2852 = vmul.f32 %v2847, %v2851
    %vm2853 = vweird.f32 %v2846
    %vm2854 = vweird.f32 %v2847
    %vm2855 = vmor %vm2853, %vm2854
    %v2856 = vsel %vm2855, %v2847, %v2852
    %s2857 = vtos %v2856
    %s2858 = smul.f32 %s112, %s2857
    %s2859 = smul.f32 %s2840, %s2858
    %s2860 = ssub.f32 %s115, %s2859
    %v2861 = vstv %s2858
    %v2862 = vmul.f32 %v2809, %v2861
    %v2863 = vmul.f32 %v2810, %v2861
    %v2864 = vmul.f32 %v2811, %v2861
    %v2865 = vstv %s2860
    %v2866 = vadd.f32 %v2862, %v2865
    %v2867 = vadd.f32 %v2863, %v2865
    %v2868 = vadd.f32 %v2864, %v2865
    %v2869 = vmax.f32 %v2866, 0.0
    %v2870 = vmax.f32 %v2867, 0.0
    %v2871 = vmax.f32 %v2868, 0.0
    %v2872 = vmul.f32 %v2869, %v127
    %v2873 = vmul.f32 %v2870, %v128
    %v2874 = vmul.f32 %v2871, %v129
    %v2875 = vadd.f32 %v2872, %v173
    %v2876 = vadd.f32 %v2873, %v174
    %v2877 = vadd.f32 %v2874, %v175
    %v2879 = vrot.slane %v2877, 7
    %v2883 = vrot.slane %v2875, 7
    %v2884 = vrot.slane %v2876, 7
    %v2885 = vsel %vm181, %v2883, %v2884
    %v2886 = vsel %vm181, %v2884, %v2879
    %v2890 = vsel %vm181, %v2879, %v2883
    %v2891 = vrot.slane %v2875, 1
    %v2892 = vrot.slane %v2876, 1
    %v2893 = vsel %vm190, %v2891, %v2892
    %v2894 = vrot.slane %v2877, 1
    %v2895 = vsel %vm190, %v2892, %v2894
    %v2900 = vsel %vm190, %v2894, %v2891
    %s2901 = scalar_lea.vmem [#allocation9], 768
    %v2902 = vld [vmem:[%s2901] sm:$0xff]
    %v2903 = vld [vmem:[%s2901 + $0x8] sm:$0xff]
    %v2904 = vld [vmem:[%s2901 + $0x10] sm:$0xff]
    %v2905 = vld [vmem:[%s2901 + $0x18] sm:$0xff]
    %v2906 = vld [vmem:[%s2901 + $0x20] sm:$0xff]
    %v2907 = vld [vmem:[%s2901 + $0x28] sm:$0xff]
    %v2908 = vld [vmem:[%s2901 + $0x30] sm:$0xff]
    %v2909 = vld [vmem:[%s2901 + $0x38] sm:$0xff]
    %v2910 = vld [vmem:[%s2901 + $0x40] sm:$0xff]
    %v2911 = vld [vmem:[%s2901 + $0x48] sm:$0xff]
    %v2912 = vld [vmem:[%s2901 + $0x50] sm:$0xff]
    %v2913 = vld [vmem:[%s2901 + $0x58] sm:$0xff]
    %v2914 = vld [vmem:[%s2901 + $0x60] sm:$0xff]
    %v2915 = vld [vmem:[%s2901 + $0x68] sm:$0xff]
    %v2916 = vld [vmem:[%s2901 + $0x70] sm:$0xff]
    %v2917 = vld [vmem:[%s2901 + $0x78] sm:$0xff]
    %s2918 = scalar_lea.vmem [#allocation9], 896
    %v2919 = vld [vmem:[%s2918] sm:$0xff]
    %v2920 = vld [vmem:[%s2918 + $0x8] sm:$0xff]
    %v2921 = vld [vmem:[%s2918 + $0x10] sm:$0xff]
    %v2922 = vld [vmem:[%s2918 + $0x18] sm:$0xff]
    %v2923 = vld [vmem:[%s2918 + $0x20] sm:$0xff]
    %v2924 = vld [vmem:[%s2918 + $0x28] sm:$0xff]
    %v2925 = vld [vmem:[%s2918 + $0x30] sm:$0xff]
    %v2926 = vld [vmem:[%s2918 + $0x38] sm:$0xff]
    %v2927 = vld [vmem:[%s2918 + $0x40] sm:$0xff]
    %v2928 = vld [vmem:[%s2918 + $0x48] sm:$0xff]
    %v2929 = vld [vmem:[%s2918 + $0x50] sm:$0xff]
    %v2930 = vld [vmem:[%s2918 + $0x58] sm:$0xff]
    %v2931 = vld [vmem:[%s2918 + $0x60] sm:$0xff]
    %v2932 = vld [vmem:[%s2918 + $0x68] sm:$0xff]
    %v2933 = vld [vmem:[%s2918 + $0x70] sm:$0xff]
    %v2934 = vld [vmem:[%s2918 + $0x78] sm:$0xff]
    %v2935 = vand.u32 %v2934, 4294901760
    %2936 = vmatpush.msra.mxu0 %v2935
    %v2937 = vand.u32 %v2933, 4294901760
    %2938 = vmatpush.msra.mxu0 %v2937
    %v2939 = vand.u32 %v2932, 4294901760
    %2940 = vmatpush.msra.mxu0 %v2939
    %v2941 = vand.u32 %v2931, 4294901760
    %2942 = vmatpush.msra.mxu0 %v2941
    %v2943 = vand.u32 %v2930, 4294901760
    %2944 = vmatpush.msra.mxu0 %v2943
    %v2945 = vand.u32 %v2929, 4294901760
    %2946 = vmatpush.msra.mxu0 %v2945
    %v2947 = vand.u32 %v2928, 4294901760
    %2948 = vmatpush.msra.mxu0 %v2947
    %v2949 = vand.u32 %v2927, 4294901760
    %2950 = vmatpush.msra.mxu0 %v2949
    %v2951 = vand.u32 %v2926, 4294901760
    %2952 = vmatpush.msra.mxu0 %v2951
    %v2953 = vand.u32 %v2925, 4294901760
    %2954 = vmatpush.msra.mxu0 %v2953
    %v2955 = vand.u32 %v2924, 4294901760
    %2956 = vmatpush.msra.mxu0 %v2955
    %v2957 = vand.u32 %v2923, 4294901760
    %2958 = vmatpush.msra.mxu0 %v2957
    %v2959 = vand.u32 %v2922, 4294901760
    %2960 = vmatpush.msra.mxu0 %v2959
    %v2961 = vand.u32 %v2921, 4294901760
    %2962 = vmatpush.msra.mxu0 %v2961
    %v2963 = vand.u32 %v2920, 4294901760
    %2964 = vmatpush.msra.mxu0 %v2963
    %v2965 = vand.u32 %v2919, 4294901760
    %2966 = vmatpush.msra.mxu0 %v2965
    %v2967 = vand.u32 %v2875, 4294901760
    %v2968 = vsub.f32 %v2875, %v2967
    %v2969 = vand.u32 %v2968, 4294901760
    %v2970 = vsub.f32 %v2968, %v2969
    %v2971 = vand.u32 %v2970, 4294901760
    %2972 = vmatmul.f32.gmra.mxu0 %v2971
    %v2973 = vpop.f32.mrf.mxu0
    %v2974 = vadd.f32 0.0, %v2973
    %v2975 = vand.u32 %v2876, 4294901760
    %v2976 = vsub.f32 %v2876, %v2975
    %v2977 = vand.u32 %v2976, 4294901760
    %v2978 = vsub.f32 %v2976, %v2977
    %v2979 = vand.u32 %v2978, 4294901760
    %2980 = vmatmul.f32.gmra.mxu0 %v2979
    %v2981 = vpop.f32.mrf.mxu0
    %v2982 = vadd.f32 0.0, %v2981
    %v2983 = vand.u32 %v2877, 4294901760
    %v2984 = vsub.f32 %v2877, %v2983
    %v2985 = vand.u32 %v2984, 4294901760
    %v2986 = vsub.f32 %v2984, %v2985
    %v2987 = vand.u32 %v2986, 4294901760
    %2988 = vmatmul.f32.gmra.mxu0 %v2987
    %v2989 = vpop.f32.mrf.mxu0
    %v2990 = vadd.f32 0.0, %v2989
    %2991 = vdwg.mxu0
    %v2992 = vand.u32 %v2934, 4294901760
    %v2993 = vsub.f32 %v2934, %v2992
    %v2994 = vand.u32 %v2993, 4294901760
    %v2995 = vsub.f32 %v2993, %v2994
    %v2996 = vand.u32 %v2995, 4294901760
    %2997 = vmatpush.msra.mxu0 %v2996
    %v2998 = vand.u32 %v2933, 4294901760
    %v2999 = vsub.f32 %v2933, %v2998
    %v3000 = vand.u32 %v2999, 4294901760
    %v3001 = vsub.f32 %v2999, %v3000
    %v3002 = vand.u32 %v3001, 4294901760
    %3003 = vmatpush.msra.mxu0 %v3002
    %v3004 = vand.u32 %v2932, 4294901760
    %v3005 = vsub.f32 %v2932, %v3004
    %v3006 = vand.u32 %v3005, 4294901760
    %v3007 = vsub.f32 %v3005, %v3006
    %v3008 = vand.u32 %v3007, 4294901760
    %3009 = vmatpush.msra.mxu0 %v3008
    %v3010 = vand.u32 %v2931, 4294901760
    %v3011 = vsub.f32 %v2931, %v3010
    %v3012 = vand.u32 %v3011, 4294901760
    %v3013 = vsub.f32 %v3011, %v3012
    %v3014 = vand.u32 %v3013, 4294901760
    %3015 = vmatpush.msra.mxu0 %v3014
    %v3016 = vand.u32 %v2930, 4294901760
    %v3017 = vsub.f32 %v2930, %v3016
    %v3018 = vand.u32 %v3017, 4294901760
    %v3019 = vsub.f32 %v3017, %v3018
    %v3020 = vand.u32 %v3019, 4294901760
    %3021 = vmatpush.msra.mxu0 %v3020
    %v3022 = vand.u32 %v2929, 4294901760
    %v3023 = vsub.f32 %v2929, %v3022
    %v3024 = vand.u32 %v3023, 4294901760
    %v3025 = vsub.f32 %v3023, %v3024
    %v3026 = vand.u32 %v3025, 4294901760
    %3027 = vmatpush.msra.mxu0 %v3026
    %v3028 = vand.u32 %v2928, 4294901760
    %v3029 = vsub.f32 %v2928, %v3028
    %v3030 = vand.u32 %v3029, 4294901760
    %v3031 = vsub.f32 %v3029, %v3030
    %v3032 = vand.u32 %v3031, 4294901760
    %3033 = vmatpush.msra.mxu0 %v3032
    %v3034 = vand.u32 %v2927, 4294901760
    %v3035 = vsub.f32 %v2927, %v3034
    %v3036 = vand.u32 %v3035, 4294901760
    %v3037 = vsub.f32 %v3035, %v3036
    %v3038 = vand.u32 %v3037, 4294901760
    %3039 = vmatpush.msra.mxu0 %v3038
    %v3040 = vand.u32 %v2926, 4294901760
    %v3041 = vsub.f32 %v2926, %v3040
    %v3042 = vand.u32 %v3041, 4294901760
    %v3043 = vsub.f32 %v3041, %v3042
    %v3044 = vand.u32 %v3043, 4294901760
    %3045 = vmatpush.msra.mxu0 %v3044
    %v3046 = vand.u32 %v2925, 4294901760
    %v3047 = vsub.f32 %v2925, %v3046
    %v3048 = vand.u32 %v3047, 4294901760
    %v3049 = vsub.f32 %v3047, %v3048
    %v3050 = vand.u32 %v3049, 4294901760
    %3051 = vmatpush.msra.mxu0 %v3050
    %v3052 = vand.u32 %v2924, 4294901760
    %v3053 = vsub.f32 %v2924, %v3052
    %v3054 = vand.u32 %v3053, 4294901760
    %v3055 = vsub.f32 %v3053, %v3054
    %v3056 = vand.u32 %v3055, 4294901760
    %3057 = vmatpush.msra.mxu0 %v3056
    %v3058 = vand.u32 %v2923, 4294901760
    %v3059 = vsub.f32 %v2923, %v3058
    %v3060 = vand.u32 %v3059, 4294901760
    %v3061 = vsub.f32 %v3059, %v3060
    %v3062 = vand.u32 %v3061, 4294901760
    %3063 = vmatpush.msra.mxu0 %v3062
    %v3064 = vand.u32 %v2922, 4294901760
    %v3065 = vsub.f32 %v2922, %v3064
    %v3066 = vand.u32 %v3065, 4294901760
    %v3067 = vsub.f32 %v3065, %v3066
    %v3068 = vand.u32 %v3067, 4294901760
    %3069 = vmatpush.msra.mxu0 %v3068
    %v3070 = vand.u32 %v2921, 4294901760
    %v3071 = vsub.f32 %v2921, %v3070
    %v3072 = vand.u32 %v3071, 4294901760
    %v3073 = vsub.f32 %v3071, %v3072
    %v3074 = vand.u32 %v3073, 4294901760
    %3075 = vmatpush.msra.mxu0 %v3074
    %v3076 = vand.u32 %v2920, 4294901760
    %v3077 = vsub.f32 %v2920, %v3076
    %v3078 = vand.u32 %v3077, 4294901760
    %v3079 = vsub.f32 %v3077, %v3078
    %v3080 = vand.u32 %v3079, 4294901760
    %3081 = vmatpush.msra.mxu0 %v3080
    %v3082 = vand.u32 %v2919, 4294901760
    %v3083 = vsub.f32 %v2919, %v3082
    %v3084 = vand.u32 %v3083, 4294901760
    %v3085 = vsub.f32 %v3083, %v3084
    %v3086 = vand.u32 %v3085, 4294901760
    %3087 = vmatpush.msra.mxu0 %v3086
    %v3088 = vand.u32 %v2875, 4294901760
    %3089 = vmatmul.f32.gmra.mxu0 %v3088
    %v3090 = vpop.f32.mrf.mxu0
    %v3091 = vadd.f32 %v2974, %v3090
    %v3092 = vand.u32 %v2876, 4294901760
    %3093 = vmatmul.f32.gmra.mxu0 %v3092
    %v3094 = vpop.f32.mrf.mxu0
    %v3095 = vadd.f32 %v2982, %v3094
    %v3096 = vand.u32 %v2877, 4294901760
    %3097 = vmatmul.f32.gmra.mxu0 %v3096
    %v3098 = vpop.f32.mrf.mxu0
    %v3099 = vadd.f32 %v2990, %v3098
    %3100 = vdwg.mxu0
    %v3101 = vand.u32 %v2934, 4294901760
    %v3102 = vsub.f32 %v2934, %v3101
    %3103 = vmatpush.msra.mxu0 %v3102
    %v3104 = vand.u32 %v2933, 4294901760
    %v3105 = vsub.f32 %v2933, %v3104
    %3106 = vmatpush.msra.mxu0 %v3105
    %v3107 = vand.u32 %v2932, 4294901760
    %v3108 = vsub.f32 %v2932, %v3107
    %3109 = vmatpush.msra.mxu0 %v3108
    %v3110 = vand.u32 %v2931, 4294901760
    %v3111 = vsub.f32 %v2931, %v3110
    %3112 = vmatpush.msra.mxu0 %v3111
    %v3113 = vand.u32 %v2930, 4294901760
    %v3114 = vsub.f32 %v2930, %v3113
    %3115 = vmatpush.msra.mxu0 %v3114
    %v3116 = vand.u32 %v2929, 4294901760
    %v3117 = vsub.f32 %v2929, %v3116
    %3118 = vmatpush.msra.mxu0 %v3117
    %v3119 = vand.u32 %v2928, 4294901760
    %v3120 = vsub.f32 %v2928, %v3119
    %3121 = vmatpush.msra.mxu0 %v3120
    %v3122 = vand.u32 %v2927, 4294901760
    %v3123 = vsub.f32 %v2927, %v3122
    %3124 = vmatpush.msra.mxu0 %v3123
    %v3125 = vand.u32 %v2926, 4294901760
    %v3126 = vsub.f32 %v2926, %v3125
    %3127 = vmatpush.msra.mxu0 %v3126
    %v3128 = vand.u32 %v2925, 4294901760
    %v3129 = vsub.f32 %v2925, %v3128
    %3130 = vmatpush.msra.mxu0 %v3129
    %v3131 = vand.u32 %v2924, 4294901760
    %v3132 = vsub.f32 %v2924, %v3131
    %3133 = vmatpush.msra.mxu0 %v3132
    %v3134 = vand.u32 %v2923, 4294901760
    %v3135 = vsub.f32 %v2923, %v3134
    %3136 = vmatpush.msra.mxu0 %v3135
    %v3137 = vand.u32 %v2922, 4294901760
    %v3138 = vsub.f32 %v2922, %v3137
    %3139 = vmatpush.msra.mxu0 %v3138
    %v3140 = vand.u32 %v2921, 4294901760
    %v3141 = vsub.f32 %v2921, %v3140
    %3142 = vmatpush.msra.mxu0 %v3141
    %v3143 = vand.u32 %v2920, 4294901760
    %v3144 = vsub.f32 %v2920, %v3143
    %3145 = vmatpush.msra.mxu0 %v3144
    %v3146 = vand.u32 %v2919, 4294901760
    %v3147 = vsub.f32 %v2919, %v3146
    %3148 = vmatpush.msra.mxu0 %v3147
    %v3149 = vand.u32 %v2875, 4294901760
    %v3150 = vsub.f32 %v2875, %v3149
    %3151 = vmatmul.f32.gmra.mxu0 %v3150
    %v3152 = vpop.f32.mrf.mxu0
    %v3153 = vadd.f32 %v3091, %v3152
    %v3154 = vand.u32 %v2876, 4294901760
    %v3155 = vsub.f32 %v2876, %v3154
    %3156 = vmatmul.f32.gmra.mxu0 %v3155
    %v3157 = vpop.f32.mrf.mxu0
    %v3158 = vadd.f32 %v3095, %v3157
    %v3159 = vand.u32 %v2877, 4294901760
    %v3160 = vsub.f32 %v2877, %v3159
    %3161 = vmatmul.f32.gmra.mxu0 %v3160
    %v3162 = vpop.f32.mrf.mxu0
    %v3163 = vadd.f32 %v3099, %v3162
    %3164 = vdwg.mxu0
    %v3165 = vand.u32 %v2934, 4294901760
    %3166 = vmatpush.msra.mxu0 %v3165
    %v3167 = vand.u32 %v2933, 4294901760
    %3168 = vmatpush.msra.mxu0 %v3167
    %v3169 = vand.u32 %v2932, 4294901760
    %3170 = vmatpush.msra.mxu0 %v3169
    %v3171 = vand.u32 %v2931, 4294901760
    %3172 = vmatpush.msra.mxu0 %v3171
    %v3173 = vand.u32 %v2930, 4294901760
    %3174 = vmatpush.msra.mxu0 %v3173
    %v3175 = vand.u32 %v2929, 4294901760
    %3176 = vmatpush.msra.mxu0 %v3175
    %v3177 = vand.u32 %v2928, 4294901760
    %3178 = vmatpush.msra.mxu0 %v3177
    %v3179 = vand.u32 %v2927, 4294901760
    %3180 = vmatpush.msra.mxu0 %v3179
    %v3181 = vand.u32 %v2926, 4294901760
    %3182 = vmatpush.msra.mxu0 %v3181
    %v3183 = vand.u32 %v2925, 4294901760
    %3184 = vmatpush.msra.mxu0 %v3183
    %v3185 = vand.u32 %v2924, 4294901760
    %3186 = vmatpush.msra.mxu0 %v3185
    %v3187 = vand.u32 %v2923, 4294901760
    %3188 = vmatpush.msra.mxu0 %v3187
    %v3189 = vand.u32 %v2922, 4294901760
    %3190 = vmatpush.msra.mxu0 %v3189
    %v3191 = vand.u32 %v2921, 4294901760
    %3192 = vmatpush.msra.mxu0 %v3191
    %v3193 = vand.u32 %v2920, 4294901760
    %3194 = vmatpush.msra.mxu0 %v3193
    %v3195 = vand.u32 %v2919, 4294901760
    %3196 = vmatpush.msra.mxu0 %v3195
    %v3197 = vand.u32 %v2875, 4294901760
    %v3198 = vsub.f32 %v2875, %v3197
    %v3199 = vand.u32 %v3198, 4294901760
    %3200 = vmatmul.f32.gmra.mxu0 %v3199
    %v3201 = vpop.f32.mrf.mxu0
    %v3202 = vadd.f32 %v3153, %v3201
    %v3203 = vand.u32 %v2876, 4294901760
    %v3204 = vsub.f32 %v2876, %v3203
    %v3205 = vand.u32 %v3204, 4294901760
    %3206 = vmatmul.f32.gmra.mxu0 %v3205
    %v3207 = vpop.f32.mrf.mxu0
    %v3208 = vadd.f32 %v3158, %v3207
    %v3209 = vand.u32 %v2877, 4294901760
    %v3210 = vsub.f32 %v2877, %v3209
    %v3211 = vand.u32 %v3210, 4294901760
    %3212 = vmatmul.f32.gmra.mxu0 %v3211
    %v3213 = vpop.f32.mrf.mxu0
    %v3214 = vadd.f32 %v3163, %v3213
    %3215 = vdwg.mxu0
    %v3216 = vand.u32 %v2934, 4294901760
    %v3217 = vsub.f32 %v2934, %v3216
    %v3218 = vand.u32 %v3217, 4294901760
    %3219 = vmatpush.msra.mxu0 %v3218
    %v3220 = vand.u32 %v2933, 4294901760
    %v3221 = vsub.f32 %v2933, %v3220
    %v3222 = vand.u32 %v3221, 4294901760
    %3223 = vmatpush.msra.mxu0 %v3222
    %v3224 = vand.u32 %v2932, 4294901760
    %v3225 = vsub.f32 %v2932, %v3224
    %v3226 = vand.u32 %v3225, 4294901760
    %3227 = vmatpush.msra.mxu0 %v3226
    %v3228 = vand.u32 %v2931, 4294901760
    %v3229 = vsub.f32 %v2931, %v3228
    %v3230 = vand.u32 %v3229, 4294901760
    %3231 = vmatpush.msra.mxu0 %v3230
    %v3232 = vand.u32 %v2930, 4294901760
    %v3233 = vsub.f32 %v2930, %v3232
    %v3234 = vand.u32 %v3233, 4294901760
    %3235 = vmatpush.msra.mxu0 %v3234
    %v3236 = vand.u32 %v2929, 4294901760
    %v3237 = vsub.f32 %v2929, %v3236
    %v3238 = vand.u32 %v3237, 4294901760
    %3239 = vmatpush.msra.mxu0 %v3238
    %v3240 = vand.u32 %v2928, 4294901760
    %v3241 = vsub.f32 %v2928, %v3240
    %v3242 = vand.u32 %v3241, 4294901760
    %3243 = vmatpush.msra.mxu0 %v3242
    %v3244 = vand.u32 %v2927, 4294901760
    %v3245 = vsub.f32 %v2927, %v3244
    %v3246 = vand.u32 %v3245, 4294901760
    %3247 = vmatpush.msra.mxu0 %v3246
    %v3248 = vand.u32 %v2926, 4294901760
    %v3249 = vsub.f32 %v2926, %v3248
    %v3250 = vand.u32 %v3249, 4294901760
    %3251 = vmatpush.msra.mxu0 %v3250
    %v3252 = vand.u32 %v2925, 4294901760
    %v3253 = vsub.f32 %v2925, %v3252
    %v3254 = vand.u32 %v3253, 4294901760
    %3255 = vmatpush.msra.mxu0 %v3254
    %v3256 = vand.u32 %v2924, 4294901760
    %v3257 = vsub.f32 %v2924, %v3256
    %v3258 = vand.u32 %v3257, 4294901760
    %3259 = vmatpush.msra.mxu0 %v3258
    %v3260 = vand.u32 %v2923, 4294901760
    %v3261 = vsub.f32 %v2923, %v3260
    %v3262 = vand.u32 %v3261, 4294901760
    %3263 = vmatpush.msra.mxu0 %v3262
    %v3264 = vand.u32 %v2922, 4294901760
    %v3265 = vsub.f32 %v2922, %v3264
    %v3266 = vand.u32 %v3265, 4294901760
    %3267 = vmatpush.msra.mxu0 %v3266
    %v3268 = vand.u32 %v2921, 4294901760
    %v3269 = vsub.f32 %v2921, %v3268
    %v3270 = vand.u32 %v3269, 4294901760
    %3271 = vmatpush.msra.mxu0 %v3270
    %v3272 = vand.u32 %v2920, 4294901760
    %v3273 = vsub.f32 %v2920, %v3272
    %v3274 = vand.u32 %v3273, 4294901760
    %3275 = vmatpush.msra.mxu0 %v3274
    %v3276 = vand.u32 %v2919, 4294901760
    %v3277 = vsub.f32 %v2919, %v3276
    %v3278 = vand.u32 %v3277, 4294901760
    %3279 = vmatpush.msra.mxu0 %v3278
    %v3280 = vand.u32 %v2875, 4294901760
    %3281 = vmatmul.f32.gmra.mxu0 %v3280
    %v3282 = vpop.f32.mrf.mxu0
    %v3283 = vadd.f32 %v3202, %v3282
    %v3284 = vand.u32 %v2876, 4294901760
    %3285 = vmatmul.f32.gmra.mxu0 %v3284
    %v3286 = vpop.f32.mrf.mxu0
    %v3287 = vadd.f32 %v3208, %v3286
    %v3288 = vand.u32 %v2877, 4294901760
    %3289 = vmatmul.f32.gmra.mxu0 %v3288
    %v3290 = vpop.f32.mrf.mxu0
    %v3291 = vadd.f32 %v3214, %v3290
    %3292 = vdwg.mxu0
    %v3293 = vand.u32 %v2934, 4294901760
    %3294 = vmatpush.msra.mxu0 %v3293
    %v3295 = vand.u32 %v2933, 4294901760
    %3296 = vmatpush.msra.mxu0 %v3295
    %v3297 = vand.u32 %v2932, 4294901760
    %3298 = vmatpush.msra.mxu0 %v3297
    %v3299 = vand.u32 %v2931, 4294901760
    %3300 = vmatpush.msra.mxu0 %v3299
    %v3301 = vand.u32 %v2930, 4294901760
    %3302 = vmatpush.msra.mxu0 %v3301
    %v3303 = vand.u32 %v2929, 4294901760
    %3304 = vmatpush.msra.mxu0 %v3303
    %v3305 = vand.u32 %v2928, 4294901760
    %3306 = vmatpush.msra.mxu0 %v3305
    %v3307 = vand.u32 %v2927, 4294901760
    %3308 = vmatpush.msra.mxu0 %v3307
    %v3309 = vand.u32 %v2926, 4294901760
    %3310 = vmatpush.msra.mxu0 %v3309
    %v3311 = vand.u32 %v2925, 4294901760
    %3312 = vmatpush.msra.mxu0 %v3311
    %v3313 = vand.u32 %v2924, 4294901760
    %3314 = vmatpush.msra.mxu0 %v3313
    %v3315 = vand.u32 %v2923, 4294901760
    %3316 = vmatpush.msra.mxu0 %v3315
    %v3317 = vand.u32 %v2922, 4294901760
    %3318 = vmatpush.msra.mxu0 %v3317
    %v3319 = vand.u32 %v2921, 4294901760
    %3320 = vmatpush.msra.mxu0 %v3319
    %v3321 = vand.u32 %v2920, 4294901760
    %3322 = vmatpush.msra.mxu0 %v3321
    %v3323 = vand.u32 %v2919, 4294901760
    %3324 = vmatpush.msra.mxu0 %v3323
    %v3325 = vand.u32 %v2875, 4294901760
    %3326 = vmatmul.f32.gmra.mxu0 %v3325
    %v3327 = vpop.f32.mrf.mxu0
    %v3328 = vadd.f32 %v3283, %v3327
    %v3329 = vand.u32 %v2876, 4294901760
    %3330 = vmatmul.f32.gmra.mxu0 %v3329
    %v3331 = vpop.f32.mrf.mxu0
    %v3332 = vadd.f32 %v3287, %v3331
    %v3333 = vand.u32 %v2877, 4294901760
    %3334 = vmatmul.f32.gmra.mxu0 %v3333
    %v3335 = vpop.f32.mrf.mxu0
    %v3336 = vadd.f32 %v3291, %v3335
    %3337 = vdwg.mxu0
    %s3338 = scalar_lea.vmem [#allocation9], 1024
    %v3339 = vld [vmem:[%s3338] sm:$0xff]
    %v3340 = vld [vmem:[%s3338 + $0x8] sm:$0xff]
    %v3341 = vld [vmem:[%s3338 + $0x10] sm:$0xff]
    %v3342 = vld [vmem:[%s3338 + $0x18] sm:$0xff]
    %v3343 = vld [vmem:[%s3338 + $0x20] sm:$0xff]
    %v3344 = vld [vmem:[%s3338 + $0x28] sm:$0xff]
    %v3345 = vld [vmem:[%s3338 + $0x30] sm:$0xff]
    %v3346 = vld [vmem:[%s3338 + $0x38] sm:$0xff]
    %v3347 = vld [vmem:[%s3338 + $0x40] sm:$0xff]
    %v3348 = vld [vmem:[%s3338 + $0x48] sm:$0xff]
    %v3349 = vld [vmem:[%s3338 + $0x50] sm:$0xff]
    %v3350 = vld [vmem:[%s3338 + $0x58] sm:$0xff]
    %v3351 = vld [vmem:[%s3338 + $0x60] sm:$0xff]
    %v3352 = vld [vmem:[%s3338 + $0x68] sm:$0xff]
    %v3353 = vld [vmem:[%s3338 + $0x70] sm:$0xff]
    %v3354 = vld [vmem:[%s3338 + $0x78] sm:$0xff]
    %v3355 = vand.u32 %v3354, 4294901760
    %3356 = vmatpush.msra.mxu0 %v3355
    %v3357 = vand.u32 %v3353, 4294901760
    %3358 = vmatpush.msra.mxu0 %v3357
    %v3359 = vand.u32 %v3352, 4294901760
    %3360 = vmatpush.msra.mxu0 %v3359
    %v3361 = vand.u32 %v3351, 4294901760
    %3362 = vmatpush.msra.mxu0 %v3361
    %v3363 = vand.u32 %v3350, 4294901760
    %3364 = vmatpush.msra.mxu0 %v3363
    %v3365 = vand.u32 %v3349, 4294901760
    %3366 = vmatpush.msra.mxu0 %v3365
    %v3367 = vand.u32 %v3348, 4294901760
    %3368 = vmatpush.msra.mxu0 %v3367
    %v3369 = vand.u32 %v3347, 4294901760
    %3370 = vmatpush.msra.mxu0 %v3369
    %v3371 = vand.u32 %v3346, 4294901760
    %3372 = vmatpush.msra.mxu0 %v3371
    %v3373 = vand.u32 %v3345, 4294901760
    %3374 = vmatpush.msra.mxu0 %v3373
    %v3375 = vand.u32 %v3344, 4294901760
    %3376 = vmatpush.msra.mxu0 %v3375
    %v3377 = vand.u32 %v3343, 4294901760
    %3378 = vmatpush.msra.mxu0 %v3377
    %v3379 = vand.u32 %v3342, 4294901760
    %3380 = vmatpush.msra.mxu0 %v3379
    %v3381 = vand.u32 %v3341, 4294901760
    %3382 = vmatpush.msra.mxu0 %v3381
    %v3383 = vand.u32 %v3340, 4294901760
    %3384 = vmatpush.msra.mxu0 %v3383
    %v3385 = vand.u32 %v3339, 4294901760
    %3386 = vmatpush.msra.mxu0 %v3385
    %v3387 = vand.u32 %v2893, 4294901760
    %v3388 = vsub.f32 %v2893, %v3387
    %v3389 = vand.u32 %v3388, 4294901760
    %v3390 = vsub.f32 %v3388, %v3389
    %v3391 = vand.u32 %v3390, 4294901760
    %3392 = vmatmul.f32.gmra.mxu0 %v3391
    %v3393 = vpop.f32.mrf.mxu0
    %v3394 = vadd.f32 0.0, %v3393
    %v3395 = vand.u32 %v2895, 4294901760
    %v3396 = vsub.f32 %v2895, %v3395
    %v3397 = vand.u32 %v3396, 4294901760
    %v3398 = vsub.f32 %v3396, %v3397
    %v3399 = vand.u32 %v3398, 4294901760
    %3400 = vmatmul.f32.gmra.mxu0 %v3399
    %v3401 = vpop.f32.mrf.mxu0
    %v3402 = vadd.f32 0.0, %v3401
    %v3403 = vand.u32 %v2900, 4294901760
    %v3404 = vsub.f32 %v2900, %v3403
    %v3405 = vand.u32 %v3404, 4294901760
    %v3406 = vsub.f32 %v3404, %v3405
    %v3407 = vand.u32 %v3406, 4294901760
    %3408 = vmatmul.f32.gmra.mxu0 %v3407
    %v3409 = vpop.f32.mrf.mxu0
    %v3410 = vadd.f32 0.0, %v3409
    %3411 = vdwg.mxu0
    %v3412 = vand.u32 %v3354, 4294901760
    %v3413 = vsub.f32 %v3354, %v3412
    %v3414 = vand.u32 %v3413, 4294901760
    %v3415 = vsub.f32 %v3413, %v3414
    %v3416 = vand.u32 %v3415, 4294901760
    %3417 = vmatpush.msra.mxu0 %v3416
    %v3418 = vand.u32 %v3353, 4294901760
    %v3419 = vsub.f32 %v3353, %v3418
    %v3420 = vand.u32 %v3419, 4294901760
    %v3421 = vsub.f32 %v3419, %v3420
    %v3422 = vand.u32 %v3421, 4294901760
    %3423 = vmatpush.msra.mxu0 %v3422
    %v3424 = vand.u32 %v3352, 4294901760
    %v3425 = vsub.f32 %v3352, %v3424
    %v3426 = vand.u32 %v3425, 4294901760
    %v3427 = vsub.f32 %v3425, %v3426
    %v3428 = vand.u32 %v3427, 4294901760
    %3429 = vmatpush.msra.mxu0 %v3428
    %v3430 = vand.u32 %v3351, 4294901760
    %v3431 = vsub.f32 %v3351, %v3430
    %v3432 = vand.u32 %v3431, 4294901760
    %v3433 = vsub.f32 %v3431, %v3432
    %v3434 = vand.u32 %v3433, 4294901760
    %3435 = vmatpush.msra.mxu0 %v3434
    %v3436 = vand.u32 %v3350, 4294901760
    %v3437 = vsub.f32 %v3350, %v3436
    %v3438 = vand.u32 %v3437, 4294901760
    %v3439 = vsub.f32 %v3437, %v3438
    %v3440 = vand.u32 %v3439, 4294901760
    %3441 = vmatpush.msra.mxu0 %v3440
    %v3442 = vand.u32 %v3349, 4294901760
    %v3443 = vsub.f32 %v3349, %v3442
    %v3444 = vand.u32 %v3443, 4294901760
    %v3445 = vsub.f32 %v3443, %v3444
    %v3446 = vand.u32 %v3445, 4294901760
    %3447 = vmatpush.msra.mxu0 %v3446
    %v3448 = vand.u32 %v3348, 4294901760
    %v3449 = vsub.f32 %v3348, %v3448
    %v3450 = vand.u32 %v3449, 4294901760
    %v3451 = vsub.f32 %v3449, %v3450
    %v3452 = vand.u32 %v3451, 4294901760
    %3453 = vmatpush.msra.mxu0 %v3452
    %v3454 = vand.u32 %v3347, 4294901760
    %v3455 = vsub.f32 %v3347, %v3454
    %v3456 = vand.u32 %v3455, 4294901760
    %v3457 = vsub.f32 %v3455, %v3456
    %v3458 = vand.u32 %v3457, 4294901760
    %3459 = vmatpush.msra.mxu0 %v3458
    %v3460 = vand.u32 %v3346, 4294901760
    %v3461 = vsub.f32 %v3346, %v3460
    %v3462 = vand.u32 %v3461, 4294901760
    %v3463 = vsub.f32 %v3461, %v3462
    %v3464 = vand.u32 %v3463, 4294901760
    %3465 = vmatpush.msra.mxu0 %v3464
    %v3466 = vand.u32 %v3345, 4294901760
    %v3467 = vsub.f32 %v3345, %v3466
    %v3468 = vand.u32 %v3467, 4294901760
    %v3469 = vsub.f32 %v3467, %v3468
    %v3470 = vand.u32 %v3469, 4294901760
    %3471 = vmatpush.msra.mxu0 %v3470
    %v3472 = vand.u32 %v3344, 4294901760
    %v3473 = vsub.f32 %v3344, %v3472
    %v3474 = vand.u32 %v3473, 4294901760
    %v3475 = vsub.f32 %v3473, %v3474
    %v3476 = vand.u32 %v3475, 4294901760
    %3477 = vmatpush.msra.mxu0 %v3476
    %v3478 = vand.u32 %v3343, 4294901760
    %v3479 = vsub.f32 %v3343, %v3478
    %v3480 = vand.u32 %v3479, 4294901760
    %v3481 = vsub.f32 %v3479, %v3480
    %v3482 = vand.u32 %v3481, 4294901760
    %3483 = vmatpush.msra.mxu0 %v3482
    %v3484 = vand.u32 %v3342, 4294901760
    %v3485 = vsub.f32 %v3342, %v3484
    %v3486 = vand.u32 %v3485, 4294901760
    %v3487 = vsub.f32 %v3485, %v3486
    %v3488 = vand.u32 %v3487, 4294901760
    %3489 = vmatpush.msra.mxu0 %v3488
    %v3490 = vand.u32 %v3341, 4294901760
    %v3491 = vsub.f32 %v3341, %v3490
    %v3492 = vand.u32 %v3491, 4294901760
    %v3493 = vsub.f32 %v3491, %v3492
    %v3494 = vand.u32 %v3493, 4294901760
    %3495 = vmatpush.msra.mxu0 %v3494
    %v3496 = vand.u32 %v3340, 4294901760
    %v3497 = vsub.f32 %v3340, %v3496
    %v3498 = vand.u32 %v3497, 4294901760
    %v3499 = vsub.f32 %v3497, %v3498
    %v3500 = vand.u32 %v3499, 4294901760
    %3501 = vmatpush.msra.mxu0 %v3500
    %v3502 = vand.u32 %v3339, 4294901760
    %v3503 = vsub.f32 %v3339, %v3502
    %v3504 = vand.u32 %v3503, 4294901760
    %v3505 = vsub.f32 %v3503, %v3504
    %v3506 = vand.u32 %v3505, 4294901760
    %3507 = vmatpush.msra.mxu0 %v3506
    %v3508 = vand.u32 %v2893, 4294901760
    %3509 = vmatmul.f32.gmra.mxu0 %v3508
    %v3510 = vpop.f32.mrf.mxu0
    %v3511 = vadd.f32 %v3394, %v3510
    %v3512 = vand.u32 %v2895, 4294901760
    %3513 = vmatmul.f32.gmra.mxu0 %v3512
    %v3514 = vpop.f32.mrf.mxu0
    %v3515 = vadd.f32 %v3402, %v3514
    %v3516 = vand.u32 %v2900, 4294901760
    %3517 = vmatmul.f32.gmra.mxu0 %v3516
    %v3518 = vpop.f32.mrf.mxu0
    %v3519 = vadd.f32 %v3410, %v3518
    %3520 = vdwg.mxu0
    %v3521 = vand.u32 %v3354, 4294901760
    %v3522 = vsub.f32 %v3354, %v3521
    %3523 = vmatpush.msra.mxu0 %v3522
    %v3524 = vand.u32 %v3353, 4294901760
    %v3525 = vsub.f32 %v3353, %v3524
    %3526 = vmatpush.msra.mxu0 %v3525
    %v3527 = vand.u32 %v3352, 4294901760
    %v3528 = vsub.f32 %v3352, %v3527
    %3529 = vmatpush.msra.mxu0 %v3528
    %v3530 = vand.u32 %v3351, 4294901760
    %v3531 = vsub.f32 %v3351, %v3530
    %3532 = vmatpush.msra.mxu0 %v3531
    %v3533 = vand.u32 %v3350, 4294901760
    %v3534 = vsub.f32 %v3350, %v3533
    %3535 = vmatpush.msra.mxu0 %v3534
    %v3536 = vand.u32 %v3349, 4294901760
    %v3537 = vsub.f32 %v3349, %v3536
    %3538 = vmatpush.msra.mxu0 %v3537
    %v3539 = vand.u32 %v3348, 4294901760
    %v3540 = vsub.f32 %v3348, %v3539
    %3541 = vmatpush.msra.mxu0 %v3540
    %v3542 = vand.u32 %v3347, 4294901760
    %v3543 = vsub.f32 %v3347, %v3542
    %3544 = vmatpush.msra.mxu0 %v3543
    %v3545 = vand.u32 %v3346, 4294901760
    %v3546 = vsub.f32 %v3346, %v3545
    %3547 = vmatpush.msra.mxu0 %v3546
    %v3548 = vand.u32 %v3345, 4294901760
    %v3549 = vsub.f32 %v3345, %v3548
    %3550 = vmatpush.msra.mxu0 %v3549
    %v3551 = vand.u32 %v3344, 4294901760
    %v3552 = vsub.f32 %v3344, %v3551
    %3553 = vmatpush.msra.mxu0 %v3552
    %v3554 = vand.u32 %v3343, 4294901760
    %v3555 = vsub.f32 %v3343, %v3554
    %3556 = vmatpush.msra.mxu0 %v3555
    %v3557 = vand.u32 %v3342, 4294901760
    %v3558 = vsub.f32 %v3342, %v3557
    %3559 = vmatpush.msra.mxu0 %v3558
    %v3560 = vand.u32 %v3341, 4294901760
    %v3561 = vsub.f32 %v3341, %v3560
    %3562 = vmatpush.msra.mxu0 %v3561
    %v3563 = vand.u32 %v3340, 4294901760
    %v3564 = vsub.f32 %v3340, %v3563
    %3565 = vmatpush.msra.mxu0 %v3564
    %v3566 = vand.u32 %v3339, 4294901760
    %v3567 = vsub.f32 %v3339, %v3566
    %3568 = vmatpush.msra.mxu0 %v3567
    %v3569 = vand.u32 %v2893, 4294901760
    %v3570 = vsub.f32 %v2893, %v3569
    %3571 = vmatmul.f32.gmra.mxu0 %v3570
    %v3572 = vpop.f32.mrf.mxu0
    %v3573 = vadd.f32 %v3511, %v3572
    %v3574 = vand.u32 %v2895, 4294901760
    %v3575 = vsub.f32 %v2895, %v3574
    %3576 = vmatmul.f32.gmra.mxu0 %v3575
    %v3577 = vpop.f32.mrf.mxu0
    %v3578 = vadd.f32 %v3515, %v3577
    %v3579 = vand.u32 %v2900, 4294901760
    %v3580 = vsub.f32 %v2900, %v3579
    %3581 = vmatmul.f32.gmra.mxu0 %v3580
    %v3582 = vpop.f32.mrf.mxu0
    %v3583 = vadd.f32 %v3519, %v3582
    %3584 = vdwg.mxu0
    %v3585 = vand.u32 %v3354, 4294901760
    %3586 = vmatpush.msra.mxu0 %v3585
    %v3587 = vand.u32 %v3353, 4294901760
    %3588 = vmatpush.msra.mxu0 %v3587
    %v3589 = vand.u32 %v3352, 4294901760
    %3590 = vmatpush.msra.mxu0 %v3589
    %v3591 = vand.u32 %v3351, 4294901760
    %3592 = vmatpush.msra.mxu0 %v3591
    %v3593 = vand.u32 %v3350, 4294901760
    %3594 = vmatpush.msra.mxu0 %v3593
    %v3595 = vand.u32 %v3349, 4294901760
    %3596 = vmatpush.msra.mxu0 %v3595
    %v3597 = vand.u32 %v3348, 4294901760
    %3598 = vmatpush.msra.mxu0 %v3597
    %v3599 = vand.u32 %v3347, 4294901760
    %3600 = vmatpush.msra.mxu0 %v3599
    %v3601 = vand.u32 %v3346, 4294901760
    %3602 = vmatpush.msra.mxu0 %v3601
    %v3603 = vand.u32 %v3345, 4294901760
    %3604 = vmatpush.msra.mxu0 %v3603
    %v3605 = vand.u32 %v3344, 4294901760
    %3606 = vmatpush.msra.mxu0 %v3605
    %v3607 = vand.u32 %v3343, 4294901760
    %3608 = vmatpush.msra.mxu0 %v3607
    %v3609 = vand.u32 %v3342, 4294901760
    %3610 = vmatpush.msra.mxu0 %v3609
    %v3611 = vand.u32 %v3341, 4294901760
    %3612 = vmatpush.msra.mxu0 %v3611
    %v3613 = vand.u32 %v3340, 4294901760
    %3614 = vmatpush.msra.mxu0 %v3613
    %v3615 = vand.u32 %v3339, 4294901760
    %3616 = vmatpush.msra.mxu0 %v3615
    %v3617 = vand.u32 %v2893, 4294901760
    %v3618 = vsub.f32 %v2893, %v3617
    %v3619 = vand.u32 %v3618, 4294901760
    %3620 = vmatmul.f32.gmra.mxu0 %v3619
    %v3621 = vpop.f32.mrf.mxu0
    %v3622 = vadd.f32 %v3573, %v3621
    %v3623 = vand.u32 %v2895, 4294901760
    %v3624 = vsub.f32 %v2895, %v3623
    %v3625 = vand.u32 %v3624, 4294901760
    %3626 = vmatmul.f32.gmra.mxu0 %v3625
    %v3627 = vpop.f32.mrf.mxu0
    %v3628 = vadd.f32 %v3578, %v3627
    %v3629 = vand.u32 %v2900, 4294901760
    %v3630 = vsub.f32 %v2900, %v3629
    %v3631 = vand.u32 %v3630, 4294901760
    %3632 = vmatmul.f32.gmra.mxu0 %v3631
    %v3633 = vpop.f32.mrf.mxu0
    %v3634 = vadd.f32 %v3583, %v3633
    %3635 = vdwg.mxu0
    %v3636 = vand.u32 %v3354, 4294901760
    %v3637 = vsub.f32 %v3354, %v3636
    %v3638 = vand.u32 %v3637, 4294901760
    %3639 = vmatpush.msra.mxu0 %v3638
    %v3640 = vand.u32 %v3353, 4294901760
    %v3641 = vsub.f32 %v3353, %v3640
    %v3642 = vand.u32 %v3641, 4294901760
    %3643 = vmatpush.msra.mxu0 %v3642
    %v3644 = vand.u32 %v3352, 4294901760
    %v3645 = vsub.f32 %v3352, %v3644
    %v3646 = vand.u32 %v3645, 4294901760
    %3647 = vmatpush.msra.mxu0 %v3646
    %v3648 = vand.u32 %v3351, 4294901760
    %v3649 = vsub.f32 %v3351, %v3648
    %v3650 = vand.u32 %v3649, 4294901760
    %3651 = vmatpush.msra.mxu0 %v3650
    %v3652 = vand.u32 %v3350, 4294901760
    %v3653 = vsub.f32 %v3350, %v3652
    %v3654 = vand.u32 %v3653, 4294901760
    %3655 = vmatpush.msra.mxu0 %v3654
    %v3656 = vand.u32 %v3349, 4294901760
    %v3657 = vsub.f32 %v3349, %v3656
    %v3658 = vand.u32 %v3657, 4294901760
    %3659 = vmatpush.msra.mxu0 %v3658
    %v3660 = vand.u32 %v3348, 4294901760
    %v3661 = vsub.f32 %v3348, %v3660
    %v3662 = vand.u32 %v3661, 4294901760
    %3663 = vmatpush.msra.mxu0 %v3662
    %v3664 = vand.u32 %v3347, 4294901760
    %v3665 = vsub.f32 %v3347, %v3664
    %v3666 = vand.u32 %v3665, 4294901760
    %3667 = vmatpush.msra.mxu0 %v3666
    %v3668 = vand.u32 %v3346, 4294901760
    %v3669 = vsub.f32 %v3346, %v3668
    %v3670 = vand.u32 %v3669, 4294901760
    %3671 = vmatpush.msra.mxu0 %v3670
    %v3672 = vand.u32 %v3345, 4294901760
    %v3673 = vsub.f32 %v3345, %v3672
    %v3674 = vand.u32 %v3673, 4294901760
    %3675 = vmatpush.msra.mxu0 %v3674
    %v3676 = vand.u32 %v3344, 4294901760
    %v3677 = vsub.f32 %v3344, %v3676
    %v3678 = vand.u32 %v3677, 4294901760
    %3679 = vmatpush.msra.mxu0 %v3678
    %v3680 = vand.u32 %v3343, 4294901760
    %v3681 = vsub.f32 %v3343, %v3680
    %v3682 = vand.u32 %v3681, 4294901760
    %3683 = vmatpush.msra.mxu0 %v3682
    %v3684 = vand.u32 %v3342, 4294901760
    %v3685 = vsub.f32 %v3342, %v3684
    %v3686 = vand.u32 %v3685, 4294901760
    %3687 = vmatpush.msra.mxu0 %v3686
    %v3688 = vand.u32 %v3341, 4294901760
    %v3689 = vsub.f32 %v3341, %v3688
    %v3690 = vand.u32 %v3689, 4294901760
    %3691 = vmatpush.msra.mxu0 %v3690
    %v3692 = vand.u32 %v3340, 4294901760
    %v3693 = vsub.f32 %v3340, %v3692
    %v3694 = vand.u32 %v3693, 4294901760
    %3695 = vmatpush.msra.mxu0 %v3694
    %v3696 = vand.u32 %v3339, 4294901760
    %v3697 = vsub.f32 %v3339, %v3696
    %v3698 = vand.u32 %v3697, 4294901760
    %3699 = vmatpush.msra.mxu0 %v3698
    %v3700 = vand.u32 %v2893, 4294901760
    %3701 = vmatmul.f32.gmra.mxu0 %v3700
    %v3702 = vpop.f32.mrf.mxu0
    %v3703 = vadd.f32 %v3622, %v3702
    %v3704 = vand.u32 %v2895, 4294901760
    %3705 = vmatmul.f32.gmra.mxu0 %v3704
    %v3706 = vpop.f32.mrf.mxu0
    %v3707 = vadd.f32 %v3628, %v3706
    %v3708 = vand.u32 %v2900, 4294901760
    %3709 = vmatmul.f32.gmra.mxu0 %v3708
    %v3710 = vpop.f32.mrf.mxu0
    %v3711 = vadd.f32 %v3634, %v3710
    %3712 = vdwg.mxu0
    %v3713 = vand.u32 %v3354, 4294901760
    %3714 = vmatpush.msra.mxu0 %v3713
    %v3715 = vand.u32 %v3353, 4294901760
    %3716 = vmatpush.msra.mxu0 %v3715
    %v3717 = vand.u32 %v3352, 4294901760
    %3718 = vmatpush.msra.mxu0 %v3717
    %v3719 = vand.u32 %v3351, 4294901760
    %3720 = vmatpush.msra.mxu0 %v3719
    %v3721 = vand.u32 %v3350, 4294901760
    %3722 = vmatpush.msra.mxu0 %v3721
    %v3723 = vand.u32 %v3349, 4294901760
    %3724 = vmatpush.msra.mxu0 %v3723
    %v3725 = vand.u32 %v3348, 4294901760
    %3726 = vmatpush.msra.mxu0 %v3725
    %v3727 = vand.u32 %v3347, 4294901760
    %3728 = vmatpush.msra.mxu0 %v3727
    %v3729 = vand.u32 %v3346, 4294901760
    %3730 = vmatpush.msra.mxu0 %v3729
    %v3731 = vand.u32 %v3345, 4294901760
    %3732 = vmatpush.msra.mxu0 %v3731
    %v3733 = vand.u32 %v3344, 4294901760
    %3734 = vmatpush.msra.mxu0 %v3733
    %v3735 = vand.u32 %v3343, 4294901760
    %3736 = vmatpush.msra.mxu0 %v3735
    %v3737 = vand.u32 %v3342, 4294901760
    %3738 = vmatpush.msra.mxu0 %v3737
    %v3739 = vand.u32 %v3341, 4294901760
    %3740 = vmatpush.msra.mxu0 %v3739
    %v3741 = vand.u32 %v3340, 4294901760
    %3742 = vmatpush.msra.mxu0 %v3741
    %v3743 = vand.u32 %v3339, 4294901760
    %3744 = vmatpush.msra.mxu0 %v3743
    %v3745 = vand.u32 %v2893, 4294901760
    %3746 = vmatmul.f32.gmra.mxu0 %v3745
    %v3747 = vpop.f32.mrf.mxu0
    %v3748 = vadd.f32 %v3703, %v3747
    %v3749 = vand.u32 %v2895, 4294901760
    %3750 = vmatmul.f32.gmra.mxu0 %v3749
    %v3751 = vpop.f32.mrf.mxu0
    %v3752 = vadd.f32 %v3707, %v3751
    %v3753 = vand.u32 %v2900, 4294901760
    %3754 = vmatmul.f32.gmra.mxu0 %v3753
    %v3755 = vpop.f32.mrf.mxu0
    %v3756 = vadd.f32 %v3711, %v3755
    %3757 = vdwg.mxu0
    %v3758 = vand.u32 %v2917, 4294901760
    %3759 = vmatpush.msra.mxu0 %v3758
    %v3760 = vand.u32 %v2916, 4294901760
    %3761 = vmatpush.msra.mxu0 %v3760
    %v3762 = vand.u32 %v2915, 4294901760
    %3763 = vmatpush.msra.mxu0 %v3762
    %v3764 = vand.u32 %v2914, 4294901760
    %3765 = vmatpush.msra.mxu0 %v3764
    %v3766 = vand.u32 %v2913, 4294901760
    %3767 = vmatpush.msra.mxu0 %v3766
    %v3768 = vand.u32 %v2912, 4294901760
    %3769 = vmatpush.msra.mxu0 %v3768
    %v3770 = vand.u32 %v2911, 4294901760
    %3771 = vmatpush.msra.mxu0 %v3770
    %v3772 = vand.u32 %v2910, 4294901760
    %3773 = vmatpush.msra.mxu0 %v3772
    %v3774 = vand.u32 %v2909, 4294901760
    %3775 = vmatpush.msra.mxu0 %v3774
    %v3776 = vand.u32 %v2908, 4294901760
    %3777 = vmatpush.msra.mxu0 %v3776
    %v3778 = vand.u32 %v2907, 4294901760
    %3779 = vmatpush.msra.mxu0 %v3778
    %v3780 = vand.u32 %v2906, 4294901760
    %3781 = vmatpush.msra.mxu0 %v3780
    %v3782 = vand.u32 %v2905, 4294901760
    %3783 = vmatpush.msra.mxu0 %v3782
    %v3784 = vand.u32 %v2904, 4294901760
    %3785 = vmatpush.msra.mxu0 %v3784
    %v3786 = vand.u32 %v2903, 4294901760
    %3787 = vmatpush.msra.mxu0 %v3786
    %v3788 = vand.u32 %v2902, 4294901760
    %3789 = vmatpush.msra.mxu0 %v3788
    %v3790 = vand.u32 %v2890, 4294901760
    %v3791 = vsub.f32 %v2890, %v3790
    %v3792 = vand.u32 %v3791, 4294901760
    %v3793 = vsub.f32 %v3791, %v3792
    %v3794 = vand.u32 %v3793, 4294901760
    %3795 = vmatmul.f32.gmra.mxu0 %v3794
    %v3796 = vpop.f32.mrf.mxu0
    %v3797 = vadd.f32 %v3328, %v3796
    %v3798 = vand.u32 %v2885, 4294901760
    %v3799 = vsub.f32 %v2885, %v3798
    %v3800 = vand.u32 %v3799, 4294901760
    %v3801 = vsub.f32 %v3799, %v3800
    %v3802 = vand.u32 %v3801, 4294901760
    %3803 = vmatmul.f32.gmra.mxu0 %v3802
    %v3804 = vpop.f32.mrf.mxu0
    %v3805 = vadd.f32 %v3332, %v3804
    %v3806 = vand.u32 %v2886, 4294901760
    %v3807 = vsub.f32 %v2886, %v3806
    %v3808 = vand.u32 %v3807, 4294901760
    %v3809 = vsub.f32 %v3807, %v3808
    %v3810 = vand.u32 %v3809, 4294901760
    %3811 = vmatmul.f32.gmra.mxu0 %v3810
    %v3812 = vpop.f32.mrf.mxu0
    %v3813 = vadd.f32 %v3336, %v3812
    %3814 = vdwg.mxu0
    %v3815 = vand.u32 %v2917, 4294901760
    %v3816 = vsub.f32 %v2917, %v3815
    %v3817 = vand.u32 %v3816, 4294901760
    %v3818 = vsub.f32 %v3816, %v3817
    %v3819 = vand.u32 %v3818, 4294901760
    %3820 = vmatpush.msra.mxu0 %v3819
    %v3821 = vand.u32 %v2916, 4294901760
    %v3822 = vsub.f32 %v2916, %v3821
    %v3823 = vand.u32 %v3822, 4294901760
    %v3824 = vsub.f32 %v3822, %v3823
    %v3825 = vand.u32 %v3824, 4294901760
    %3826 = vmatpush.msra.mxu0 %v3825
    %v3827 = vand.u32 %v2915, 4294901760
    %v3828 = vsub.f32 %v2915, %v3827
    %v3829 = vand.u32 %v3828, 4294901760
    %v3830 = vsub.f32 %v3828, %v3829
    %v3831 = vand.u32 %v3830, 4294901760
    %3832 = vmatpush.msra.mxu0 %v3831
    %v3833 = vand.u32 %v2914, 4294901760
    %v3834 = vsub.f32 %v2914, %v3833
    %v3835 = vand.u32 %v3834, 4294901760
    %v3836 = vsub.f32 %v3834, %v3835
    %v3837 = vand.u32 %v3836, 4294901760
    %3838 = vmatpush.msra.mxu0 %v3837
    %v3839 = vand.u32 %v2913, 4294901760
    %v3840 = vsub.f32 %v2913, %v3839
    %v3841 = vand.u32 %v3840, 4294901760
    %v3842 = vsub.f32 %v3840, %v3841
    %v3843 = vand.u32 %v3842, 4294901760
    %3844 = vmatpush.msra.mxu0 %v3843
    %v3845 = vand.u32 %v2912, 4294901760
    %v3846 = vsub.f32 %v2912, %v3845
    %v3847 = vand.u32 %v3846, 4294901760
    %v3848 = vsub.f32 %v3846, %v3847
    %v3849 = vand.u32 %v3848, 4294901760
    %3850 = vmatpush.msra.mxu0 %v3849
    %v3851 = vand.u32 %v2911, 4294901760
    %v3852 = vsub.f32 %v2911, %v3851
    %v3853 = vand.u32 %v3852, 4294901760
    %v3854 = vsub.f32 %v3852, %v3853
    %v3855 = vand.u32 %v3854, 4294901760
    %3856 = vmatpush.msra.mxu0 %v3855
    %v3857 = vand.u32 %v2910, 4294901760
    %v3858 = vsub.f32 %v2910, %v3857
    %v3859 = vand.u32 %v3858, 4294901760
    %v3860 = vsub.f32 %v3858, %v3859
    %v3861 = vand.u32 %v3860, 4294901760
    %3862 = vmatpush.msra.mxu0 %v3861
    %v3863 = vand.u32 %v2909, 4294901760
    %v3864 = vsub.f32 %v2909, %v3863
    %v3865 = vand.u32 %v3864, 4294901760
    %v3866 = vsub.f32 %v3864, %v3865
    %v3867 = vand.u32 %v3866, 4294901760
    %3868 = vmatpush.msra.mxu0 %v3867
    %v3869 = vand.u32 %v2908, 4294901760
    %v3870 = vsub.f32 %v2908, %v3869
    %v3871 = vand.u32 %v3870, 4294901760
    %v3872 = vsub.f32 %v3870, %v3871
    %v3873 = vand.u32 %v3872, 4294901760
    %3874 = vmatpush.msra.mxu0 %v3873
    %v3875 = vand.u32 %v2907, 4294901760
    %v3876 = vsub.f32 %v2907, %v3875
    %v3877 = vand.u32 %v3876, 4294901760
    %v3878 = vsub.f32 %v3876, %v3877
    %v3879 = vand.u32 %v3878, 4294901760
    %3880 = vmatpush.msra.mxu0 %v3879
    %v3881 = vand.u32 %v2906, 4294901760
    %v3882 = vsub.f32 %v2906, %v3881
    %v3883 = vand.u32 %v3882, 4294901760
    %v3884 = vsub.f32 %v3882, %v3883
    %v3885 = vand.u32 %v3884, 4294901760
    %3886 = vmatpush.msra.mxu0 %v3885
    %v3887 = vand.u32 %v2905, 4294901760
    %v3888 = vsub.f32 %v2905, %v3887
    %v3889 = vand.u32 %v3888, 4294901760
    %v3890 = vsub.f32 %v3888, %v3889
    %v3891 = vand.u32 %v3890, 4294901760
    %3892 = vmatpush.msra.mxu0 %v3891
    %v3893 = vand.u32 %v2904, 4294901760
    %v3894 = vsub.f32 %v2904, %v3893
    %v3895 = vand.u32 %v3894, 4294901760
    %v3896 = vsub.f32 %v3894, %v3895
    %v3897 = vand.u32 %v3896, 4294901760
    %3898 = vmatpush.msra.mxu0 %v3897
    %v3899 = vand.u32 %v2903, 4294901760
    %v3900 = vsub.f32 %v2903, %v3899
    %v3901 = vand.u32 %v3900, 4294901760
    %v3902 = vsub.f32 %v3900, %v3901
    %v3903 = vand.u32 %v3902, 4294901760
    %3904 = vmatpush.msra.mxu0 %v3903
    %v3905 = vand.u32 %v2902, 4294901760
    %v3906 = vsub.f32 %v2902, %v3905
    %v3907 = vand.u32 %v3906, 4294901760
    %v3908 = vsub.f32 %v3906, %v3907
    %v3909 = vand.u32 %v3908, 4294901760
    %3910 = vmatpush.msra.mxu0 %v3909
    %v3911 = vand.u32 %v2890, 4294901760
    %3912 = vmatmul.f32.gmra.mxu0 %v3911
    %v3913 = vpop.f32.mrf.mxu0
    %v3914 = vadd.f32 %v3797, %v3913
    %v3915 = vand.u32 %v2885, 4294901760
    %3916 = vmatmul.f32.gmra.mxu0 %v3915
    %v3917 = vpop.f32.mrf.mxu0
    %v3918 = vadd.f32 %v3805, %v3917
    %v3919 = vand.u32 %v2886, 4294901760
    %3920 = vmatmul.f32.gmra.mxu0 %v3919
    %v3921 = vpop.f32.mrf.mxu0
    %v3922 = vadd.f32 %v3813, %v3921
    %3923 = vdwg.mxu0
    %v3924 = vand.u32 %v2917, 4294901760
    %v3925 = vsub.f32 %v2917, %v3924
    %3926 = vmatpush.msra.mxu0 %v3925
    %v3927 = vand.u32 %v2916, 4294901760
    %v3928 = vsub.f32 %v2916, %v3927
    %3929 = vmatpush.msra.mxu0 %v3928
    %v3930 = vand.u32 %v2915, 4294901760
    %v3931 = vsub.f32 %v2915, %v3930
    %3932 = vmatpush.msra.mxu0 %v3931
    %v3933 = vand.u32 %v2914, 4294901760
    %v3934 = vsub.f32 %v2914, %v3933
    %3935 = vmatpush.msra.mxu0 %v3934
    %v3936 = vand.u32 %v2913, 4294901760
    %v3937 = vsub.f32 %v2913, %v3936
    %3938 = vmatpush.msra.mxu0 %v3937
    %v3939 = vand.u32 %v2912, 4294901760
    %v3940 = vsub.f32 %v2912, %v3939
    %3941 = vmatpush.msra.mxu0 %v3940
    %v3942 = vand.u32 %v2911, 4294901760
    %v3943 = vsub.f32 %v2911, %v3942
    %3944 = vmatpush.msra.mxu0 %v3943
    %v3945 = vand.u32 %v2910, 4294901760
    %v3946 = vsub.f32 %v2910, %v3945
    %3947 = vmatpush.msra.mxu0 %v3946
    %v3948 = vand.u32 %v2909, 4294901760
    %v3949 = vsub.f32 %v2909, %v3948
    %3950 = vmatpush.msra.mxu0 %v3949
    %v3951 = vand.u32 %v2908, 4294901760
    %v3952 = vsub.f32 %v2908, %v3951
    %3953 = vmatpush.msra.mxu0 %v3952
    %v3954 = vand.u32 %v2907, 4294901760
    %v3955 = vsub.f32 %v2907, %v3954
    %3956 = vmatpush.msra.mxu0 %v3955
    %v3957 = vand.u32 %v2906, 4294901760
    %v3958 = vsub.f32 %v2906, %v3957
    %3959 = vmatpush.msra.mxu0 %v3958
    %v3960 = vand.u32 %v2905, 4294901760
    %v3961 = vsub.f32 %v2905, %v3960
    %3962 = vmatpush.msra.mxu0 %v3961
    %v3963 = vand.u32 %v2904, 4294901760
    %v3964 = vsub.f32 %v2904, %v3963
    %3965 = vmatpush.msra.mxu0 %v3964
    %v3966 = vand.u32 %v2903, 4294901760
    %v3967 = vsub.f32 %v2903, %v3966
    %3968 = vmatpush.msra.mxu0 %v3967
    %v3969 = vand.u32 %v2902, 4294901760
    %v3970 = vsub.f32 %v2902, %v3969
    %3971 = vmatpush.msra.mxu0 %v3970
    %v3972 = vand.u32 %v2890, 4294901760
    %v3973 = vsub.f32 %v2890, %v3972
    %3974 = vmatmul.f32.gmra.mxu0 %v3973
    %v3975 = vpop.f32.mrf.mxu0
    %v3976 = vadd.f32 %v3914, %v3975
    %v3977 = vand.u32 %v2885, 4294901760
    %v3978 = vsub.f32 %v2885, %v3977
    %3979 = vmatmul.f32.gmra.mxu0 %v3978
    %v3980 = vpop.f32.mrf.mxu0
    %v3981 = vadd.f32 %v3918, %v3980
    %v3982 = vand.u32 %v2886, 4294901760
    %v3983 = vsub.f32 %v2886, %v3982
    %3984 = vmatmul.f32.gmra.mxu0 %v3983
    %v3985 = vpop.f32.mrf.mxu0
    %v3986 = vadd.f32 %v3922, %v3985
    %3987 = vdwg.mxu0
    %v3988 = vand.u32 %v2917, 4294901760
    %3989 = vmatpush.msra.mxu0 %v3988
    %v3990 = vand.u32 %v2916, 4294901760
    %3991 = vmatpush.msra.mxu0 %v3990
    %v3992 = vand.u32 %v2915, 4294901760
    %3993 = vmatpush.msra.mxu0 %v3992
    %v3994 = vand.u32 %v2914, 4294901760
    %3995 = vmatpush.msra.mxu0 %v3994
    %v3996 = vand.u32 %v2913, 4294901760
    %3997 = vmatpush.msra.mxu0 %v3996
    %v3998 = vand.u32 %v2912, 4294901760
    %3999 = vmatpush.msra.mxu0 %v3998
    %v4000 = vand.u32 %v2911, 4294901760
    %4001 = vmatpush.msra.mxu0 %v4000
    %v4002 = vand.u32 %v2910, 4294901760
    %4003 = vmatpush.msra.mxu0 %v4002
    %v4004 = vand.u32 %v2909, 4294901760
    %4005 = vmatpush.msra.mxu0 %v4004
    %v4006 = vand.u32 %v2908, 4294901760
    %4007 = vmatpush.msra.mxu0 %v4006
    %v4008 = vand.u32 %v2907, 4294901760
    %4009 = vmatpush.msra.mxu0 %v4008
    %v4010 = vand.u32 %v2906, 4294901760
    %4011 = vmatpush.msra.mxu0 %v4010
    %v4012 = vand.u32 %v2905, 4294901760
    %4013 = vmatpush.msra.mxu0 %v4012
    %v4014 = vand.u32 %v2904, 4294901760
    %4015 = vmatpush.msra.mxu0 %v4014
    %v4016 = vand.u32 %v2903, 4294901760
    %4017 = vmatpush.msra.mxu0 %v4016
    %v4018 = vand.u32 %v2902, 4294901760
    %4019 = vmatpush.msra.mxu0 %v4018
    %v4020 = vand.u32 %v2890, 4294901760
    %v4021 = vsub.f32 %v2890, %v4020
    %v4022 = vand.u32 %v4021, 4294901760
    %4023 = vmatmul.f32.gmra.mxu0 %v4022
    %v4024 = vpop.f32.mrf.mxu0
    %v4025 = vadd.f32 %v3976, %v4024
    %v4026 = vand.u32 %v2885, 4294901760
    %v4027 = vsub.f32 %v2885, %v4026
    %v4028 = vand.u32 %v4027, 4294901760
    %4029 = vmatmul.f32.gmra.mxu0 %v4028
    %v4030 = vpop.f32.mrf.mxu0
    %v4031 = vadd.f32 %v3981, %v4030
    %v4032 = vand.u32 %v2886, 4294901760
    %v4033 = vsub.f32 %v2886, %v4032
    %v4034 = vand.u32 %v4033, 4294901760
    %4035 = vmatmul.f32.gmra.mxu0 %v4034
    %v4036 = vpop.f32.mrf.mxu0
    %v4037 = vadd.f32 %v3986, %v4036
    %4038 = vdwg.mxu0
    %v4039 = vand.u32 %v2917, 4294901760
    %v4040 = vsub.f32 %v2917, %v4039
    %v4041 = vand.u32 %v4040, 4294901760
    %4042 = vmatpush.msra.mxu0 %v4041
    %v4043 = vand.u32 %v2916, 4294901760
    %v4044 = vsub.f32 %v2916, %v4043
    %v4045 = vand.u32 %v4044, 4294901760
    %4046 = vmatpush.msra.mxu0 %v4045
    %v4047 = vand.u32 %v2915, 4294901760
    %v4048 = vsub.f32 %v2915, %v4047
    %v4049 = vand.u32 %v4048, 4294901760
    %4050 = vmatpush.msra.mxu0 %v4049
    %v4051 = vand.u32 %v2914, 4294901760
    %v4052 = vsub.f32 %v2914, %v4051
    %v4053 = vand.u32 %v4052, 4294901760
    %4054 = vmatpush.msra.mxu0 %v4053
    %v4055 = vand.u32 %v2913, 4294901760
    %v4056 = vsub.f32 %v2913, %v4055
    %v4057 = vand.u32 %v4056, 4294901760
    %4058 = vmatpush.msra.mxu0 %v4057
    %v4059 = vand.u32 %v2912, 4294901760
    %v4060 = vsub.f32 %v2912, %v4059
    %v4061 = vand.u32 %v4060, 4294901760
    %4062 = vmatpush.msra.mxu0 %v4061
    %v4063 = vand.u32 %v2911, 4294901760
    %v4064 = vsub.f32 %v2911, %v4063
    %v4065 = vand.u32 %v4064, 4294901760
    %4066 = vmatpush.msra.mxu0 %v4065
    %v4067 = vand.u32 %v2910, 4294901760
    %v4068 = vsub.f32 %v2910, %v4067
    %v4069 = vand.u32 %v4068, 4294901760
    %4070 = vmatpush.msra.mxu0 %v4069
    %v4071 = vand.u32 %v2909, 4294901760
    %v4072 = vsub.f32 %v2909, %v4071
    %v4073 = vand.u32 %v4072, 4294901760
    %4074 = vmatpush.msra.mxu0 %v4073
    %v4075 = vand.u32 %v2908, 4294901760
    %v4076 = vsub.f32 %v2908, %v4075
    %v4077 = vand.u32 %v4076, 4294901760
    %4078 = vmatpush.msra.mxu0 %v4077
    %v4079 = vand.u32 %v2907, 4294901760
    %v4080 = vsub.f32 %v2907, %v4079
    %v4081 = vand.u32 %v4080, 4294901760
    %4082 = vmatpush.msra.mxu0 %v4081
    %v4083 = vand.u32 %v2906, 4294901760
    %v4084 = vsub.f32 %v2906, %v4083
    %v4085 = vand.u32 %v4084, 4294901760
    %4086 = vmatpush.msra.mxu0 %v4085
    %v4087 = vand.u32 %v2905, 4294901760
    %v4088 = vsub.f32 %v2905, %v4087
    %v4089 = vand.u32 %v4088, 4294901760
    %4090 = vmatpush.msra.mxu0 %v4089
    %v4091 = vand.u32 %v2904, 4294901760
    %v4092 = vsub.f32 %v2904, %v4091
    %v4093 = vand.u32 %v4092, 4294901760
    %4094 = vmatpush.msra.mxu0 %v4093
    %v4095 = vand.u32 %v2903, 4294901760
    %v4096 = vsub.f32 %v2903, %v4095
    %v4097 = vand.u32 %v4096, 4294901760
    %4098 = vmatpush.msra.mxu0 %v4097
    %v4099 = vand.u32 %v2902, 4294901760
    %v4100 = vsub.f32 %v2902, %v4099
    %v4101 = vand.u32 %v4100, 4294901760
    %4102 = vmatpush.msra.mxu0 %v4101
    %v4103 = vand.u32 %v2890, 4294901760
    %4104 = vmatmul.f32.gmra.mxu0 %v4103
    %v4105 = vpop.f32.mrf.mxu0
    %v4106 = vadd.f32 %v4025, %v4105
    %v4107 = vand.u32 %v2885, 4294901760
    %4108 = vmatmul.f32.gmra.mxu0 %v4107
    %v4109 = vpop.f32.mrf.mxu0
    %v4110 = vadd.f32 %v4031, %v4109
    %v4111 = vand.u32 %v2886, 4294901760
    %4112 = vmatmul.f32.gmra.mxu0 %v4111
    %v4113 = vpop.f32.mrf.mxu0
    %v4114 = vadd.f32 %v4037, %v4113
    %4115 = vdwg.mxu0
    %v4116 = vand.u32 %v2917, 4294901760
    %4117 = vmatpush.msra.mxu0 %v4116
    %v4118 = vand.u32 %v2916, 4294901760
    %4119 = vmatpush.msra.mxu0 %v4118
    %v4120 = vand.u32 %v2915, 4294901760
    %4121 = vmatpush.msra.mxu0 %v4120
    %v4122 = vand.u32 %v2914, 4294901760
    %4123 = vmatpush.msra.mxu0 %v4122
    %v4124 = vand.u32 %v2913, 4294901760
    %4125 = vmatpush.msra.mxu0 %v4124
    %v4126 = vand.u32 %v2912, 4294901760
    %4127 = vmatpush.msra.mxu0 %v4126
    %v4128 = vand.u32 %v2911, 4294901760
    %4129 = vmatpush.msra.mxu0 %v4128
    %v4130 = vand.u32 %v2910, 4294901760
    %4131 = vmatpush.msra.mxu0 %v4130
    %v4132 = vand.u32 %v2909, 4294901760
    %4133 = vmatpush.msra.mxu0 %v4132
    %v4134 = vand.u32 %v2908, 4294901760
    %4135 = vmatpush.msra.mxu0 %v4134
    %v4136 = vand.u32 %v2907, 4294901760
    %4137 = vmatpush.msra.mxu0 %v4136
    %v4138 = vand.u32 %v2906, 4294901760
    %4139 = vmatpush.msra.mxu0 %v4138
    %v4140 = vand.u32 %v2905, 4294901760
    %4141 = vmatpush.msra.mxu0 %v4140
    %v4142 = vand.u32 %v2904, 4294901760
    %4143 = vmatpush.msra.mxu0 %v4142
    %v4144 = vand.u32 %v2903, 4294901760
    %4145 = vmatpush.msra.mxu0 %v4144
    %v4146 = vand.u32 %v2902, 4294901760
    %4147 = vmatpush.msra.mxu0 %v4146
    %v4148 = vand.u32 %v2890, 4294901760
    %4149 = vmatmul.f32.gmra.mxu0 %v4148
    %v4150 = vpop.f32.mrf.mxu0
    %v4151 = vadd.f32 %v4106, %v4150
    %v4152 = vand.u32 %v2885, 4294901760
    %4153 = vmatmul.f32.gmra.mxu0 %v4152
    %v4154 = vpop.f32.mrf.mxu0
    %v4155 = vadd.f32 %v4110, %v4154
    %v4156 = vand.u32 %v2886, 4294901760
    %4157 = vmatmul.f32.gmra.mxu0 %v4156
    %v4158 = vpop.f32.mrf.mxu0
    %v4159 = vadd.f32 %v4114, %v4158
    %4160 = vdwg.mxu0
    %v4161 = vadd.f32 %v4151, %v3748
    %v4162 = vadd.f32 %v4155, %v3752
    %v4163 = vadd.f32 %v4159, %v3756
    %v4164 = vmul.f32 %v4161, %v127
    %v4165 = vmul.f32 %v4162, %v128
    %v4166 = vmul.f32 %v4163, %v129
    %v4167 = vadd.f32 %v4164, %v4165
    %v4168 = vadd.f32 %v4167, %v4166
    %4169 = vadd.xlane.f32.xlu0 %v4168
    %v4170 = vpop.xlane.xlu0 %4169
    %v4171 = vrot.slane %v4170, 4
    %v4172 = vadd.f32 %v4170, %v4171
    %v4173 = vrot.slane %v4172, 2
    %v4174 = vadd.f32 %v4172, %v4173
    %v4175 = vrot.slane %v4174, 1
    %v4176 = vadd.f32 %v4174, %v4175
    %s4177 = vtos %v4176
    %v4178 = vmul.f32 %v4164, %v4161
    %v4179 = vmul.f32 %v4165, %v4162
    %v4180 = vmul.f32 %v4166, %v4163
    %v4181 = vadd.f32 %v4178, %v4179
    %v4182 = vadd.f32 %v4181, %v4180
    %4183 = vadd.xlane.f32.xlu0 %v4182
    %v4184 = vpop.xlane.xlu0 %4183
    %v4185 = vrot.slane %v4184, 4
    %v4186 = vadd.f32 %v4184, %v4185
    %v4187 = vrot.slane %v4186, 2
    %v4188 = vadd.f32 %v4186, %v4187
    %v4189 = vrot.slane %v4188, 1
    %v4190 = vadd.f32 %v4188, %v4189
    %s4191 = vtos %v4190
    %s4192 = smul.f32 %s4177, 0.0025
    %s4193 = smul.f32 %s4191, 0.0025
    %s4194 = smul.f32 %s4192, %s4192
    %s4195 = ssub.f32 %s4193, %s4194
    %s4196 = smax.f32 %s4195, 0.0
    %s4197 = sadd.f32 %s4196, 1e-05
    %v4198 = vstv %s4197
    %v4199 = vrsqrt.pop %v4198
    %v4200 = vmul.f32 %v4199, %v4198
    %v4201 = vmul.f32 %v4200, %v4199
    %v4202 = vmul.f32 0.5, %v4201
    %v4203 = vsub.f32 1.5, %v4202
    %v4204 = vmul.f32 %v4199, %v4203
    %vm4205 = vweird.f32 %v4198
    %vm4206 = vweird.f32 %v4199
    %vm4207 = vmor %vm4205, %vm4206
    %v4208 = vsel %vm4207, %v4199, %v4204
    %s4209 = vtos %v4208
    %s4210 = smul.f32 %s113, %s4209
    %s4211 = smul.f32 %s4192, %s4210
    %s4212 = ssub.f32 %s116, %s4211
    %v4213 = vstv %s4210
    %v4214 = vmul.f32 %v4161, %v4213
    %v4215 = vmul.f32 %v4162, %v4213
    %v4216 = vmul.f32 %v4163, %v4213
    %v4217 = vstv %s4212
    %v4218 = vadd.f32 %v4214, %v4217
    %v4219 = vadd.f32 %v4215, %v4217
    %v4220 = vadd.f32 %v4216, %v4217
    %v4221 = vmax.f32 %v4218, 0.0
    %v4222 = vmax.f32 %v4219, 0.0
    %v4223 = vmax.f32 %v4220, 0.0
    %v4224 = vmul.f32 %v4221, %v127
    %v4225 = vmul.f32 %v4222, %v128
    %v4226 = vmul.f32 %v4223, %v129
    %4227 = vst [vmem:[%s6] sm:$0xff] %v4224
    %4228 = vst [vmem:[%s6 + $0x8] sm:$0xff] %v4225
    %4229 = vst [vmem:[%s6 + $0x10] sm:$0xff] %v4226
    // Predicated region
    $region50: #{decoder_forward.1} parent=1 // pred_check
      _
    $region51: #{decoder_forward.1} parent=1 // pred_check_branch
      %4231 = sbr.rel (0) target = $region53
    $region52: #{decoder_forward.1} parent=1 // pred_region
      _
    $region53: #{decoder_forward.1} parent=1 // pred_fallthru
      _
    // Predicated region
    $region54: #{decoder_forward.1} parent=1 // pred_check
      _
    $region55: #{decoder_forward.1} parent=1 // pred_check_branch
      %4233 = sbr.rel (0) target = $region57
    $region56: #{decoder_forward.1} parent=1 // pred_region
      _
    $region57: #{decoder_forward.1} parent=1 // pred_fallthru
      _
    %4234 = vsyncpa [#allocation3], 1
    %4235 = vsyncpa [#allocation8], 1
    %4236 = vsyncpa [#allocation4], 1
    %4237 = vsyncpa [#allocation5], 1
    %4238 = vsyncpa [#allocation12], 1

</llo_original>
